<compile_context>
chip_gen: v7x
topology: tpu7x:2x2x1
jax: 0.10.0
libtpu: 0.0.40
codegen_flags: <defaults>
</compile_context>

<pallas_src>
import functools

import numpy as np
import jax
import jax.numpy as jnp
from jax import lax
from jax.experimental import pallas as pl
from jax.experimental.pallas import tpu as pltpu


def _round_up(n, m):
    return ((n + m - 1) // m) * m


# -----------------------------------------------------------------------------
# Pallas kernel: fused bidirectional single-layer LSTM + FC head.
# -----------------------------------------------------------------------------
def _recon_kernel(xseq_ref,       # (W*B, D)      time-major flattened input
                  wih_all_ref,    # (D, 8*HP)     [fwd i|f|g|o | bwd i|f|g|o]
                  b_all_ref,      # (1, 8*HP)     combined b_ih + b_hh (both dirs)
                  whh_f_ref,      # (HP, 4*HP)    fwd W_hh^T (gate-padded)
                  whh_b_ref,      # (HP, 4*HP)    bwd W_hh^T (gate-padded)
                  wfc_f_ref,      # (HP, OUTP)    fc weight^T, fwd half (padded)
                  wfc_b_ref,      # (HP, OUTP)    fc weight^T, bwd half (padded)
                  bfc_ref,        # (1, OUTP)     fc bias (padded)
                  out_ref,        # (W*B, OUTP)   time-major output slab
                  *, W, B, HP):
    G = 4 * HP

    # (1) Hoisted input projection for BOTH directions: one batched GEMM,
    #     completely independent of the recurrent state (off the serial chain).
    xg = (jnp.dot(xseq_ref[...], wih_all_ref[...],
                  preferred_element_type=jnp.float32) + b_all_ref[...])

    # (2) Recurrent weights loaded once, outside the loop.
    whh_f = whh_f_ref[...]
    whh_b = whh_b_ref[...]

    def lstm_step(xg_t, h, c, whh):
        # Gates laid out [i | f | g | o], each padded to HP (>=128) lanes so
        # every slice is lane-tile aligned. Padded lanes stay exactly zero
        # (zero weights/bias -> c_pad = 0.5*0 + 0.5*0 = 0, h_pad = 0.5*tanh(0)=0).
        gates = xg_t + jnp.dot(h, whh, preferred_element_type=jnp.float32)
        i = jax.nn.sigmoid(gates[:, 0 * HP:1 * HP])
        f = jax.nn.sigmoid(gates[:, 1 * HP:2 * HP])
        g = jnp.tanh(gates[:, 2 * HP:3 * HP])
        o = jax.nn.sigmoid(gates[:, 3 * HP:4 * HP])
        c_new = f * c + i * g
        h_new = o * jnp.tanh(c_new)
        return h_new, c_new

    zeros = jnp.zeros((B, HP), jnp.float32)
    h_f, c_f, h_b, c_b = zeros, zeros, zeros, zeros
    hs_f = [None] * W
    hs_b = [None] * W

    # (3) Fused fwd + bwd recurrence, fully unrolled (W is static and small).
    for t in range(W):
        s = W - 1 - t
        xg_f = xg[t * B:(t + 1) * B, 0:G]          # fwd gates pre-activation @ t
        xg_b = xg[s * B:(s + 1) * B, G:2 * G]      # bwd gates pre-activation @ s
        h_f, c_f = lstm_step(xg_f, h_f, c_f, whh_f)
        h_b, c_b = lstm_step(xg_b, h_b, c_b, whh_b)
        hs_f[t] = h_f
        hs_b[s] = h_b                              # bwd outputs in forward-time order

    # (4) FC head: two lane-dense GEMMs on the stacked hidden states and one
    #     unmasked (W*B, OUTP) store (OUTP is a multiple of 128).
    dec_f = jnp.concatenate(hs_f, axis=0)          # (W*B, HP)
    dec_b = jnp.concatenate(hs_b, axis=0)          # (W*B, HP)
    y = (jnp.dot(dec_f, wfc_f_ref[...], preferred_element_type=jnp.float32)
         + jnp.dot(dec_b, wfc_b_ref[...], preferred_element_type=jnp.float32)
         + bfc_ref[...])
    out_ref[...] = y


# -----------------------------------------------------------------------------
# Parameter re-layout for the kernel: gate padding to 128 lanes + dir fusion.
# -----------------------------------------------------------------------------
def _prepare_kernel_params(params):
    H = params["hid_dim"]
    OUT = params["out_dim"]
    HP = _round_up(H, 128)           # padded per-gate lane width
    OUTP = _round_up(OUT, 128)       # padded output lane width

    def pad_gate_cols(wT):           # (rows, 4H) -> (rows, 4*HP), per-gate pad
        parts = [wT[:, g * H:(g + 1) * H] for g in range(4)]
        return jnp.concatenate(
            [jnp.pad(p, ((0, 0), (0, HP - H))) for p in parts], axis=1)

    wih_all = jnp.concatenate(
        [pad_gate_cols(params["wih_f_T"]), pad_gate_cols(params["wih_b_T"])],
        axis=1)                                                  # (D, 8*HP)

    def pad_whh(whhT):               # (H, 4H) -> (HP, 4*HP); zero rows beyond H
        return jnp.pad(pad_gate_cols(whhT), ((0, HP - H), (0, 0)))

    whh_f = pad_whh(params["whh_f_T"])
    whh_b = pad_whh(params["whh_b_T"])

    b_all = jnp.concatenate(
        [pad_gate_cols(params["b_f"]), pad_gate_cols(params["b_b"])],
        axis=1)                                                  # (1, 8*HP)

    wfc_T = params["wfc_T"]          # (2H, OUT)
    wfc_f = jnp.pad(wfc_T[:H], ((0, HP - H), (0, OUTP - OUT)))   # (HP, OUTP)
    wfc_b = jnp.pad(wfc_T[H:], ((0, HP - H), (0, OUTP - OUT)))
    bfc = jnp.pad(params["bfc"], ((0, 0), (0, OUTP - OUT)))      # (1, OUTP)

    return dict(HP=HP, OUTP=OUTP, wih_all=wih_all, b_all=b_all,
                whh_f=whh_f, whh_b=whh_b, wfc_f=wfc_f, wfc_b=wfc_b, bfc=bfc)


# -----------------------------------------------------------------------------
# Wrapper (repeat_interleave/view glue, pallas_call plumbing, un-padding).
# -----------------------------------------------------------------------------
def reconstruction_forward(x, params, window_size):
    B, D = x.shape
    OUT = params["out_dim"]
    W = window_size
    kp = _prepare_kernel_params(params)
    HP, OUTP = kp["HP"], kp["OUTP"]

    # Exact PyTorch semantics: x.repeat_interleave(W, dim=1).view(B, W, -1);
    # then time-major flatten (W*B, D) for the kernel.
    h_end_rep = jnp.repeat(x, W, axis=1).reshape(B, W, D)
    xseq = jnp.transpose(h_end_rep, (1, 0, 2)).reshape(W * B, D)

    kernel = functools.partial(_recon_kernel, W=W, B=B, HP=HP)
    out_flat = pl.pallas_call(
        kernel,
        out_shape=jax.ShapeDtypeStruct((W * B, OUTP), jnp.float32),
        in_specs=[pl.BlockSpec(memory_space=pltpu.MemorySpace.VMEM)] * 8,
        out_specs=pl.BlockSpec(memory_space=pltpu.MemorySpace.VMEM),
    )(xseq, kp["wih_all"], kp["b_all"], kp["whh_f"], kp["whh_b"],
      kp["wfc_f"], kp["wfc_b"], kp["bfc"])

    out = out_flat[:, :OUT].reshape(W, B, OUT)
    return jnp.transpose(out, (1, 0, 2))                         # (B, W, OUT)


# -----------------------------------------------------------------------------
# Deterministic parameter init (PyTorch-style uniform ranges).
# -----------------------------------------------------------------------------
def init_params(key, in_dim, hid_dim, out_dim):
    k = 1.0 / np.sqrt(hid_dim)
    keys = jax.random.split(key, 10)

    def u(kk, shape, bound):
        return jax.random.uniform(kk, shape, jnp.float32, -bound, bound)

    wih_f = u(keys[0], (4 * hid_dim, in_dim), k)
    whh_f = u(keys[1], (4 * hid_dim, hid_dim), k)
    bih_f = u(keys[2], (4 * hid_dim,), k)
    bhh_f = u(keys[3], (4 * hid_dim,), k)
    wih_b = u(keys[4], (4 * hid_dim, in_dim), k)
    whh_b = u(keys[5], (4 * hid_dim, hid_dim), k)
    bih_b = u(keys[6], (4 * hid_dim,), k)
    bhh_b = u(keys[7], (4 * hid_dim,), k)
    kfc = 1.0 / np.sqrt(2 * hid_dim)
    wfc = u(keys[8], (out_dim, 2 * hid_dim), kfc)
    bfc = u(keys[9], (out_dim,), kfc)

    return dict(
        hid_dim=hid_dim, out_dim=out_dim,
        wih_f_T=wih_f.T, whh_f_T=whh_f.T, b_f=(bih_f + bhh_f).reshape(1, -1),
        wih_b_T=wih_b.T, whh_b_T=whh_b.T, b_b=(bih_b + bhh_b).reshape(1, -1),
        wfc_T=wfc.T, bfc=bfc.reshape(1, -1),
    )


# -----------------------------------------------------------------------------
# Pure-JAX reference (mirrors PyTorch nn.LSTM bidirectional + nn.Linear).
# -----------------------------------------------------------------------------
def reference_forward(x, params, window_size):
    B, D = x.shape
    H = params["hid_dim"]
    W = window_size
    h_rep = jnp.repeat(x, W, axis=1).reshape(B, W, D)

    def run_dir(seq, wihT, whhT, b):
        def scan_fn(carry, x_t):
            h, c = carry
            gates = x_t @ wihT + h @ whhT + b[0]
            i, f, g, o = jnp.split(gates, 4, axis=-1)
            i, f, o = jax.nn.sigmoid(i), jax.nn.sigmoid(f), jax.nn.sigmoid(o)
            g = jnp.tanh(g)
            c = f * c + i * g
            h = o * jnp.tanh(c)
            return (h, c), h

        init = (jnp.zeros((B, H), jnp.float32), jnp.zeros((B, H), jnp.float32))
        _, hs = lax.scan(scan_fn, init, jnp.transpose(seq, (1, 0, 2)))
        return jnp.transpose(hs, (1, 0, 2))

    fwd = run_dir(h_rep, params["wih_f_T"], params["whh_f_T"], params["b_f"])
    bwd = run_dir(h_rep[:, ::-1], params["wih_b_T"], params["whh_b_T"],
                  params["b_b"])[:, ::-1]
    dec = jnp.concatenate([fwd, bwd], axis=-1)
    return dec @ params["wfc_T"] + params["bfc"][0]


if __name__ == "__main__":
    # Small shapes consistent with the module's forward:
    #   x: (batch, in_dim) -> output: (batch, window_size, out_dim)
    window_size, in_dim, hid_dim, out_dim = 8, 16, 32, 16
    batch = 2

    key = jax.random.PRNGKey(0)
    kx, kp = jax.random.split(key)
    x = jax.random.normal(kx, (batch, in_dim), jnp.float32)
    params = init_params(kp, in_dim, hid_dim, out_dim)

    out = reconstruction_forward(x, params, window_size)
    out = jax.block_until_ready(out)

    ref = reference_forward(x, params, window_size)
    assert out.shape == (batch, window_size, out_dim)
    np.testing.assert_allclose(np.asarray(out), np.asarray(ref),
                               atol=1e-4, rtol=1e-4)
    print("KERNEL_OK")
</pallas_src>

<mosaic_0001>
module attributes {stable_mosaic.version = 11 : i64} {
  func.func @_recon_kernel(%arg0: memref<16x16xf32, #tpu.memory_space<vmem>>, %arg1: memref<16x1024xf32, #tpu.memory_space<vmem>>, %arg2: memref<1x1024xf32, #tpu.memory_space<vmem>>, %arg3: memref<128x512xf32, #tpu.memory_space<vmem>>, %arg4: memref<128x512xf32, #tpu.memory_space<vmem>>, %arg5: memref<128x128xf32, #tpu.memory_space<vmem>>, %arg6: memref<128x128xf32, #tpu.memory_space<vmem>>, %arg7: memref<1x128xf32, #tpu.memory_space<vmem>>, %arg8: memref<16x128xf32, #tpu.memory_space<vmem>>) attributes {dimension_semantics = [], scalar_prefetch = 0 : i64, scratch_operands = 0 : i64, tpu.core_type = #tpu.core_type<tc>} {
    %c0 = arith.constant 0 : index
    %c0_0 = arith.constant 0 : index
    %0 = vector.load %arg0[%c0, %c0_0] : memref<16x16xf32, #tpu.memory_space<vmem>>, vector<16x16xf32>
    %c0_1 = arith.constant 0 : index
    %c0_2 = arith.constant 0 : index
    %1 = vector.load %arg1[%c0_1, %c0_2] : memref<16x1024xf32, #tpu.memory_space<vmem>>, vector<16x1024xf32>
    %cst = arith.constant dense<0.000000e+00> : vector<16x1024xf32>
    %2 = tpu.matmul %0, %1, %cst {dimension_numbers = #tpu.dot_dimension_numbers<[1], [0], [0], [1], [0, 0, 1, 1], [], []>} : vector<16x16xf32>, vector<16x1024xf32>, vector<16x1024xf32> -> vector<16x1024xf32>
    %c0_3 = arith.constant 0 : index
    %c0_4 = arith.constant 0 : index
    %3 = vector.load %arg2[%c0_3, %c0_4] : memref<1x1024xf32, #tpu.memory_space<vmem>>, vector<1x1024xf32>
    %4 = vector.broadcast %3 : vector<1x1024xf32> to vector<16x1024xf32>
    %5 = arith.addf %2, %4 : vector<16x1024xf32>
    %c0_5 = arith.constant 0 : index
    %c0_6 = arith.constant 0 : index
    %6 = vector.load %arg3[%c0_5, %c0_6] : memref<128x512xf32, #tpu.memory_space<vmem>>, vector<128x512xf32>
    %c0_7 = arith.constant 0 : index
    %c0_8 = arith.constant 0 : index
    %7 = vector.load %arg4[%c0_7, %c0_8] : memref<128x512xf32, #tpu.memory_space<vmem>>, vector<128x512xf32>
    %cst_9 = arith.constant 0.000000e+00 : f32
    %8 = vector.broadcast %cst_9 : f32 to vector<2x128xf32>
    %9 = vector.extract_strided_slice %5 {offsets = [0, 0], sizes = [2, 512], strides = [1, 1]} : vector<16x1024xf32> to vector<2x512xf32>
    %10 = vector.extract_strided_slice %5 {offsets = [14, 512], sizes = [2, 512], strides = [1, 1]} : vector<16x1024xf32> to vector<2x512xf32>
    %cst_10 = arith.constant dense<0.000000e+00> : vector<2x512xf32>
    %11 = tpu.matmul %8, %6, %cst_10 {dimension_numbers = #tpu.dot_dimension_numbers<[1], [0], [0], [1], [0, 0, 1, 1], [], []>} : vector<2x128xf32>, vector<128x512xf32>, vector<2x512xf32> -> vector<2x512xf32>
    %12 = arith.addf %9, %11 : vector<2x512xf32>
    %13 = vector.extract_strided_slice %12 {offsets = [0, 0], sizes = [2, 128], strides = [1, 1]} : vector<2x512xf32> to vector<2x128xf32>
    %14 = arith.negf %13 : vector<2x128xf32>
    %15 = math.exp %14 : vector<2x128xf32>
    %cst_11 = arith.constant 1.000000e+00 : f32
    %16 = vector.broadcast %cst_11 : f32 to vector<2x128xf32>
    %17 = arith.addf %16, %15 : vector<2x128xf32>
    %18 = arith.divf %16, %17 : vector<2x128xf32>
    %19 = vector.extract_strided_slice %12 {offsets = [0, 128], sizes = [2, 128], strides = [1, 1]} : vector<2x512xf32> to vector<2x128xf32>
    %20 = arith.negf %19 : vector<2x128xf32>
    %21 = math.exp %20 : vector<2x128xf32>
    %cst_12 = arith.constant 1.000000e+00 : f32
    %22 = vector.broadcast %cst_12 : f32 to vector<2x128xf32>
    %23 = arith.addf %22, %21 : vector<2x128xf32>
    %24 = arith.divf %22, %23 : vector<2x128xf32>
    %25 = vector.extract_strided_slice %12 {offsets = [0, 256], sizes = [2, 128], strides = [1, 1]} : vector<2x512xf32> to vector<2x128xf32>
    %26 = math.tanh %25 : vector<2x128xf32>
    %27 = vector.extract_strided_slice %12 {offsets = [0, 384], sizes = [2, 128], strides = [1, 1]} : vector<2x512xf32> to vector<2x128xf32>
    %28 = arith.negf %27 : vector<2x128xf32>
    %29 = math.exp %28 : vector<2x128xf32>
    %cst_13 = arith.constant 1.000000e+00 : f32
    %30 = vector.broadcast %cst_13 : f32 to vector<2x128xf32>
    %31 = arith.addf %30, %29 : vector<2x128xf32>
    %32 = arith.divf %30, %31 : vector<2x128xf32>
    %33 = arith.mulf %24, %8 : vector<2x128xf32>
    %34 = arith.mulf %18, %26 : vector<2x128xf32>
    %35 = arith.addf %33, %34 : vector<2x128xf32>
    %36 = math.tanh %35 : vector<2x128xf32>
    %37 = arith.mulf %32, %36 : vector<2x128xf32>
    %cst_14 = arith.constant dense<0.000000e+00> : vector<2x512xf32>
    %38 = tpu.matmul %8, %7, %cst_14 {dimension_numbers = #tpu.dot_dimension_numbers<[1], [0], [0], [1], [0, 0, 1, 1], [], []>} : vector<2x128xf32>, vector<128x512xf32>, vector<2x512xf32> -> vector<2x512xf32>
    %39 = arith.addf %10, %38 : vector<2x512xf32>
    %40 = vector.extract_strided_slice %39 {offsets = [0, 0], sizes = [2, 128], strides = [1, 1]} : vector<2x512xf32> to vector<2x128xf32>
    %41 = arith.negf %40 : vector<2x128xf32>
    %42 = math.exp %41 : vector<2x128xf32>
    %cst_15 = arith.constant 1.000000e+00 : f32
    %43 = vector.broadcast %cst_15 : f32 to vector<2x128xf32>
    %44 = arith.addf %43, %42 : vector<2x128xf32>
    %45 = arith.divf %43, %44 : vector<2x128xf32>
    %46 = vector.extract_strided_slice %39 {offsets = [0, 128], sizes = [2, 128], strides = [1, 1]} : vector<2x512xf32> to vector<2x128xf32>
    %47 = arith.negf %46 : vector<2x128xf32>
    %48 = math.exp %47 : vector<2x128xf32>
    %cst_16 = arith.constant 1.000000e+00 : f32
    %49 = vector.broadcast %cst_16 : f32 to vector<2x128xf32>
    %50 = arith.addf %49, %48 : vector<2x128xf32>
    %51 = arith.divf %49, %50 : vector<2x128xf32>
    %52 = vector.extract_strided_slice %39 {offsets = [0, 256], sizes = [2, 128], strides = [1, 1]} : vector<2x512xf32> to vector<2x128xf32>
    %53 = math.tanh %52 : vector<2x128xf32>
    %54 = vector.extract_strided_slice %39 {offsets = [0, 384], sizes = [2, 128], strides = [1, 1]} : vector<2x512xf32> to vector<2x128xf32>
    %55 = arith.negf %54 : vector<2x128xf32>
    %56 = math.exp %55 : vector<2x128xf32>
    %cst_17 = arith.constant 1.000000e+00 : f32
    %57 = vector.broadcast %cst_17 : f32 to vector<2x128xf32>
    %58 = arith.addf %57, %56 : vector<2x128xf32>
    %59 = arith.divf %57, %58 : vector<2x128xf32>
    %60 = arith.mulf %51, %8 : vector<2x128xf32>
    %61 = arith.mulf %45, %53 : vector<2x128xf32>
    %62 = arith.addf %60, %61 : vector<2x128xf32>
    %63 = math.tanh %62 : vector<2x128xf32>
    %64 = arith.mulf %59, %63 : vector<2x128xf32>
    %65 = vector.extract_strided_slice %5 {offsets = [2, 0], sizes = [2, 512], strides = [1, 1]} : vector<16x1024xf32> to vector<2x512xf32>
    %66 = vector.extract_strided_slice %5 {offsets = [12, 512], sizes = [2, 512], strides = [1, 1]} : vector<16x1024xf32> to vector<2x512xf32>
    %cst_18 = arith.constant dense<0.000000e+00> : vector<2x512xf32>
    %67 = tpu.matmul %37, %6, %cst_18 {dimension_numbers = #tpu.dot_dimension_numbers<[1], [0], [0], [1], [0, 0, 1, 1], [], []>} : vector<2x128xf32>, vector<128x512xf32>, vector<2x512xf32> -> vector<2x512xf32>
    %68 = arith.addf %65, %67 : vector<2x512xf32>
    %69 = vector.extract_strided_slice %68 {offsets = [0, 0], sizes = [2, 128], strides = [1, 1]} : vector<2x512xf32> to vector<2x128xf32>
    %70 = arith.negf %69 : vector<2x128xf32>
    %71 = math.exp %70 : vector<2x128xf32>
    %cst_19 = arith.constant 1.000000e+00 : f32
    %72 = vector.broadcast %cst_19 : f32 to vector<2x128xf32>
    %73 = arith.addf %72, %71 : vector<2x128xf32>
    %74 = arith.divf %72, %73 : vector<2x128xf32>
    %75 = vector.extract_strided_slice %68 {offsets = [0, 128], sizes = [2, 128], strides = [1, 1]} : vector<2x512xf32> to vector<2x128xf32>
    %76 = arith.negf %75 : vector<2x128xf32>
    %77 = math.exp %76 : vector<2x128xf32>
    %cst_20 = arith.constant 1.000000e+00 : f32
    %78 = vector.broadcast %cst_20 : f32 to vector<2x128xf32>
    %79 = arith.addf %78, %77 : vector<2x128xf32>
    %80 = arith.divf %78, %79 : vector<2x128xf32>
    %81 = vector.extract_strided_slice %68 {offsets = [0, 256], sizes = [2, 128], strides = [1, 1]} : vector<2x512xf32> to vector<2x128xf32>
    %82 = math.tanh %81 : vector<2x128xf32>
    %83 = vector.extract_strided_slice %68 {offsets = [0, 384], sizes = [2, 128], strides = [1, 1]} : vector<2x512xf32> to vector<2x128xf32>
    %84 = arith.negf %83 : vector<2x128xf32>
    %85 = math.exp %84 : vector<2x128xf32>
    %cst_21 = arith.constant 1.000000e+00 : f32
    %86 = vector.broadcast %cst_21 : f32 to vector<2x128xf32>
    %87 = arith.addf %86, %85 : vector<2x128xf32>
    %88 = arith.divf %86, %87 : vector<2x128xf32>
    %89 = arith.mulf %80, %35 : vector<2x128xf32>
    %90 = arith.mulf %74, %82 : vector<2x128xf32>
    %91 = arith.addf %89, %90 : vector<2x128xf32>
    %92 = math.tanh %91 : vector<2x128xf32>
    %93 = arith.mulf %88, %92 : vector<2x128xf32>
    %cst_22 = arith.constant dense<0.000000e+00> : vector<2x512xf32>
    %94 = tpu.matmul %64, %7, %cst_22 {dimension_numbers = #tpu.dot_dimension_numbers<[1], [0], [0], [1], [0, 0, 1, 1], [], []>} : vector<2x128xf32>, vector<128x512xf32>, vector<2x512xf32> -> vector<2x512xf32>
    %95 = arith.addf %66, %94 : vector<2x512xf32>
    %96 = vector.extract_strided_slice %95 {offsets = [0, 0], sizes = [2, 128], strides = [1, 1]} : vector<2x512xf32> to vector<2x128xf32>
    %97 = arith.negf %96 : vector<2x128xf32>
    %98 = math.exp %97 : vector<2x128xf32>
    %cst_23 = arith.constant 1.000000e+00 : f32
    %99 = vector.broadcast %cst_23 : f32 to vector<2x128xf32>
    %100 = arith.addf %99, %98 : vector<2x128xf32>
    %101 = arith.divf %99, %100 : vector<2x128xf32>
    %102 = vector.extract_strided_slice %95 {offsets = [0, 128], sizes = [2, 128], strides = [1, 1]} : vector<2x512xf32> to vector<2x128xf32>
    %103 = arith.negf %102 : vector<2x128xf32>
    %104 = math.exp %103 : vector<2x128xf32>
    %cst_24 = arith.constant 1.000000e+00 : f32
    %105 = vector.broadcast %cst_24 : f32 to vector<2x128xf32>
    %106 = arith.addf %105, %104 : vector<2x128xf32>
    %107 = arith.divf %105, %106 : vector<2x128xf32>
    %108 = vector.extract_strided_slice %95 {offsets = [0, 256], sizes = [2, 128], strides = [1, 1]} : vector<2x512xf32> to vector<2x128xf32>
    %109 = math.tanh %108 : vector<2x128xf32>
    %110 = vector.extract_strided_slice %95 {offsets = [0, 384], sizes = [2, 128], strides = [1, 1]} : vector<2x512xf32> to vector<2x128xf32>
    %111 = arith.negf %110 : vector<2x128xf32>
    %112 = math.exp %111 : vector<2x128xf32>
    %cst_25 = arith.constant 1.000000e+00 : f32
    %113 = vector.broadcast %cst_25 : f32 to vector<2x128xf32>
    %114 = arith.addf %113, %112 : vector<2x128xf32>
    %115 = arith.divf %113, %114 : vector<2x128xf32>
    %116 = arith.mulf %107, %62 : vector<2x128xf32>
    %117 = arith.mulf %101, %109 : vector<2x128xf32>
    %118 = arith.addf %116, %117 : vector<2x128xf32>
    %119 = math.tanh %118 : vector<2x128xf32>
    %120 = arith.mulf %115, %119 : vector<2x128xf32>
    %121 = vector.extract_strided_slice %5 {offsets = [4, 0], sizes = [2, 512], strides = [1, 1]} : vector<16x1024xf32> to vector<2x512xf32>
    %122 = vector.extract_strided_slice %5 {offsets = [10, 512], sizes = [2, 512], strides = [1, 1]} : vector<16x1024xf32> to vector<2x512xf32>
    %cst_26 = arith.constant dense<0.000000e+00> : vector<2x512xf32>
    %123 = tpu.matmul %93, %6, %cst_26 {dimension_numbers = #tpu.dot_dimension_numbers<[1], [0], [0], [1], [0, 0, 1, 1], [], []>} : vector<2x128xf32>, vector<128x512xf32>, vector<2x512xf32> -> vector<2x512xf32>
    %124 = arith.addf %121, %123 : vector<2x512xf32>
    %125 = vector.extract_strided_slice %124 {offsets = [0, 0], sizes = [2, 128], strides = [1, 1]} : vector<2x512xf32> to vector<2x128xf32>
    %126 = arith.negf %125 : vector<2x128xf32>
    %127 = math.exp %126 : vector<2x128xf32>
    %cst_27 = arith.constant 1.000000e+00 : f32
    %128 = vector.broadcast %cst_27 : f32 to vector<2x128xf32>
    %129 = arith.addf %128, %127 : vector<2x128xf32>
    %130 = arith.divf %128, %129 : vector<2x128xf32>
    %131 = vector.extract_strided_slice %124 {offsets = [0, 128], sizes = [2, 128], strides = [1, 1]} : vector<2x512xf32> to vector<2x128xf32>
    %132 = arith.negf %131 : vector<2x128xf32>
    %133 = math.exp %132 : vector<2x128xf32>
    %cst_28 = arith.constant 1.000000e+00 : f32
    %134 = vector.broadcast %cst_28 : f32 to vector<2x128xf32>
    %135 = arith.addf %134, %133 : vector<2x128xf32>
    %136 = arith.divf %134, %135 : vector<2x128xf32>
    %137 = vector.extract_strided_slice %124 {offsets = [0, 256], sizes = [2, 128], strides = [1, 1]} : vector<2x512xf32> to vector<2x128xf32>
    %138 = math.tanh %137 : vector<2x128xf32>
    %139 = vector.extract_strided_slice %124 {offsets = [0, 384], sizes = [2, 128], strides = [1, 1]} : vector<2x512xf32> to vector<2x128xf32>
    %140 = arith.negf %139 : vector<2x128xf32>
    %141 = math.exp %140 : vector<2x128xf32>
    %cst_29 = arith.constant 1.000000e+00 : f32
    %142 = vector.broadcast %cst_29 : f32 to vector<2x128xf32>
    %143 = arith.addf %142, %141 : vector<2x128xf32>
    %144 = arith.divf %142, %143 : vector<2x128xf32>
    %145 = arith.mulf %136, %91 : vector<2x128xf32>
    %146 = arith.mulf %130, %138 : vector<2x128xf32>
    %147 = arith.addf %145, %146 : vector<2x128xf32>
    %148 = math.tanh %147 : vector<2x128xf32>
    %149 = arith.mulf %144, %148 : vector<2x128xf32>
    %cst_30 = arith.constant dense<0.000000e+00> : vector<2x512xf32>
    %150 = tpu.matmul %120, %7, %cst_30 {dimension_numbers = #tpu.dot_dimension_numbers<[1], [0], [0], [1], [0, 0, 1, 1], [], []>} : vector<2x128xf32>, vector<128x512xf32>, vector<2x512xf32> -> vector<2x512xf32>
    %151 = arith.addf %122, %150 : vector<2x512xf32>
    %152 = vector.extract_strided_slice %151 {offsets = [0, 0], sizes = [2, 128], strides = [1, 1]} : vector<2x512xf32> to vector<2x128xf32>
    %153 = arith.negf %152 : vector<2x128xf32>
    %154 = math.exp %153 : vector<2x128xf32>
    %cst_31 = arith.constant 1.000000e+00 : f32
    %155 = vector.broadcast %cst_31 : f32 to vector<2x128xf32>
    %156 = arith.addf %155, %154 : vector<2x128xf32>
    %157 = arith.divf %155, %156 : vector<2x128xf32>
    %158 = vector.extract_strided_slice %151 {offsets = [0, 128], sizes = [2, 128], strides = [1, 1]} : vector<2x512xf32> to vector<2x128xf32>
    %159 = arith.negf %158 : vector<2x128xf32>
    %160 = math.exp %159 : vector<2x128xf32>
    %cst_32 = arith.constant 1.000000e+00 : f32
    %161 = vector.broadcast %cst_32 : f32 to vector<2x128xf32>
    %162 = arith.addf %161, %160 : vector<2x128xf32>
    %163 = arith.divf %161, %162 : vector<2x128xf32>
    %164 = vector.extract_strided_slice %151 {offsets = [0, 256], sizes = [2, 128], strides = [1, 1]} : vector<2x512xf32> to vector<2x128xf32>
    %165 = math.tanh %164 : vector<2x128xf32>
    %166 = vector.extract_strided_slice %151 {offsets = [0, 384], sizes = [2, 128], strides = [1, 1]} : vector<2x512xf32> to vector<2x128xf32>
    %167 = arith.negf %166 : vector<2x128xf32>
    %168 = math.exp %167 : vector<2x128xf32>
    %cst_33 = arith.constant 1.000000e+00 : f32
    %169 = vector.broadcast %cst_33 : f32 to vector<2x128xf32>
    %170 = arith.addf %169, %168 : vector<2x128xf32>
    %171 = arith.divf %169, %170 : vector<2x128xf32>
    %172 = arith.mulf %163, %118 : vector<2x128xf32>
    %173 = arith.mulf %157, %165 : vector<2x128xf32>
    %174 = arith.addf %172, %173 : vector<2x128xf32>
    %175 = math.tanh %174 : vector<2x128xf32>
    %176 = arith.mulf %171, %175 : vector<2x128xf32>
    %177 = vector.extract_strided_slice %5 {offsets = [6, 0], sizes = [2, 512], strides = [1, 1]} : vector<16x1024xf32> to vector<2x512xf32>
    %178 = vector.extract_strided_slice %5 {offsets = [8, 512], sizes = [2, 512], strides = [1, 1]} : vector<16x1024xf32> to vector<2x512xf32>
    %cst_34 = arith.constant dense<0.000000e+00> : vector<2x512xf32>
    %179 = tpu.matmul %149, %6, %cst_34 {dimension_numbers = #tpu.dot_dimension_numbers<[1], [0], [0], [1], [0, 0, 1, 1], [], []>} : vector<2x128xf32>, vector<128x512xf32>, vector<2x512xf32> -> vector<2x512xf32>
    %180 = arith.addf %177, %179 : vector<2x512xf32>
    %181 = vector.extract_strided_slice %180 {offsets = [0, 0], sizes = [2, 128], strides = [1, 1]} : vector<2x512xf32> to vector<2x128xf32>
    %182 = arith.negf %181 : vector<2x128xf32>
    %183 = math.exp %182 : vector<2x128xf32>
    %cst_35 = arith.constant 1.000000e+00 : f32
    %184 = vector.broadcast %cst_35 : f32 to vector<2x128xf32>
    %185 = arith.addf %184, %183 : vector<2x128xf32>
    %186 = arith.divf %184, %185 : vector<2x128xf32>
    %187 = vector.extract_strided_slice %180 {offsets = [0, 128], sizes = [2, 128], strides = [1, 1]} : vector<2x512xf32> to vector<2x128xf32>
    %188 = arith.negf %187 : vector<2x128xf32>
    %189 = math.exp %188 : vector<2x128xf32>
    %cst_36 = arith.constant 1.000000e+00 : f32
    %190 = vector.broadcast %cst_36 : f32 to vector<2x128xf32>
    %191 = arith.addf %190, %189 : vector<2x128xf32>
    %192 = arith.divf %190, %191 : vector<2x128xf32>
    %193 = vector.extract_strided_slice %180 {offsets = [0, 256], sizes = [2, 128], strides = [1, 1]} : vector<2x512xf32> to vector<2x128xf32>
    %194 = math.tanh %193 : vector<2x128xf32>
    %195 = vector.extract_strided_slice %180 {offsets = [0, 384], sizes = [2, 128], strides = [1, 1]} : vector<2x512xf32> to vector<2x128xf32>
    %196 = arith.negf %195 : vector<2x128xf32>
    %197 = math.exp %196 : vector<2x128xf32>
    %cst_37 = arith.constant 1.000000e+00 : f32
    %198 = vector.broadcast %cst_37 : f32 to vector<2x128xf32>
    %199 = arith.addf %198, %197 : vector<2x128xf32>
    %200 = arith.divf %198, %199 : vector<2x128xf32>
    %201 = arith.mulf %192, %147 : vector<2x128xf32>
    %202 = arith.mulf %186, %194 : vector<2x128xf32>
    %203 = arith.addf %201, %202 : vector<2x128xf32>
    %204 = math.tanh %203 : vector<2x128xf32>
    %205 = arith.mulf %200, %204 : vector<2x128xf32>
    %cst_38 = arith.constant dense<0.000000e+00> : vector<2x512xf32>
    %206 = tpu.matmul %176, %7, %cst_38 {dimension_numbers = #tpu.dot_dimension_numbers<[1], [0], [0], [1], [0, 0, 1, 1], [], []>} : vector<2x128xf32>, vector<128x512xf32>, vector<2x512xf32> -> vector<2x512xf32>
    %207 = arith.addf %178, %206 : vector<2x512xf32>
    %208 = vector.extract_strided_slice %207 {offsets = [0, 0], sizes = [2, 128], strides = [1, 1]} : vector<2x512xf32> to vector<2x128xf32>
    %209 = arith.negf %208 : vector<2x128xf32>
    %210 = math.exp %209 : vector<2x128xf32>
    %cst_39 = arith.constant 1.000000e+00 : f32
    %211 = vector.broadcast %cst_39 : f32 to vector<2x128xf32>
    %212 = arith.addf %211, %210 : vector<2x128xf32>
    %213 = arith.divf %211, %212 : vector<2x128xf32>
    %214 = vector.extract_strided_slice %207 {offsets = [0, 128], sizes = [2, 128], strides = [1, 1]} : vector<2x512xf32> to vector<2x128xf32>
    %215 = arith.negf %214 : vector<2x128xf32>
    %216 = math.exp %215 : vector<2x128xf32>
    %cst_40 = arith.constant 1.000000e+00 : f32
    %217 = vector.broadcast %cst_40 : f32 to vector<2x128xf32>
    %218 = arith.addf %217, %216 : vector<2x128xf32>
    %219 = arith.divf %217, %218 : vector<2x128xf32>
    %220 = vector.extract_strided_slice %207 {offsets = [0, 256], sizes = [2, 128], strides = [1, 1]} : vector<2x512xf32> to vector<2x128xf32>
    %221 = math.tanh %220 : vector<2x128xf32>
    %222 = vector.extract_strided_slice %207 {offsets = [0, 384], sizes = [2, 128], strides = [1, 1]} : vector<2x512xf32> to vector<2x128xf32>
    %223 = arith.negf %222 : vector<2x128xf32>
    %224 = math.exp %223 : vector<2x128xf32>
    %cst_41 = arith.constant 1.000000e+00 : f32
    %225 = vector.broadcast %cst_41 : f32 to vector<2x128xf32>
    %226 = arith.addf %225, %224 : vector<2x128xf32>
    %227 = arith.divf %225, %226 : vector<2x128xf32>
    %228 = arith.mulf %219, %174 : vector<2x128xf32>
    %229 = arith.mulf %213, %221 : vector<2x128xf32>
    %230 = arith.addf %228, %229 : vector<2x128xf32>
    %231 = math.tanh %230 : vector<2x128xf32>
    %232 = arith.mulf %227, %231 : vector<2x128xf32>
    %233 = vector.extract_strided_slice %5 {offsets = [8, 0], sizes = [2, 512], strides = [1, 1]} : vector<16x1024xf32> to vector<2x512xf32>
    %234 = vector.extract_strided_slice %5 {offsets = [6, 512], sizes = [2, 512], strides = [1, 1]} : vector<16x1024xf32> to vector<2x512xf32>
    %cst_42 = arith.constant dense<0.000000e+00> : vector<2x512xf32>
    %235 = tpu.matmul %205, %6, %cst_42 {dimension_numbers = #tpu.dot_dimension_numbers<[1], [0], [0], [1], [0, 0, 1, 1], [], []>} : vector<2x128xf32>, vector<128x512xf32>, vector<2x512xf32> -> vector<2x512xf32>
    %236 = arith.addf %233, %235 : vector<2x512xf32>
    %237 = vector.extract_strided_slice %236 {offsets = [0, 0], sizes = [2, 128], strides = [1, 1]} : vector<2x512xf32> to vector<2x128xf32>
    %238 = arith.negf %237 : vector<2x128xf32>
    %239 = math.exp %238 : vector<2x128xf32>
    %cst_43 = arith.constant 1.000000e+00 : f32
    %240 = vector.broadcast %cst_43 : f32 to vector<2x128xf32>
    %241 = arith.addf %240, %239 : vector<2x128xf32>
    %242 = arith.divf %240, %241 : vector<2x128xf32>
    %243 = vector.extract_strided_slice %236 {offsets = [0, 128], sizes = [2, 128], strides = [1, 1]} : vector<2x512xf32> to vector<2x128xf32>
    %244 = arith.negf %243 : vector<2x128xf32>
    %245 = math.exp %244 : vector<2x128xf32>
    %cst_44 = arith.constant 1.000000e+00 : f32
    %246 = vector.broadcast %cst_44 : f32 to vector<2x128xf32>
    %247 = arith.addf %246, %245 : vector<2x128xf32>
    %248 = arith.divf %246, %247 : vector<2x128xf32>
    %249 = vector.extract_strided_slice %236 {offsets = [0, 256], sizes = [2, 128], strides = [1, 1]} : vector<2x512xf32> to vector<2x128xf32>
    %250 = math.tanh %249 : vector<2x128xf32>
    %251 = vector.extract_strided_slice %236 {offsets = [0, 384], sizes = [2, 128], strides = [1, 1]} : vector<2x512xf32> to vector<2x128xf32>
    %252 = arith.negf %251 : vector<2x128xf32>
    %253 = math.exp %252 : vector<2x128xf32>
    %cst_45 = arith.constant 1.000000e+00 : f32
    %254 = vector.broadcast %cst_45 : f32 to vector<2x128xf32>
    %255 = arith.addf %254, %253 : vector<2x128xf32>
    %256 = arith.divf %254, %255 : vector<2x128xf32>
    %257 = arith.mulf %248, %203 : vector<2x128xf32>
    %258 = arith.mulf %242, %250 : vector<2x128xf32>
    %259 = arith.addf %257, %258 : vector<2x128xf32>
    %260 = math.tanh %259 : vector<2x128xf32>
    %261 = arith.mulf %256, %260 : vector<2x128xf32>
    %cst_46 = arith.constant dense<0.000000e+00> : vector<2x512xf32>
    %262 = tpu.matmul %232, %7, %cst_46 {dimension_numbers = #tpu.dot_dimension_numbers<[1], [0], [0], [1], [0, 0, 1, 1], [], []>} : vector<2x128xf32>, vector<128x512xf32>, vector<2x512xf32> -> vector<2x512xf32>
    %263 = arith.addf %234, %262 : vector<2x512xf32>
    %264 = vector.extract_strided_slice %263 {offsets = [0, 0], sizes = [2, 128], strides = [1, 1]} : vector<2x512xf32> to vector<2x128xf32>
    %265 = arith.negf %264 : vector<2x128xf32>
    %266 = math.exp %265 : vector<2x128xf32>
    %cst_47 = arith.constant 1.000000e+00 : f32
    %267 = vector.broadcast %cst_47 : f32 to vector<2x128xf32>
    %268 = arith.addf %267, %266 : vector<2x128xf32>
    %269 = arith.divf %267, %268 : vector<2x128xf32>
    %270 = vector.extract_strided_slice %263 {offsets = [0, 128], sizes = [2, 128], strides = [1, 1]} : vector<2x512xf32> to vector<2x128xf32>
    %271 = arith.negf %270 : vector<2x128xf32>
    %272 = math.exp %271 : vector<2x128xf32>
    %cst_48 = arith.constant 1.000000e+00 : f32
    %273 = vector.broadcast %cst_48 : f32 to vector<2x128xf32>
    %274 = arith.addf %273, %272 : vector<2x128xf32>
    %275 = arith.divf %273, %274 : vector<2x128xf32>
    %276 = vector.extract_strided_slice %263 {offsets = [0, 256], sizes = [2, 128], strides = [1, 1]} : vector<2x512xf32> to vector<2x128xf32>
    %277 = math.tanh %276 : vector<2x128xf32>
    %278 = vector.extract_strided_slice %263 {offsets = [0, 384], sizes = [2, 128], strides = [1, 1]} : vector<2x512xf32> to vector<2x128xf32>
    %279 = arith.negf %278 : vector<2x128xf32>
    %280 = math.exp %279 : vector<2x128xf32>
    %cst_49 = arith.constant 1.000000e+00 : f32
    %281 = vector.broadcast %cst_49 : f32 to vector<2x128xf32>
    %282 = arith.addf %281, %280 : vector<2x128xf32>
    %283 = arith.divf %281, %282 : vector<2x128xf32>
    %284 = arith.mulf %275, %230 : vector<2x128xf32>
    %285 = arith.mulf %269, %277 : vector<2x128xf32>
    %286 = arith.addf %284, %285 : vector<2x128xf32>
    %287 = math.tanh %286 : vector<2x128xf32>
    %288 = arith.mulf %283, %287 : vector<2x128xf32>
    %289 = vector.extract_strided_slice %5 {offsets = [10, 0], sizes = [2, 512], strides = [1, 1]} : vector<16x1024xf32> to vector<2x512xf32>
    %290 = vector.extract_strided_slice %5 {offsets = [4, 512], sizes = [2, 512], strides = [1, 1]} : vector<16x1024xf32> to vector<2x512xf32>
    %cst_50 = arith.constant dense<0.000000e+00> : vector<2x512xf32>
    %291 = tpu.matmul %261, %6, %cst_50 {dimension_numbers = #tpu.dot_dimension_numbers<[1], [0], [0], [1], [0, 0, 1, 1], [], []>} : vector<2x128xf32>, vector<128x512xf32>, vector<2x512xf32> -> vector<2x512xf32>
    %292 = arith.addf %289, %291 : vector<2x512xf32>
    %293 = vector.extract_strided_slice %292 {offsets = [0, 0], sizes = [2, 128], strides = [1, 1]} : vector<2x512xf32> to vector<2x128xf32>
    %294 = arith.negf %293 : vector<2x128xf32>
    %295 = math.exp %294 : vector<2x128xf32>
    %cst_51 = arith.constant 1.000000e+00 : f32
    %296 = vector.broadcast %cst_51 : f32 to vector<2x128xf32>
    %297 = arith.addf %296, %295 : vector<2x128xf32>
    %298 = arith.divf %296, %297 : vector<2x128xf32>
    %299 = vector.extract_strided_slice %292 {offsets = [0, 128], sizes = [2, 128], strides = [1, 1]} : vector<2x512xf32> to vector<2x128xf32>
    %300 = arith.negf %299 : vector<2x128xf32>
    %301 = math.exp %300 : vector<2x128xf32>
    %cst_52 = arith.constant 1.000000e+00 : f32
    %302 = vector.broadcast %cst_52 : f32 to vector<2x128xf32>
    %303 = arith.addf %302, %301 : vector<2x128xf32>
    %304 = arith.divf %302, %303 : vector<2x128xf32>
    %305 = vector.extract_strided_slice %292 {offsets = [0, 256], sizes = [2, 128], strides = [1, 1]} : vector<2x512xf32> to vector<2x128xf32>
    %306 = math.tanh %305 : vector<2x128xf32>
    %307 = vector.extract_strided_slice %292 {offsets = [0, 384], sizes = [2, 128], strides = [1, 1]} : vector<2x512xf32> to vector<2x128xf32>
    %308 = arith.negf %307 : vector<2x128xf32>
    %309 = math.exp %308 : vector<2x128xf32>
    %cst_53 = arith.constant 1.000000e+00 : f32
    %310 = vector.broadcast %cst_53 : f32 to vector<2x128xf32>
    %311 = arith.addf %310, %309 : vector<2x128xf32>
    %312 = arith.divf %310, %311 : vector<2x128xf32>
    %313 = arith.mulf %304, %259 : vector<2x128xf32>
    %314 = arith.mulf %298, %306 : vector<2x128xf32>
    %315 = arith.addf %313, %314 : vector<2x128xf32>
    %316 = math.tanh %315 : vector<2x128xf32>
    %317 = arith.mulf %312, %316 : vector<2x128xf32>
    %cst_54 = arith.constant dense<0.000000e+00> : vector<2x512xf32>
    %318 = tpu.matmul %288, %7, %cst_54 {dimension_numbers = #tpu.dot_dimension_numbers<[1], [0], [0], [1], [0, 0, 1, 1], [], []>} : vector<2x128xf32>, vector<128x512xf32>, vector<2x512xf32> -> vector<2x512xf32>
    %319 = arith.addf %290, %318 : vector<2x512xf32>
    %320 = vector.extract_strided_slice %319 {offsets = [0, 0], sizes = [2, 128], strides = [1, 1]} : vector<2x512xf32> to vector<2x128xf32>
    %321 = arith.negf %320 : vector<2x128xf32>
    %322 = math.exp %321 : vector<2x128xf32>
    %cst_55 = arith.constant 1.000000e+00 : f32
    %323 = vector.broadcast %cst_55 : f32 to vector<2x128xf32>
    %324 = arith.addf %323, %322 : vector<2x128xf32>
    %325 = arith.divf %323, %324 : vector<2x128xf32>
    %326 = vector.extract_strided_slice %319 {offsets = [0, 128], sizes = [2, 128], strides = [1, 1]} : vector<2x512xf32> to vector<2x128xf32>
    %327 = arith.negf %326 : vector<2x128xf32>
    %328 = math.exp %327 : vector<2x128xf32>
    %cst_56 = arith.constant 1.000000e+00 : f32
    %329 = vector.broadcast %cst_56 : f32 to vector<2x128xf32>
    %330 = arith.addf %329, %328 : vector<2x128xf32>
    %331 = arith.divf %329, %330 : vector<2x128xf32>
    %332 = vector.extract_strided_slice %319 {offsets = [0, 256], sizes = [2, 128], strides = [1, 1]} : vector<2x512xf32> to vector<2x128xf32>
    %333 = math.tanh %332 : vector<2x128xf32>
    %334 = vector.extract_strided_slice %319 {offsets = [0, 384], sizes = [2, 128], strides = [1, 1]} : vector<2x512xf32> to vector<2x128xf32>
    %335 = arith.negf %334 : vector<2x128xf32>
    %336 = math.exp %335 : vector<2x128xf32>
    %cst_57 = arith.constant 1.000000e+00 : f32
    %337 = vector.broadcast %cst_57 : f32 to vector<2x128xf32>
    %338 = arith.addf %337, %336 : vector<2x128xf32>
    %339 = arith.divf %337, %338 : vector<2x128xf32>
    %340 = arith.mulf %331, %286 : vector<2x128xf32>
    %341 = arith.mulf %325, %333 : vector<2x128xf32>
    %342 = arith.addf %340, %341 : vector<2x128xf32>
    %343 = math.tanh %342 : vector<2x128xf32>
    %344 = arith.mulf %339, %343 : vector<2x128xf32>
    %345 = vector.extract_strided_slice %5 {offsets = [12, 0], sizes = [2, 512], strides = [1, 1]} : vector<16x1024xf32> to vector<2x512xf32>
    %346 = vector.extract_strided_slice %5 {offsets = [2, 512], sizes = [2, 512], strides = [1, 1]} : vector<16x1024xf32> to vector<2x512xf32>
    %cst_58 = arith.constant dense<0.000000e+00> : vector<2x512xf32>
    %347 = tpu.matmul %317, %6, %cst_58 {dimension_numbers = #tpu.dot_dimension_numbers<[1], [0], [0], [1], [0, 0, 1, 1], [], []>} : vector<2x128xf32>, vector<128x512xf32>, vector<2x512xf32> -> vector<2x512xf32>
    %348 = arith.addf %345, %347 : vector<2x512xf32>
    %349 = vector.extract_strided_slice %348 {offsets = [0, 0], sizes = [2, 128], strides = [1, 1]} : vector<2x512xf32> to vector<2x128xf32>
    %350 = arith.negf %349 : vector<2x128xf32>
    %351 = math.exp %350 : vector<2x128xf32>
    %cst_59 = arith.constant 1.000000e+00 : f32
    %352 = vector.broadcast %cst_59 : f32 to vector<2x128xf32>
    %353 = arith.addf %352, %351 : vector<2x128xf32>
    %354 = arith.divf %352, %353 : vector<2x128xf32>
    %355 = vector.extract_strided_slice %348 {offsets = [0, 128], sizes = [2, 128], strides = [1, 1]} : vector<2x512xf32> to vector<2x128xf32>
    %356 = arith.negf %355 : vector<2x128xf32>
    %357 = math.exp %356 : vector<2x128xf32>
    %cst_60 = arith.constant 1.000000e+00 : f32
    %358 = vector.broadcast %cst_60 : f32 to vector<2x128xf32>
    %359 = arith.addf %358, %357 : vector<2x128xf32>
    %360 = arith.divf %358, %359 : vector<2x128xf32>
    %361 = vector.extract_strided_slice %348 {offsets = [0, 256], sizes = [2, 128], strides = [1, 1]} : vector<2x512xf32> to vector<2x128xf32>
    %362 = math.tanh %361 : vector<2x128xf32>
    %363 = vector.extract_strided_slice %348 {offsets = [0, 384], sizes = [2, 128], strides = [1, 1]} : vector<2x512xf32> to vector<2x128xf32>
    %364 = arith.negf %363 : vector<2x128xf32>
    %365 = math.exp %364 : vector<2x128xf32>
    %cst_61 = arith.constant 1.000000e+00 : f32
    %366 = vector.broadcast %cst_61 : f32 to vector<2x128xf32>
    %367 = arith.addf %366, %365 : vector<2x128xf32>
    %368 = arith.divf %366, %367 : vector<2x128xf32>
    %369 = arith.mulf %360, %315 : vector<2x128xf32>
    %370 = arith.mulf %354, %362 : vector<2x128xf32>
    %371 = arith.addf %369, %370 : vector<2x128xf32>
    %372 = math.tanh %371 : vector<2x128xf32>
    %373 = arith.mulf %368, %372 : vector<2x128xf32>
    %cst_62 = arith.constant dense<0.000000e+00> : vector<2x512xf32>
    %374 = tpu.matmul %344, %7, %cst_62 {dimension_numbers = #tpu.dot_dimension_numbers<[1], [0], [0], [1], [0, 0, 1, 1], [], []>} : vector<2x128xf32>, vector<128x512xf32>, vector<2x512xf32> -> vector<2x512xf32>
    %375 = arith.addf %346, %374 : vector<2x512xf32>
    %376 = vector.extract_strided_slice %375 {offsets = [0, 0], sizes = [2, 128], strides = [1, 1]} : vector<2x512xf32> to vector<2x128xf32>
    %377 = arith.negf %376 : vector<2x128xf32>
    %378 = math.exp %377 : vector<2x128xf32>
    %cst_63 = arith.constant 1.000000e+00 : f32
    %379 = vector.broadcast %cst_63 : f32 to vector<2x128xf32>
    %380 = arith.addf %379, %378 : vector<2x128xf32>
    %381 = arith.divf %379, %380 : vector<2x128xf32>
    %382 = vector.extract_strided_slice %375 {offsets = [0, 128], sizes = [2, 128], strides = [1, 1]} : vector<2x512xf32> to vector<2x128xf32>
    %383 = arith.negf %382 : vector<2x128xf32>
    %384 = math.exp %383 : vector<2x128xf32>
    %cst_64 = arith.constant 1.000000e+00 : f32
    %385 = vector.broadcast %cst_64 : f32 to vector<2x128xf32>
    %386 = arith.addf %385, %384 : vector<2x128xf32>
    %387 = arith.divf %385, %386 : vector<2x128xf32>
    %388 = vector.extract_strided_slice %375 {offsets = [0, 256], sizes = [2, 128], strides = [1, 1]} : vector<2x512xf32> to vector<2x128xf32>
    %389 = math.tanh %388 : vector<2x128xf32>
    %390 = vector.extract_strided_slice %375 {offsets = [0, 384], sizes = [2, 128], strides = [1, 1]} : vector<2x512xf32> to vector<2x128xf32>
    %391 = arith.negf %390 : vector<2x128xf32>
    %392 = math.exp %391 : vector<2x128xf32>
    %cst_65 = arith.constant 1.000000e+00 : f32
    %393 = vector.broadcast %cst_65 : f32 to vector<2x128xf32>
    %394 = arith.addf %393, %392 : vector<2x128xf32>
    %395 = arith.divf %393, %394 : vector<2x128xf32>
    %396 = arith.mulf %387, %342 : vector<2x128xf32>
    %397 = arith.mulf %381, %389 : vector<2x128xf32>
    %398 = arith.addf %396, %397 : vector<2x128xf32>
    %399 = math.tanh %398 : vector<2x128xf32>
    %400 = arith.mulf %395, %399 : vector<2x128xf32>
    %401 = vector.extract_strided_slice %5 {offsets = [14, 0], sizes = [2, 512], strides = [1, 1]} : vector<16x1024xf32> to vector<2x512xf32>
    %402 = vector.extract_strided_slice %5 {offsets = [0, 512], sizes = [2, 512], strides = [1, 1]} : vector<16x1024xf32> to vector<2x512xf32>
    %cst_66 = arith.constant dense<0.000000e+00> : vector<2x512xf32>
    %403 = tpu.matmul %373, %6, %cst_66 {dimension_numbers = #tpu.dot_dimension_numbers<[1], [0], [0], [1], [0, 0, 1, 1], [], []>} : vector<2x128xf32>, vector<128x512xf32>, vector<2x512xf32> -> vector<2x512xf32>
    %404 = arith.addf %401, %403 : vector<2x512xf32>
    %405 = vector.extract_strided_slice %404 {offsets = [0, 0], sizes = [2, 128], strides = [1, 1]} : vector<2x512xf32> to vector<2x128xf32>
    %406 = arith.negf %405 : vector<2x128xf32>
    %407 = math.exp %406 : vector<2x128xf32>
    %cst_67 = arith.constant 1.000000e+00 : f32
    %408 = vector.broadcast %cst_67 : f32 to vector<2x128xf32>
    %409 = arith.addf %408, %407 : vector<2x128xf32>
    %410 = arith.divf %408, %409 : vector<2x128xf32>
    %411 = vector.extract_strided_slice %404 {offsets = [0, 128], sizes = [2, 128], strides = [1, 1]} : vector<2x512xf32> to vector<2x128xf32>
    %412 = arith.negf %411 : vector<2x128xf32>
    %413 = math.exp %412 : vector<2x128xf32>
    %cst_68 = arith.constant 1.000000e+00 : f32
    %414 = vector.broadcast %cst_68 : f32 to vector<2x128xf32>
    %415 = arith.addf %414, %413 : vector<2x128xf32>
    %416 = arith.divf %414, %415 : vector<2x128xf32>
    %417 = vector.extract_strided_slice %404 {offsets = [0, 256], sizes = [2, 128], strides = [1, 1]} : vector<2x512xf32> to vector<2x128xf32>
    %418 = math.tanh %417 : vector<2x128xf32>
    %419 = vector.extract_strided_slice %404 {offsets = [0, 384], sizes = [2, 128], strides = [1, 1]} : vector<2x512xf32> to vector<2x128xf32>
    %420 = arith.negf %419 : vector<2x128xf32>
    %421 = math.exp %420 : vector<2x128xf32>
    %cst_69 = arith.constant 1.000000e+00 : f32
    %422 = vector.broadcast %cst_69 : f32 to vector<2x128xf32>
    %423 = arith.addf %422, %421 : vector<2x128xf32>
    %424 = arith.divf %422, %423 : vector<2x128xf32>
    %425 = arith.mulf %416, %371 : vector<2x128xf32>
    %426 = arith.mulf %410, %418 : vector<2x128xf32>
    %427 = arith.addf %425, %426 : vector<2x128xf32>
    %428 = math.tanh %427 : vector<2x128xf32>
    %429 = arith.mulf %424, %428 : vector<2x128xf32>
    %cst_70 = arith.constant dense<0.000000e+00> : vector<2x512xf32>
    %430 = tpu.matmul %400, %7, %cst_70 {dimension_numbers = #tpu.dot_dimension_numbers<[1], [0], [0], [1], [0, 0, 1, 1], [], []>} : vector<2x128xf32>, vector<128x512xf32>, vector<2x512xf32> -> vector<2x512xf32>
    %431 = arith.addf %402, %430 : vector<2x512xf32>
    %432 = vector.extract_strided_slice %431 {offsets = [0, 0], sizes = [2, 128], strides = [1, 1]} : vector<2x512xf32> to vector<2x128xf32>
    %433 = arith.negf %432 : vector<2x128xf32>
    %434 = math.exp %433 : vector<2x128xf32>
    %cst_71 = arith.constant 1.000000e+00 : f32
    %435 = vector.broadcast %cst_71 : f32 to vector<2x128xf32>
    %436 = arith.addf %435, %434 : vector<2x128xf32>
    %437 = arith.divf %435, %436 : vector<2x128xf32>
    %438 = vector.extract_strided_slice %431 {offsets = [0, 128], sizes = [2, 128], strides = [1, 1]} : vector<2x512xf32> to vector<2x128xf32>
    %439 = arith.negf %438 : vector<2x128xf32>
    %440 = math.exp %439 : vector<2x128xf32>
    %cst_72 = arith.constant 1.000000e+00 : f32
    %441 = vector.broadcast %cst_72 : f32 to vector<2x128xf32>
    %442 = arith.addf %441, %440 : vector<2x128xf32>
    %443 = arith.divf %441, %442 : vector<2x128xf32>
    %444 = vector.extract_strided_slice %431 {offsets = [0, 256], sizes = [2, 128], strides = [1, 1]} : vector<2x512xf32> to vector<2x128xf32>
    %445 = math.tanh %444 : vector<2x128xf32>
    %446 = vector.extract_strided_slice %431 {offsets = [0, 384], sizes = [2, 128], strides = [1, 1]} : vector<2x512xf32> to vector<2x128xf32>
    %447 = arith.negf %446 : vector<2x128xf32>
    %448 = math.exp %447 : vector<2x128xf32>
    %cst_73 = arith.constant 1.000000e+00 : f32
    %449 = vector.broadcast %cst_73 : f32 to vector<2x128xf32>
    %450 = arith.addf %449, %448 : vector<2x128xf32>
    %451 = arith.divf %449, %450 : vector<2x128xf32>
    %452 = arith.mulf %443, %398 : vector<2x128xf32>
    %453 = arith.mulf %437, %445 : vector<2x128xf32>
    %454 = arith.addf %452, %453 : vector<2x128xf32>
    %455 = math.tanh %454 : vector<2x128xf32>
    %456 = arith.mulf %451, %455 : vector<2x128xf32>
    %457 = tpu.concatenate %37, %93, %149, %205, %261, %317, %373, %429 in 0 : vector<2x128xf32>, vector<2x128xf32>, vector<2x128xf32>, vector<2x128xf32>, vector<2x128xf32>, vector<2x128xf32>, vector<2x128xf32>, vector<2x128xf32> -> vector<16x128xf32>
    %458 = tpu.concatenate %456, %400, %344, %288, %232, %176, %120, %64 in 0 : vector<2x128xf32>, vector<2x128xf32>, vector<2x128xf32>, vector<2x128xf32>, vector<2x128xf32>, vector<2x128xf32>, vector<2x128xf32>, vector<2x128xf32> -> vector<16x128xf32>
    %c0_74 = arith.constant 0 : index
    %c0_75 = arith.constant 0 : index
    %459 = vector.load %arg5[%c0_74, %c0_75] : memref<128x128xf32, #tpu.memory_space<vmem>>, vector<128x128xf32>
    %cst_76 = arith.constant dense<0.000000e+00> : vector<16x128xf32>
    %460 = tpu.matmul %457, %459, %cst_76 {dimension_numbers = #tpu.dot_dimension_numbers<[1], [0], [0], [1], [0, 0, 1, 1], [], []>} : vector<16x128xf32>, vector<128x128xf32>, vector<16x128xf32> -> vector<16x128xf32>
    %c0_77 = arith.constant 0 : index
    %c0_78 = arith.constant 0 : index
    %461 = vector.load %arg6[%c0_77, %c0_78] : memref<128x128xf32, #tpu.memory_space<vmem>>, vector<128x128xf32>
    %cst_79 = arith.constant dense<0.000000e+00> : vector<16x128xf32>
    %462 = tpu.matmul %458, %461, %cst_79 {dimension_numbers = #tpu.dot_dimension_numbers<[1], [0], [0], [1], [0, 0, 1, 1], [], []>} : vector<16x128xf32>, vector<128x128xf32>, vector<16x128xf32> -> vector<16x128xf32>
    %463 = arith.addf %460, %462 : vector<16x128xf32>
    %c0_80 = arith.constant 0 : index
    %c0_81 = arith.constant 0 : index
    %464 = vector.load %arg7[%c0_80, %c0_81] : memref<1x128xf32, #tpu.memory_space<vmem>>, vector<1x128xf32>
    %465 = vector.broadcast %464 : vector<1x128xf32> to vector<16x128xf32>
    %466 = arith.addf %463, %465 : vector<16x128xf32>
    %c0_82 = arith.constant 0 : index
    %c0_83 = arith.constant 0 : index
    %467 = vector.load %arg8[%c0_82, %c0_83] : memref<16x128xf32, #tpu.memory_space<vmem>>, vector<16x128xf32>
    tpu.vector_store %arg8[%c0_82, %c0_83], %466 {strides = array<i32>} : memref<16x128xf32, #tpu.memory_space<vmem>>, vector<16x128xf32>,
    return
  }
}

</mosaic_0001>

<llo_original>
// kernel: tpu_custom_call.1
$region0: #{tpu_custom_call.1}
  #allocation0 [shape = 'u32[]', space=smem, size = 0x4, offset = 0x4, fixed_abs, tag = 'smem constant byte address 0x4 - core index']
  #allocation1 [shape = 'u32[144,128]{1,0:T(1,128)}', space=vmem, size = 0x12000, scoped, tag = 'internal scratch']
  %s0 = inlined_call_operand.hbm [shape: f32[16,16], index: 0, kind: input, shape index: {}]
  %s1 = inlined_call_operand.hbm [shape: f32[16,1024], index: 1, kind: input, shape index: {}]
  %s2 = inlined_call_operand.hbm [shape: f32[1,1024], index: 2, kind: input, shape index: {}]
  %s3 = inlined_call_operand.hbm [shape: f32[128,512], index: 3, kind: input, shape index: {}]
  %s4 = inlined_call_operand.hbm [shape: f32[128,512], index: 4, kind: input, shape index: {}]
  %s5 = inlined_call_operand.hbm [shape: f32[128,128], index: 5, kind: input, shape index: {}]
  %s6 = inlined_call_operand.hbm [shape: f32[128,128], index: 6, kind: input, shape index: {}]
  %s7 = inlined_call_operand.vmem [shape: f32[1,128], index: 7, kind: input, shape index: {}]
  %s8 = inlined_call_operand.hbm [shape: f32[16,128], index: 8, kind: output, shape index: {}]
  %s9 = sld [smem:[#allocation0]]
  $region70: #{tpu_custom_call.1} parent=0
    _
  %s11 = ssub.s32 1, %s9
  %s12 = scalar_select 0, %s11, %s9
  $region1: #{tpu_custom_call.1} parent=0
    #allocation2 [shape = 'u8[8192]{0}', space=vmem, size = 0x2000, scoped, tag = 'input window, operand 0, single buffered']
    #allocation3 [shape = 's32[1]{0}', space=sflag, size = 0x4, scoped, tag = 'scoped memory for tpu_custom_call.1']
    #allocation4 [shape = 's32[1]{0}', space=sflag, size = 0x4, scoped, tag = 'scoped memory for tpu_custom_call.1']
    #allocation5 [shape = 'u8[65536]{0}', space=vmem, size = 0x10000, scoped, tag = 'input window, operand 1, single buffered']
    #allocation6 [shape = 's32[1]{0}', space=sflag, size = 0x4, scoped, tag = 'scoped memory for tpu_custom_call.1']
    #allocation7 [shape = 'u8[4096]{0}', space=vmem, size = 0x1000, scoped, tag = 'input window, operand 2, single buffered']
    #allocation8 [shape = 'u8[262144]{0}', space=vmem, size = 0x40000, scoped, tag = 'input window, operand 3, single buffered']
    #allocation9 [shape = 's32[1]{0}', space=sflag, size = 0x4, scoped, tag = 'scoped memory for tpu_custom_call.1']
    #allocation10 [shape = 'u8[262144]{0}', space=vmem, size = 0x40000, scoped, tag = 'input window, operand 4, single buffered']
    #allocation11 [shape = 'u8[65536]{0}', space=vmem, size = 0x10000, scoped, tag = 'input window, operand 5, single buffered']
    #allocation12 [shape = 's32[1]{0}', space=sflag, size = 0x4, scoped, tag = 'scoped memory for tpu_custom_call.1']
    #allocation13 [shape = 'u8[65536]{0}', space=vmem, size = 0x10000, scoped, tag = 'input window, operand 6, single buffered']
    #allocation14 [shape = 'u8[8192]{0}', space=vmem, size = 0x2000, scoped, tag = 'output window, operand 0, single buffered']
    %13 = vsyncpa [#allocation3], 0
    %14 = vsyncpa [#allocation6], 0
    %15 = vsyncpa [#allocation9], 0
    %16 = vsyncpa [#allocation12], 0
    %17 = vsyncpa [#allocation4], 0
    // Predicated region
    $region2: #{tpu_custom_call.1} parent=1 // pred_check
      _
    $region3: #{tpu_custom_call.1} parent=1 // pred_check_branch
      %19 = sbr.rel (0) target = $region5
    $region4: #{tpu_custom_call.1} parent=1 // pred_region
      %s21 = ssub.s32 256, 256
      %22 = vsyncadd [#allocation3], %s21
      %s23 = sshll.u32 [#allocation2], 4
      %s24 = int_to_ptr.vmem [resolvable:$true] %s23
      %29 = dma.hbm_to_vmem [thread:$0]  %s0, 256, %s24, [#allocation3], 128, 128, 8
    $region5: #{tpu_custom_call.1} parent=1 // pred_fallthru
      _
    // Predicated region
    $region6: #{tpu_custom_call.1} parent=1 // pred_check
      _
    $region7: #{tpu_custom_call.1} parent=1 // pred_check_branch
      %31 = sbr.rel (0) target = $region9
    $region8: #{tpu_custom_call.1} parent=1 // pred_region
      %s33 = ssub.s32 2048, 2048
      %34 = vsyncadd [#allocation6], %s33
      %s35 = sshll.u32 [#allocation5], 4
      %s36 = int_to_ptr.vmem [resolvable:$true] %s35
      %41 = dma.hbm_to_vmem [thread:$0]  %s1, 2048, %s36, [#allocation6], 1024, 1024, 64
    $region9: #{tpu_custom_call.1} parent=1 // pred_fallthru
      _
    // Predicated region
    $region10: #{tpu_custom_call.1} parent=1 // pred_check
      _
    $region11: #{tpu_custom_call.1} parent=1 // pred_check_branch
      %43 = sbr.rel (0) target = $region13
    $region12: #{tpu_custom_call.1} parent=1 // pred_region
      %s45 = ssub.s32 128, 128
      %46 = vsyncadd [#allocation6], %s45
      %s48 = sshll.u32 [#allocation7], 4
      %s49 = int_to_ptr.vmem [resolvable:$true] %s48
      %51 = dma.hbm_to_vmem [thread:$0]  %s2, 128, %s49, [#allocation6]
    $region13: #{tpu_custom_call.1} parent=1 // pred_fallthru
      _
    // Predicated region
    $region14: #{tpu_custom_call.1} parent=1 // pred_check
      _
    $region15: #{tpu_custom_call.1} parent=1 // pred_check_branch
      %53 = sbr.rel (0) target = $region17
    $region16: #{tpu_custom_call.1} parent=1 // pred_region
      %s55 = ssub.s32 8192, 8192
      %56 = vsyncadd [#allocation9], %s55
      %s57 = sshll.u32 [#allocation8], 4
      %s58 = int_to_ptr.vmem [resolvable:$true] %s57
      %63 = dma.hbm_to_vmem [thread:$0]  %s3, 8192, %s58, [#allocation9], 512, 512, 32
    $region17: #{tpu_custom_call.1} parent=1 // pred_fallthru
      _
    // Predicated region
    $region18: #{tpu_custom_call.1} parent=1 // pred_check
      _
    $region19: #{tpu_custom_call.1} parent=1 // pred_check_branch
      %65 = sbr.rel (0) target = $region21
    $region20: #{tpu_custom_call.1} parent=1 // pred_region
      %s67 = ssub.s32 8192, 8192
      %68 = vsyncadd [#allocation9], %s67
      %s69 = sshll.u32 [#allocation10], 4
      %s70 = int_to_ptr.vmem [resolvable:$true] %s69
      %75 = dma.hbm_to_vmem [thread:$0]  %s4, 8192, %s70, [#allocation9], 512, 512, 32
    $region21: #{tpu_custom_call.1} parent=1 // pred_fallthru
      _
    // Predicated region
    $region22: #{tpu_custom_call.1} parent=1 // pred_check
      _
    $region23: #{tpu_custom_call.1} parent=1 // pred_check_branch
      %77 = sbr.rel (0) target = $region25
    $region24: #{tpu_custom_call.1} parent=1 // pred_region
      %s79 = ssub.s32 2048, 2048
      %80 = vsyncadd [#allocation12], %s79
      %s81 = sshll.u32 [#allocation11], 4
      %s82 = int_to_ptr.vmem [resolvable:$true] %s81
      %87 = dma.hbm_to_vmem [thread:$0]  %s5, 2048, %s82, [#allocation12], 128, 128, 8
    $region25: #{tpu_custom_call.1} parent=1 // pred_fallthru
      _
    // Predicated region
    $region26: #{tpu_custom_call.1} parent=1 // pred_check
      _
    $region27: #{tpu_custom_call.1} parent=1 // pred_check_branch
      %89 = sbr.rel (0) target = $region29
    $region28: #{tpu_custom_call.1} parent=1 // pred_region
      %s91 = ssub.s32 2048, 2048
      %92 = vsyncadd [#allocation12], %s91
      %s93 = sshll.u32 [#allocation13], 4
      %s94 = int_to_ptr.vmem [resolvable:$true] %s93
      %99 = dma.hbm_to_vmem [thread:$0]  %s6, 2048, %s94, [#allocation12], 128, 128, 8
    $region29: #{tpu_custom_call.1} parent=1 // pred_fallthru
      _
    // Predicated region
    $region30: #{tpu_custom_call.1} parent=1 // pred_check
      _
    $region31: #{tpu_custom_call.1} parent=1 // pred_check_branch
      %101 = sbr.rel (0) target = $region33
    $region32: #{tpu_custom_call.1} parent=1 // pred_region
      _
    $region33: #{tpu_custom_call.1} parent=1 // pred_fallthru
      _
    // Predicated region
    $region34: #{tpu_custom_call.1} parent=1 // pred_check
      _
    $region35: #{tpu_custom_call.1} parent=1 // pred_check_branch
      %103 = sbr.rel (0) target = $region37
    $region36: #{tpu_custom_call.1} parent=1 // pred_region
      %104 = dma.done [#allocation3], 256
    $region37: #{tpu_custom_call.1} parent=1 // pred_fallthru
      _
    // Predicated region
    $region38: #{tpu_custom_call.1} parent=1 // pred_check
      _
    $region39: #{tpu_custom_call.1} parent=1 // pred_check_branch
      %106 = sbr.rel (0) target = $region41
    $region40: #{tpu_custom_call.1} parent=1 // pred_region
      %107 = dma.done [#allocation6], 2048
    $region41: #{tpu_custom_call.1} parent=1 // pred_fallthru
      _
    // Predicated region
    $region42: #{tpu_custom_call.1} parent=1 // pred_check
      _
    $region43: #{tpu_custom_call.1} parent=1 // pred_check_branch
      %109 = sbr.rel (0) target = $region45
    $region44: #{tpu_custom_call.1} parent=1 // pred_region
      %110 = dma.done [#allocation6], 128
    $region45: #{tpu_custom_call.1} parent=1 // pred_fallthru
      _
    // Predicated region
    $region46: #{tpu_custom_call.1} parent=1 // pred_check
      _
    $region47: #{tpu_custom_call.1} parent=1 // pred_check_branch
      %112 = sbr.rel (0) target = $region49
    $region48: #{tpu_custom_call.1} parent=1 // pred_region
      %113 = dma.done [#allocation9], 8192
    $region49: #{tpu_custom_call.1} parent=1 // pred_fallthru
      _
    // Predicated region
    $region50: #{tpu_custom_call.1} parent=1 // pred_check
      _
    $region51: #{tpu_custom_call.1} parent=1 // pred_check_branch
      %115 = sbr.rel (0) target = $region53
    $region52: #{tpu_custom_call.1} parent=1 // pred_region
      %116 = dma.done [#allocation9], 8192
    $region53: #{tpu_custom_call.1} parent=1 // pred_fallthru
      _
    // Predicated region
    $region54: #{tpu_custom_call.1} parent=1 // pred_check
      _
    $region55: #{tpu_custom_call.1} parent=1 // pred_check_branch
      %118 = sbr.rel (0) target = $region57
    $region56: #{tpu_custom_call.1} parent=1 // pred_region
      %119 = dma.done [#allocation12], 2048
    $region57: #{tpu_custom_call.1} parent=1 // pred_fallthru
      _
    // Predicated region
    $region58: #{tpu_custom_call.1} parent=1 // pred_check
      _
    $region59: #{tpu_custom_call.1} parent=1 // pred_check_branch
      %121 = sbr.rel (0) target = $region61
    $region60: #{tpu_custom_call.1} parent=1 // pred_region
      %122 = dma.done [#allocation12], 2048
    $region61: #{tpu_custom_call.1} parent=1 // pred_fallthru
      _
    %v123 = vld [vmem:[#allocation2] sm:$0xff]
    %v124 = vld [vmem:[#allocation2 + $0x8] sm:$0xff]
    %v125 = vld [vmem:[#allocation5] sm:$0xff]
    %v126 = vld [vmem:[#allocation5 + $0x8] sm:$0xff]
    %v127 = vld [vmem:[#allocation5 + $0x10] sm:$0xff]
    %v128 = vld [vmem:[#allocation5 + $0x18] sm:$0xff]
    %v129 = vld [vmem:[#allocation5 + $0x20] sm:$0xff]
    %v130 = vld [vmem:[#allocation5 + $0x28] sm:$0xff]
    %v131 = vld [vmem:[#allocation5 + $0x30] sm:$0xff]
    %v132 = vld [vmem:[#allocation5 + $0x38] sm:$0xff]
    %v133 = vld [vmem:[#allocation5 + $0x40] sm:$0xff]
    %v134 = vld [vmem:[#allocation5 + $0x48] sm:$0xff]
    %v135 = vld [vmem:[#allocation5 + $0x50] sm:$0xff]
    %v136 = vld [vmem:[#allocation5 + $0x58] sm:$0xff]
    %v137 = vld [vmem:[#allocation5 + $0x60] sm:$0xff]
    %v138 = vld [vmem:[#allocation5 + $0x68] sm:$0xff]
    %v139 = vld [vmem:[#allocation5 + $0x70] sm:$0xff]
    %v140 = vld [vmem:[#allocation5 + $0x78] sm:$0xff]
    %v141 = vld [vmem:[#allocation7] sm:$0xff]
    %v143 = vlaneseq
    %v144 = vshrl.u32 %v143, 7
    %v145 = vsub.s32 0, %v144
    %v146 = vrot.slane %v141, %v145
    %v147 = vlaneseq
    %v148 = vshrl.u32 %v147, 7
    %v149 = vsub.s32 1, %v148
    %v150 = vrot.slane %v141, %v149
    %v151 = vlaneseq
    %v152 = vshrl.u32 %v151, 7
    %v153 = vsub.s32 2, %v152
    %v154 = vrot.slane %v141, %v153
    %v155 = vlaneseq
    %v156 = vshrl.u32 %v155, 7
    %v157 = vsub.s32 3, %v156
    %v158 = vrot.slane %v141, %v157
    %v159 = vlaneseq
    %v160 = vshrl.u32 %v159, 7
    %v161 = vsub.s32 4, %v160
    %v162 = vrot.slane %v141, %v161
    %v163 = vlaneseq
    %v164 = vshrl.u32 %v163, 7
    %v165 = vsub.s32 5, %v164
    %v166 = vrot.slane %v141, %v165
    %v167 = vlaneseq
    %v168 = vshrl.u32 %v167, 7
    %v169 = vsub.s32 6, %v168
    %v170 = vrot.slane %v141, %v169
    %v171 = vlaneseq
    %v172 = vshrl.u32 %v171, 7
    %v173 = vsub.s32 7, %v172
    %v174 = vrot.slane %v141, %v173
    %vm183 = vcmask 130048
    %v185 = vsel %vm183, %v123, 0
    %v188 = vsel %vm183, %v124, 0
    %190 = vmatprep.subr.mxu0 %v126
    %191 = vmatpush1.msra.mxu0 %v125
    %192 = vmatprep.subr.mxu0 %v134
    %193 = vmatpush1.msra.mxu0 %v133
    %194 = vmatprep.subr.mxu0 0.0
    %195 = vmatpush1.msra.mxu0 0.0
    %196 = vmatprep.subr.mxu0 0.0
    %197 = vmatpush1.msra.mxu0 0.0
    %198 = vmatprep.subr.mxu0 0.0
    %199 = vmatpush1.msra.mxu0 0.0
    %200 = vmatprep.subr.mxu0 0.0
    %201 = vmatpush1.msra.mxu0 0.0
    %202 = vmatprep.subr.mxu0 0.0
    %203 = vmatpush1.msra.mxu0 0.0
    %204 = vmatprep.subr.mxu0 0.0
    %205 = vmatpush1.msra.mxu0 0.0
    %206 = vmatprep.subr.mxu0 0.0
    %207 = vmatpush1.msra.mxu0 0.0
    %208 = vmatprep.subr.mxu0 0.0
    %209 = vmatpush1.msra.mxu0 0.0
    %210 = vmatprep.subr.mxu0 0.0
    %211 = vmatpush1.msra.mxu0 0.0
    %212 = vmatprep.subr.mxu0 0.0
    %213 = vmatpush1.msra.mxu0 0.0
    %214 = vmatprep.subr.mxu0 0.0
    %215 = vmatpush1.msra.mxu0 0.0
    %216 = vmatprep.subr.mxu0 0.0
    %217 = vmatpush1.msra.mxu0 0.0
    %218 = vmatprep.subr.mxu0 0.0
    %219 = vmatpush1.msra.mxu0 0.0
    %220 = vmatprep.subr.mxu0 0.0
    %221 = vmatpush1.msra.mxu0 0.0
    %222 = vmatprep.subr.mxu0 0.0
    %223 = vmatpush1.msra.mxu0 0.0
    %224 = vmatprep.subr.mxu0 0.0
    %225 = vmatpush1.msra.mxu0 0.0
    %226 = vmatprep.subr.mxu0 0.0
    %227 = vmatpush1.msra.mxu0 0.0
    %228 = vmatprep.subr.mxu0 0.0
    %229 = vmatpush1.msra.mxu0 0.0
    %230 = vmatprep.subr.mxu0 0.0
    %231 = vmatpush1.msra.mxu0 0.0
    %232 = vmatprep.subr.mxu0 0.0
    %233 = vmatpush1.msra.mxu0 0.0
    %234 = vmatprep.subr.mxu0 0.0
    %235 = vmatpush1.msra.mxu0 0.0
    %236 = vmatprep.subr.mxu0 0.0
    %237 = vmatpush1.msra.mxu0 0.0
    %238 = vmatprep.subr.mxu0 0.0
    %239 = vmatpush1.msra.mxu0 0.0
    %240 = vmatprep.subr.mxu0 0.0
    %241 = vmatpush1.msra.mxu0 0.0
    %242 = vmatprep.subr.mxu0 0.0
    %243 = vmatpush1.msra.mxu0 0.0
    %244 = vmatprep.subr.mxu0 0.0
    %245 = vmatpush1.msra.mxu0 0.0
    %246 = vmatprep.subr.mxu0 0.0
    %247 = vmatpush1.msra.mxu0 0.0
    %248 = vmatprep.subr.mxu0 0.0
    %249 = vmatpush1.msra.mxu0 0.0
    %250 = vmatprep.subr.mxu0 0.0
    %251 = vmatpush1.msra.mxu0 0.0
    %252 = vmatprep.subr.mxu0 0.0
    %253 = vmatpush1.msra.mxu0 0.0
    %254 = vmatprep.mubr.f32.mxu0 0.0
    %255 = vmatmul.mubr.f32.gmra.mrb[0].mxu0 %v185
    %v256 = vpop.f32.mrb[0].mxu0
    %v257 = vadd.f32 %v146, %v256
    %v258 = vpop.f32.mrb[0].mxu0
    %v259 = vadd.f32 %v150, %v258
    %260 = vmatprep.mubr.f32.mxu0 0.0
    %261 = vmatmul.mubr.f32.gmra.mrb[0].mxu0 %v188
    %v262 = vpop.f32.mrb[0].mxu0
    %v263 = vadd.f32 %v146, %v262
    %v264 = vpop.f32.mrb[0].mxu0
    %v265 = vadd.f32 %v150, %v264
    %266 = vdwg.mxu0
    %267 = vmatprep.subr.mxu0 %v128
    %268 = vmatpush1.msra.mxu0 %v127
    %269 = vmatprep.subr.mxu0 %v136
    %270 = vmatpush1.msra.mxu0 %v135
    %271 = vmatprep.subr.mxu0 0.0
    %272 = vmatpush1.msra.mxu0 0.0
    %273 = vmatprep.subr.mxu0 0.0
    %274 = vmatpush1.msra.mxu0 0.0
    %275 = vmatprep.subr.mxu0 0.0
    %276 = vmatpush1.msra.mxu0 0.0
    %277 = vmatprep.subr.mxu0 0.0
    %278 = vmatpush1.msra.mxu0 0.0
    %279 = vmatprep.subr.mxu0 0.0
    %280 = vmatpush1.msra.mxu0 0.0
    %281 = vmatprep.subr.mxu0 0.0
    %282 = vmatpush1.msra.mxu0 0.0
    %283 = vmatprep.subr.mxu0 0.0
    %284 = vmatpush1.msra.mxu0 0.0
    %285 = vmatprep.subr.mxu0 0.0
    %286 = vmatpush1.msra.mxu0 0.0
    %287 = vmatprep.subr.mxu0 0.0
    %288 = vmatpush1.msra.mxu0 0.0
    %289 = vmatprep.subr.mxu0 0.0
    %290 = vmatpush1.msra.mxu0 0.0
    %291 = vmatprep.subr.mxu0 0.0
    %292 = vmatpush1.msra.mxu0 0.0
    %293 = vmatprep.subr.mxu0 0.0
    %294 = vmatpush1.msra.mxu0 0.0
    %295 = vmatprep.subr.mxu0 0.0
    %296 = vmatpush1.msra.mxu0 0.0
    %297 = vmatprep.subr.mxu0 0.0
    %298 = vmatpush1.msra.mxu0 0.0
    %299 = vmatprep.subr.mxu0 0.0
    %300 = vmatpush1.msra.mxu0 0.0
    %301 = vmatprep.subr.mxu0 0.0
    %302 = vmatpush1.msra.mxu0 0.0
    %303 = vmatprep.subr.mxu0 0.0
    %304 = vmatpush1.msra.mxu0 0.0
    %305 = vmatprep.subr.mxu0 0.0
    %306 = vmatpush1.msra.mxu0 0.0
    %307 = vmatprep.subr.mxu0 0.0
    %308 = vmatpush1.msra.mxu0 0.0
    %309 = vmatprep.subr.mxu0 0.0
    %310 = vmatpush1.msra.mxu0 0.0
    %311 = vmatprep.subr.mxu0 0.0
    %312 = vmatpush1.msra.mxu0 0.0
    %313 = vmatprep.subr.mxu0 0.0
    %314 = vmatpush1.msra.mxu0 0.0
    %315 = vmatprep.subr.mxu0 0.0
    %316 = vmatpush1.msra.mxu0 0.0
    %317 = vmatprep.subr.mxu0 0.0
    %318 = vmatpush1.msra.mxu0 0.0
    %319 = vmatprep.subr.mxu0 0.0
    %320 = vmatpush1.msra.mxu0 0.0
    %321 = vmatprep.subr.mxu0 0.0
    %322 = vmatpush1.msra.mxu0 0.0
    %323 = vmatprep.subr.mxu0 0.0
    %324 = vmatpush1.msra.mxu0 0.0
    %325 = vmatprep.subr.mxu0 0.0
    %326 = vmatpush1.msra.mxu0 0.0
    %327 = vmatprep.subr.mxu0 0.0
    %328 = vmatpush1.msra.mxu0 0.0
    %329 = vmatprep.subr.mxu0 0.0
    %330 = vmatpush1.msra.mxu0 0.0
    %331 = vmatprep.mubr.f32.mxu0 0.0
    %332 = vmatmul.mubr.f32.gmra.mrb[0].mxu0 %v185
    %v333 = vpop.f32.mrb[0].mxu0
    %v334 = vadd.f32 %v154, %v333
    %v335 = vpop.f32.mrb[0].mxu0
    %v336 = vadd.f32 %v158, %v335
    %337 = vmatprep.mubr.f32.mxu0 0.0
    %338 = vmatmul.mubr.f32.gmra.mrb[0].mxu0 %v188
    %v339 = vpop.f32.mrb[0].mxu0
    %v340 = vadd.f32 %v154, %v339
    %v341 = vpop.f32.mrb[0].mxu0
    %v342 = vadd.f32 %v158, %v341
    %343 = vdwg.mxu0
    %344 = vmatprep.subr.mxu0 %v130
    %345 = vmatpush1.msra.mxu0 %v129
    %346 = vmatprep.subr.mxu0 %v138
    %347 = vmatpush1.msra.mxu0 %v137
    %348 = vmatprep.subr.mxu0 0.0
    %349 = vmatpush1.msra.mxu0 0.0
    %350 = vmatprep.subr.mxu0 0.0
    %351 = vmatpush1.msra.mxu0 0.0
    %352 = vmatprep.subr.mxu0 0.0
    %353 = vmatpush1.msra.mxu0 0.0
    %354 = vmatprep.subr.mxu0 0.0
    %355 = vmatpush1.msra.mxu0 0.0
    %356 = vmatprep.subr.mxu0 0.0
    %357 = vmatpush1.msra.mxu0 0.0
    %358 = vmatprep.subr.mxu0 0.0
    %359 = vmatpush1.msra.mxu0 0.0
    %360 = vmatprep.subr.mxu0 0.0
    %361 = vmatpush1.msra.mxu0 0.0
    %362 = vmatprep.subr.mxu0 0.0
    %363 = vmatpush1.msra.mxu0 0.0
    %364 = vmatprep.subr.mxu0 0.0
    %365 = vmatpush1.msra.mxu0 0.0
    %366 = vmatprep.subr.mxu0 0.0
    %367 = vmatpush1.msra.mxu0 0.0
    %368 = vmatprep.subr.mxu0 0.0
    %369 = vmatpush1.msra.mxu0 0.0
    %370 = vmatprep.subr.mxu0 0.0
    %371 = vmatpush1.msra.mxu0 0.0
    %372 = vmatprep.subr.mxu0 0.0
    %373 = vmatpush1.msra.mxu0 0.0
    %374 = vmatprep.subr.mxu0 0.0
    %375 = vmatpush1.msra.mxu0 0.0
    %376 = vmatprep.subr.mxu0 0.0
    %377 = vmatpush1.msra.mxu0 0.0
    %378 = vmatprep.subr.mxu0 0.0
    %379 = vmatpush1.msra.mxu0 0.0
    %380 = vmatprep.subr.mxu0 0.0
    %381 = vmatpush1.msra.mxu0 0.0
    %382 = vmatprep.subr.mxu0 0.0
    %383 = vmatpush1.msra.mxu0 0.0
    %384 = vmatprep.subr.mxu0 0.0
    %385 = vmatpush1.msra.mxu0 0.0
    %386 = vmatprep.subr.mxu0 0.0
    %387 = vmatpush1.msra.mxu0 0.0
    %388 = vmatprep.subr.mxu0 0.0
    %389 = vmatpush1.msra.mxu0 0.0
    %390 = vmatprep.subr.mxu0 0.0
    %391 = vmatpush1.msra.mxu0 0.0
    %392 = vmatprep.subr.mxu0 0.0
    %393 = vmatpush1.msra.mxu0 0.0
    %394 = vmatprep.subr.mxu0 0.0
    %395 = vmatpush1.msra.mxu0 0.0
    %396 = vmatprep.subr.mxu0 0.0
    %397 = vmatpush1.msra.mxu0 0.0
    %398 = vmatprep.subr.mxu0 0.0
    %399 = vmatpush1.msra.mxu0 0.0
    %400 = vmatprep.subr.mxu0 0.0
    %401 = vmatpush1.msra.mxu0 0.0
    %402 = vmatprep.subr.mxu0 0.0
    %403 = vmatpush1.msra.mxu0 0.0
    %404 = vmatprep.subr.mxu0 0.0
    %405 = vmatpush1.msra.mxu0 0.0
    %406 = vmatprep.subr.mxu0 0.0
    %407 = vmatpush1.msra.mxu0 0.0
    %408 = vmatprep.mubr.f32.mxu0 0.0
    %409 = vmatmul.mubr.f32.gmra.mrb[0].mxu0 %v185
    %v410 = vpop.f32.mrb[0].mxu0
    %v411 = vadd.f32 %v162, %v410
    %v412 = vpop.f32.mrb[0].mxu0
    %v413 = vadd.f32 %v166, %v412
    %414 = vmatprep.mubr.f32.mxu0 0.0
    %415 = vmatmul.mubr.f32.gmra.mrb[0].mxu0 %v188
    %v416 = vpop.f32.mrb[0].mxu0
    %v417 = vadd.f32 %v162, %v416
    %v418 = vpop.f32.mrb[0].mxu0
    %v419 = vadd.f32 %v166, %v418
    %420 = vdwg.mxu0
    %421 = vmatprep.subr.mxu0 %v132
    %422 = vmatpush1.msra.mxu0 %v131
    %423 = vmatprep.subr.mxu0 %v140
    %424 = vmatpush1.msra.mxu0 %v139
    %425 = vmatprep.subr.mxu0 0.0
    %426 = vmatpush1.msra.mxu0 0.0
    %427 = vmatprep.subr.mxu0 0.0
    %428 = vmatpush1.msra.mxu0 0.0
    %429 = vmatprep.subr.mxu0 0.0
    %430 = vmatpush1.msra.mxu0 0.0
    %431 = vmatprep.subr.mxu0 0.0
    %432 = vmatpush1.msra.mxu0 0.0
    %433 = vmatprep.subr.mxu0 0.0
    %434 = vmatpush1.msra.mxu0 0.0
    %435 = vmatprep.subr.mxu0 0.0
    %436 = vmatpush1.msra.mxu0 0.0
    %437 = vmatprep.subr.mxu0 0.0
    %438 = vmatpush1.msra.mxu0 0.0
    %439 = vmatprep.subr.mxu0 0.0
    %440 = vmatpush1.msra.mxu0 0.0
    %441 = vmatprep.subr.mxu0 0.0
    %442 = vmatpush1.msra.mxu0 0.0
    %443 = vmatprep.subr.mxu0 0.0
    %444 = vmatpush1.msra.mxu0 0.0
    %445 = vmatprep.subr.mxu0 0.0
    %446 = vmatpush1.msra.mxu0 0.0
    %447 = vmatprep.subr.mxu0 0.0
    %448 = vmatpush1.msra.mxu0 0.0
    %449 = vmatprep.subr.mxu0 0.0
    %450 = vmatpush1.msra.mxu0 0.0
    %451 = vmatprep.subr.mxu0 0.0
    %452 = vmatpush1.msra.mxu0 0.0
    %453 = vmatprep.subr.mxu0 0.0
    %454 = vmatpush1.msra.mxu0 0.0
    %455 = vmatprep.subr.mxu0 0.0
    %456 = vmatpush1.msra.mxu0 0.0
    %457 = vmatprep.subr.mxu0 0.0
    %458 = vmatpush1.msra.mxu0 0.0
    %459 = vmatprep.subr.mxu0 0.0
    %460 = vmatpush1.msra.mxu0 0.0
    %461 = vmatprep.subr.mxu0 0.0
    %462 = vmatpush1.msra.mxu0 0.0
    %463 = vmatprep.subr.mxu0 0.0
    %464 = vmatpush1.msra.mxu0 0.0
    %465 = vmatprep.subr.mxu0 0.0
    %466 = vmatpush1.msra.mxu0 0.0
    %467 = vmatprep.subr.mxu0 0.0
    %468 = vmatpush1.msra.mxu0 0.0
    %469 = vmatprep.subr.mxu0 0.0
    %470 = vmatpush1.msra.mxu0 0.0
    %471 = vmatprep.subr.mxu0 0.0
    %472 = vmatpush1.msra.mxu0 0.0
    %473 = vmatprep.subr.mxu0 0.0
    %474 = vmatpush1.msra.mxu0 0.0
    %475 = vmatprep.subr.mxu0 0.0
    %476 = vmatpush1.msra.mxu0 0.0
    %477 = vmatprep.subr.mxu0 0.0
    %478 = vmatpush1.msra.mxu0 0.0
    %479 = vmatprep.subr.mxu0 0.0
    %480 = vmatpush1.msra.mxu0 0.0
    %481 = vmatprep.subr.mxu0 0.0
    %482 = vmatpush1.msra.mxu0 0.0
    %483 = vmatprep.subr.mxu0 0.0
    %484 = vmatpush1.msra.mxu0 0.0
    %485 = vmatprep.mubr.f32.mxu0 0.0
    %486 = vmatmul.mubr.f32.gmra.mrb[0].mxu0 %v185
    %v487 = vpop.f32.mrb[0].mxu0
    %v488 = vadd.f32 %v170, %v487
    %v489 = vpop.f32.mrb[0].mxu0
    %v490 = vadd.f32 %v174, %v489
    %491 = vmatprep.mubr.f32.mxu0 0.0
    %492 = vmatmul.mubr.f32.gmra.mrb[0].mxu0 %v188
    %v493 = vpop.f32.mrb[0].mxu0
    %v494 = vadd.f32 %v170, %v493
    %v495 = vpop.f32.mrb[0].mxu0
    %v496 = vadd.f32 %v174, %v495
    %497 = vdwg.mxu0
    %v498 = vld [vmem:[#allocation8] sm:$0xff]
    %v499 = vld [vmem:[#allocation8 + $0x8] sm:$0xff]
    %v500 = vld [vmem:[#allocation8 + $0x10] sm:$0xff]
    %v501 = vld [vmem:[#allocation8 + $0x18] sm:$0xff]
    %v502 = vld [vmem:[#allocation8 + $0x20] sm:$0xff]
    %v503 = vld [vmem:[#allocation8 + $0x28] sm:$0xff]
    %v504 = vld [vmem:[#allocation8 + $0x30] sm:$0xff]
    %v505 = vld [vmem:[#allocation8 + $0x38] sm:$0xff]
    %v506 = vld [vmem:[#allocation8 + $0x40] sm:$0xff]
    %v507 = vld [vmem:[#allocation8 + $0x48] sm:$0xff]
    %v508 = vld [vmem:[#allocation8 + $0x50] sm:$0xff]
    %v509 = vld [vmem:[#allocation8 + $0x58] sm:$0xff]
    %v510 = vld [vmem:[#allocation8 + $0x60] sm:$0xff]
    %v511 = vld [vmem:[#allocation8 + $0x68] sm:$0xff]
    %v512 = vld [vmem:[#allocation8 + $0x70] sm:$0xff]
    %v513 = vld [vmem:[#allocation8 + $0x78] sm:$0xff]
    %v514 = vld [vmem:[#allocation8 + $0x80] sm:$0xff]
    %v515 = vld [vmem:[#allocation8 + $0x88] sm:$0xff]
    %v516 = vld [vmem:[#allocation8 + $0x90] sm:$0xff]
    %v517 = vld [vmem:[#allocation8 + $0x98] sm:$0xff]
    %v518 = vld [vmem:[#allocation8 + $0xa0] sm:$0xff]
    %v519 = vld [vmem:[#allocation8 + $0xa8] sm:$0xff]
    %v520 = vld [vmem:[#allocation8 + $0xb0] sm:$0xff]
    %v521 = vld [vmem:[#allocation8 + $0xb8] sm:$0xff]
    %v522 = vld [vmem:[#allocation8 + $0xc0] sm:$0xff]
    %v523 = vld [vmem:[#allocation8 + $0xc8] sm:$0xff]
    %v524 = vld [vmem:[#allocation8 + $0xd0] sm:$0xff]
    %v525 = vld [vmem:[#allocation8 + $0xd8] sm:$0xff]
    %v526 = vld [vmem:[#allocation8 + $0xe0] sm:$0xff]
    %v527 = vld [vmem:[#allocation8 + $0xe8] sm:$0xff]
    %v528 = vld [vmem:[#allocation8 + $0xf0] sm:$0xff]
    %v529 = vld [vmem:[#allocation8 + $0xf8] sm:$0xff]
    %v530 = vld [vmem:[#allocation8 + $0x100] sm:$0xff]
    %v531 = vld [vmem:[#allocation8 + $0x108] sm:$0xff]
    %v532 = vld [vmem:[#allocation8 + $0x110] sm:$0xff]
    %v533 = vld [vmem:[#allocation8 + $0x118] sm:$0xff]
    %v534 = vld [vmem:[#allocation8 + $0x120] sm:$0xff]
    %v535 = vld [vmem:[#allocation8 + $0x128] sm:$0xff]
    %v536 = vld [vmem:[#allocation8 + $0x130] sm:$0xff]
    %v537 = vld [vmem:[#allocation8 + $0x138] sm:$0xff]
    %v538 = vld [vmem:[#allocation8 + $0x140] sm:$0xff]
    %v539 = vld [vmem:[#allocation8 + $0x148] sm:$0xff]
    %v540 = vld [vmem:[#allocation8 + $0x150] sm:$0xff]
    %v541 = vld [vmem:[#allocation8 + $0x158] sm:$0xff]
    %v542 = vld [vmem:[#allocation8 + $0x160] sm:$0xff]
    %v543 = vld [vmem:[#allocation8 + $0x168] sm:$0xff]
    %v544 = vld [vmem:[#allocation8 + $0x170] sm:$0xff]
    %v545 = vld [vmem:[#allocation8 + $0x178] sm:$0xff]
    %v546 = vld [vmem:[#allocation8 + $0x180] sm:$0xff]
    %v547 = vld [vmem:[#allocation8 + $0x188] sm:$0xff]
    %v548 = vld [vmem:[#allocation8 + $0x190] sm:$0xff]
    %v549 = vld [vmem:[#allocation8 + $0x198] sm:$0xff]
    %v550 = vld [vmem:[#allocation8 + $0x1a0] sm:$0xff]
    %v551 = vld [vmem:[#allocation8 + $0x1a8] sm:$0xff]
    %v552 = vld [vmem:[#allocation8 + $0x1b0] sm:$0xff]
    %v553 = vld [vmem:[#allocation8 + $0x1b8] sm:$0xff]
    %v554 = vld [vmem:[#allocation8 + $0x1c0] sm:$0xff]
    %v555 = vld [vmem:[#allocation8 + $0x1c8] sm:$0xff]
    %v556 = vld [vmem:[#allocation8 + $0x1d0] sm:$0xff]
    %v557 = vld [vmem:[#allocation8 + $0x1d8] sm:$0xff]
    %v558 = vld [vmem:[#allocation8 + $0x1e0] sm:$0xff]
    %v559 = vld [vmem:[#allocation8 + $0x1e8] sm:$0xff]
    %v560 = vld [vmem:[#allocation8 + $0x1f0] sm:$0xff]
    %v561 = vld [vmem:[#allocation8 + $0x1f8] sm:$0xff]
    %v562 = vld [vmem:[#allocation10] sm:$0xff]
    %v563 = vld [vmem:[#allocation10 + $0x8] sm:$0xff]
    %v564 = vld [vmem:[#allocation10 + $0x10] sm:$0xff]
    %v565 = vld [vmem:[#allocation10 + $0x18] sm:$0xff]
    %v566 = vld [vmem:[#allocation10 + $0x20] sm:$0xff]
    %v567 = vld [vmem:[#allocation10 + $0x28] sm:$0xff]
    %v568 = vld [vmem:[#allocation10 + $0x30] sm:$0xff]
    %v569 = vld [vmem:[#allocation10 + $0x38] sm:$0xff]
    %v570 = vld [vmem:[#allocation10 + $0x40] sm:$0xff]
    %v571 = vld [vmem:[#allocation10 + $0x48] sm:$0xff]
    %v572 = vld [vmem:[#allocation10 + $0x50] sm:$0xff]
    %v573 = vld [vmem:[#allocation10 + $0x58] sm:$0xff]
    %v574 = vld [vmem:[#allocation10 + $0x60] sm:$0xff]
    %v575 = vld [vmem:[#allocation10 + $0x68] sm:$0xff]
    %v576 = vld [vmem:[#allocation10 + $0x70] sm:$0xff]
    %v577 = vld [vmem:[#allocation10 + $0x78] sm:$0xff]
    %v578 = vld [vmem:[#allocation10 + $0x80] sm:$0xff]
    %v579 = vld [vmem:[#allocation10 + $0x88] sm:$0xff]
    %v580 = vld [vmem:[#allocation10 + $0x90] sm:$0xff]
    %v581 = vld [vmem:[#allocation10 + $0x98] sm:$0xff]
    %v582 = vld [vmem:[#allocation10 + $0xa0] sm:$0xff]
    %v583 = vld [vmem:[#allocation10 + $0xa8] sm:$0xff]
    %v584 = vld [vmem:[#allocation10 + $0xb0] sm:$0xff]
    %v585 = vld [vmem:[#allocation10 + $0xb8] sm:$0xff]
    %v586 = vld [vmem:[#allocation10 + $0xc0] sm:$0xff]
    %v587 = vld [vmem:[#allocation10 + $0xc8] sm:$0xff]
    %v588 = vld [vmem:[#allocation10 + $0xd0] sm:$0xff]
    %v589 = vld [vmem:[#allocation10 + $0xd8] sm:$0xff]
    %v590 = vld [vmem:[#allocation10 + $0xe0] sm:$0xff]
    %v591 = vld [vmem:[#allocation10 + $0xe8] sm:$0xff]
    %v592 = vld [vmem:[#allocation10 + $0xf0] sm:$0xff]
    %v593 = vld [vmem:[#allocation10 + $0xf8] sm:$0xff]
    %v594 = vld [vmem:[#allocation10 + $0x100] sm:$0xff]
    %v595 = vld [vmem:[#allocation10 + $0x108] sm:$0xff]
    %v596 = vld [vmem:[#allocation10 + $0x110] sm:$0xff]
    %v597 = vld [vmem:[#allocation10 + $0x118] sm:$0xff]
    %v598 = vld [vmem:[#allocation10 + $0x120] sm:$0xff]
    %v599 = vld [vmem:[#allocation10 + $0x128] sm:$0xff]
    %v600 = vld [vmem:[#allocation10 + $0x130] sm:$0xff]
    %v601 = vld [vmem:[#allocation10 + $0x138] sm:$0xff]
    %v602 = vld [vmem:[#allocation10 + $0x140] sm:$0xff]
    %v603 = vld [vmem:[#allocation10 + $0x148] sm:$0xff]
    %v604 = vld [vmem:[#allocation10 + $0x150] sm:$0xff]
    %v605 = vld [vmem:[#allocation10 + $0x158] sm:$0xff]
    %v606 = vld [vmem:[#allocation10 + $0x160] sm:$0xff]
    %v607 = vld [vmem:[#allocation10 + $0x168] sm:$0xff]
    %v608 = vld [vmem:[#allocation10 + $0x170] sm:$0xff]
    %v609 = vld [vmem:[#allocation10 + $0x178] sm:$0xff]
    %v610 = vld [vmem:[#allocation10 + $0x180] sm:$0xff]
    %v611 = vld [vmem:[#allocation10 + $0x188] sm:$0xff]
    %v612 = vld [vmem:[#allocation10 + $0x190] sm:$0xff]
    %v613 = vld [vmem:[#allocation10 + $0x198] sm:$0xff]
    %v614 = vld [vmem:[#allocation10 + $0x1a0] sm:$0xff]
    %v615 = vld [vmem:[#allocation10 + $0x1a8] sm:$0xff]
    %v616 = vld [vmem:[#allocation10 + $0x1b0] sm:$0xff]
    %v617 = vld [vmem:[#allocation10 + $0x1b8] sm:$0xff]
    %v618 = vld [vmem:[#allocation10 + $0x1c0] sm:$0xff]
    %v619 = vld [vmem:[#allocation10 + $0x1c8] sm:$0xff]
    %v620 = vld [vmem:[#allocation10 + $0x1d0] sm:$0xff]
    %v621 = vld [vmem:[#allocation10 + $0x1d8] sm:$0xff]
    %v622 = vld [vmem:[#allocation10 + $0x1e0] sm:$0xff]
    %v623 = vld [vmem:[#allocation10 + $0x1e8] sm:$0xff]
    %v624 = vld [vmem:[#allocation10 + $0x1f0] sm:$0xff]
    %v625 = vld [vmem:[#allocation10 + $0x1f8] sm:$0xff]
    %626 = vmatprep.subr.mxu0 %v499
    %627 = vmatpush1.msra.mxu0 %v498
    %628 = vmatprep.subr.mxu0 %v503
    %629 = vmatpush1.msra.mxu0 %v502
    %630 = vmatprep.subr.mxu0 %v507
    %631 = vmatpush1.msra.mxu0 %v506
    %632 = vmatprep.subr.mxu0 %v511
    %633 = vmatpush1.msra.mxu0 %v510
    %634 = vmatprep.subr.mxu0 %v515
    %635 = vmatpush1.msra.mxu0 %v514
    %636 = vmatprep.subr.mxu0 %v519
    %637 = vmatpush1.msra.mxu0 %v518
    %638 = vmatprep.subr.mxu0 %v523
    %639 = vmatpush1.msra.mxu0 %v522
    %640 = vmatprep.subr.mxu0 %v527
    %641 = vmatpush1.msra.mxu0 %v526
    %642 = vmatprep.subr.mxu0 %v531
    %643 = vmatpush1.msra.mxu0 %v530
    %644 = vmatprep.subr.mxu0 %v535
    %645 = vmatpush1.msra.mxu0 %v534
    %646 = vmatprep.subr.mxu0 %v539
    %647 = vmatpush1.msra.mxu0 %v538
    %648 = vmatprep.subr.mxu0 %v543
    %649 = vmatpush1.msra.mxu0 %v542
    %650 = vmatprep.subr.mxu0 %v547
    %651 = vmatpush1.msra.mxu0 %v546
    %652 = vmatprep.subr.mxu0 %v551
    %653 = vmatpush1.msra.mxu0 %v550
    %654 = vmatprep.subr.mxu0 %v555
    %655 = vmatpush1.msra.mxu0 %v554
    %656 = vmatprep.subr.mxu0 %v559
    %657 = vmatpush1.msra.mxu0 %v558
    %658 = vmatprep.subr.mxu0 0.0
    %659 = vmatpush1.msra.mxu0 0.0
    %660 = vmatprep.subr.mxu0 0.0
    %661 = vmatpush1.msra.mxu0 0.0
    %662 = vmatprep.subr.mxu0 0.0
    %663 = vmatpush1.msra.mxu0 0.0
    %664 = vmatprep.subr.mxu0 0.0
    %665 = vmatpush1.msra.mxu0 0.0
    %666 = vmatprep.subr.mxu0 0.0
    %667 = vmatpush1.msra.mxu0 0.0
    %668 = vmatprep.subr.mxu0 0.0
    %669 = vmatpush1.msra.mxu0 0.0
    %670 = vmatprep.subr.mxu0 0.0
    %671 = vmatpush1.msra.mxu0 0.0
    %672 = vmatprep.subr.mxu0 0.0
    %673 = vmatpush1.msra.mxu0 0.0
    %674 = vmatprep.subr.mxu0 0.0
    %675 = vmatpush1.msra.mxu0 0.0
    %676 = vmatprep.subr.mxu0 0.0
    %677 = vmatpush1.msra.mxu0 0.0
    %678 = vmatprep.subr.mxu0 0.0
    %679 = vmatpush1.msra.mxu0 0.0
    %680 = vmatprep.subr.mxu0 0.0
    %681 = vmatpush1.msra.mxu0 0.0
    %682 = vmatprep.subr.mxu0 0.0
    %683 = vmatpush1.msra.mxu0 0.0
    %684 = vmatprep.subr.mxu0 0.0
    %685 = vmatpush1.msra.mxu0 0.0
    %686 = vmatprep.subr.mxu0 0.0
    %687 = vmatpush1.msra.mxu0 0.0
    %688 = vmatprep.subr.mxu0 0.0
    %689 = vmatpush1.msra.mxu0 0.0
    %690 = vmatprep.mubr.f32.mxu0 0.0
    %691 = vmatmul.mubr.f32.gmra.mrb[0].mxu0 0.0
    %v692 = vpop.f32.mrb[0].mxu0
    %v693 = vadd.f32 0.0, %v692
    %v694 = vpop.f32.mrb[0].mxu0
    %v695 = vadd.f32 0.0, %v694
    %696 = vdwg.mxu0
    %697 = vmatprep.subr.mxu0 %v501
    %698 = vmatpush1.msra.mxu0 %v500
    %699 = vmatprep.subr.mxu0 %v505
    %700 = vmatpush1.msra.mxu0 %v504
    %701 = vmatprep.subr.mxu0 %v509
    %702 = vmatpush1.msra.mxu0 %v508
    %703 = vmatprep.subr.mxu0 %v513
    %704 = vmatpush1.msra.mxu0 %v512
    %705 = vmatprep.subr.mxu0 %v517
    %706 = vmatpush1.msra.mxu0 %v516
    %707 = vmatprep.subr.mxu0 %v521
    %708 = vmatpush1.msra.mxu0 %v520
    %709 = vmatprep.subr.mxu0 %v525
    %710 = vmatpush1.msra.mxu0 %v524
    %711 = vmatprep.subr.mxu0 %v529
    %712 = vmatpush1.msra.mxu0 %v528
    %713 = vmatprep.subr.mxu0 %v533
    %714 = vmatpush1.msra.mxu0 %v532
    %715 = vmatprep.subr.mxu0 %v537
    %716 = vmatpush1.msra.mxu0 %v536
    %717 = vmatprep.subr.mxu0 %v541
    %718 = vmatpush1.msra.mxu0 %v540
    %719 = vmatprep.subr.mxu0 %v545
    %720 = vmatpush1.msra.mxu0 %v544
    %721 = vmatprep.subr.mxu0 %v549
    %722 = vmatpush1.msra.mxu0 %v548
    %723 = vmatprep.subr.mxu0 %v553
    %724 = vmatpush1.msra.mxu0 %v552
    %725 = vmatprep.subr.mxu0 %v557
    %726 = vmatpush1.msra.mxu0 %v556
    %727 = vmatprep.subr.mxu0 %v561
    %728 = vmatpush1.msra.mxu0 %v560
    %729 = vmatprep.subr.mxu0 0.0
    %730 = vmatpush1.msra.mxu0 0.0
    %731 = vmatprep.subr.mxu0 0.0
    %732 = vmatpush1.msra.mxu0 0.0
    %733 = vmatprep.subr.mxu0 0.0
    %734 = vmatpush1.msra.mxu0 0.0
    %735 = vmatprep.subr.mxu0 0.0
    %736 = vmatpush1.msra.mxu0 0.0
    %737 = vmatprep.subr.mxu0 0.0
    %738 = vmatpush1.msra.mxu0 0.0
    %739 = vmatprep.subr.mxu0 0.0
    %740 = vmatpush1.msra.mxu0 0.0
    %741 = vmatprep.subr.mxu0 0.0
    %742 = vmatpush1.msra.mxu0 0.0
    %743 = vmatprep.subr.mxu0 0.0
    %744 = vmatpush1.msra.mxu0 0.0
    %745 = vmatprep.subr.mxu0 0.0
    %746 = vmatpush1.msra.mxu0 0.0
    %747 = vmatprep.subr.mxu0 0.0
    %748 = vmatpush1.msra.mxu0 0.0
    %749 = vmatprep.subr.mxu0 0.0
    %750 = vmatpush1.msra.mxu0 0.0
    %751 = vmatprep.subr.mxu0 0.0
    %752 = vmatpush1.msra.mxu0 0.0
    %753 = vmatprep.subr.mxu0 0.0
    %754 = vmatpush1.msra.mxu0 0.0
    %755 = vmatprep.subr.mxu0 0.0
    %756 = vmatpush1.msra.mxu0 0.0
    %757 = vmatprep.subr.mxu0 0.0
    %758 = vmatpush1.msra.mxu0 0.0
    %759 = vmatprep.subr.mxu0 0.0
    %760 = vmatpush1.msra.mxu0 0.0
    %761 = vmatprep.mubr.f32.mxu0 0.0
    %762 = vmatmul.mubr.f32.gmra.mrb[0].mxu0 0.0
    %v763 = vpop.f32.mrb[0].mxu0
    %v764 = vadd.f32 0.0, %v763
    %v765 = vpop.f32.mrb[0].mxu0
    %v766 = vadd.f32 0.0, %v765
    %767 = vdwg.mxu0
    %v768 = vadd.f32 %v257, %v693
    %v769 = vadd.f32 %v259, %v695
    %v770 = vadd.f32 %v334, %v764
    %v771 = vadd.f32 %v336, %v766
    %v772 = vxor.u32 %v768, 2147483648
    %v773 = vmul.f32 %v772, 1.442695
    %v774 = vpow.pop %v773
    %v775 = vadd.f32 %v774, 1.0
    %v776 = vrcp.pop %v775
    %v777 = vmul.f32 1.0, %v776
    %v778 = vxor.u32 %v769, 2147483648
    %v779 = vmul.f32 %v778, 1.442695
    %v780 = vpow.pop %v779
    %v781 = vadd.f32 %v780, 1.0
    %v782 = vrcp.pop %v781
    %v783 = vmul.f32 1.0, %v782
    %v784 = vtanh.pop %v770
    %v785 = vxor.u32 %v771, 2147483648
    %v786 = vmul.f32 %v785, 1.442695
    %v787 = vpow.pop %v786
    %v788 = vadd.f32 %v787, 1.0
    %v789 = vrcp.pop %v788
    %v790 = vmul.f32 1.0, %v789
    %v791 = vmul.f32 %v783, 0.0
    %v792 = vmul.f32 %v777, %v784
    %v793 = vadd.f32 %v791, %v792
    %v794 = vtanh.pop %v793
    %v795 = vmul.f32 %v790, %v794
    %796 = vmatprep.subr.mxu0 %v563
    %797 = vmatpush1.msra.mxu0 %v562
    %798 = vmatprep.subr.mxu0 %v567
    %799 = vmatpush1.msra.mxu0 %v566
    %800 = vmatprep.subr.mxu0 %v571
    %801 = vmatpush1.msra.mxu0 %v570
    %802 = vmatprep.subr.mxu0 %v575
    %803 = vmatpush1.msra.mxu0 %v574
    %804 = vmatprep.subr.mxu0 %v579
    %805 = vmatpush1.msra.mxu0 %v578
    %806 = vmatprep.subr.mxu0 %v583
    %807 = vmatpush1.msra.mxu0 %v582
    %808 = vmatprep.subr.mxu0 %v587
    %809 = vmatpush1.msra.mxu0 %v586
    %810 = vmatprep.subr.mxu0 %v591
    %811 = vmatpush1.msra.mxu0 %v590
    %812 = vmatprep.subr.mxu0 %v595
    %813 = vmatpush1.msra.mxu0 %v594
    %814 = vmatprep.subr.mxu0 %v599
    %815 = vmatpush1.msra.mxu0 %v598
    %816 = vmatprep.subr.mxu0 %v603
    %817 = vmatpush1.msra.mxu0 %v602
    %818 = vmatprep.subr.mxu0 %v607
    %819 = vmatpush1.msra.mxu0 %v606
    %820 = vmatprep.subr.mxu0 %v611
    %821 = vmatpush1.msra.mxu0 %v610
    %822 = vmatprep.subr.mxu0 %v615
    %823 = vmatpush1.msra.mxu0 %v614
    %824 = vmatprep.subr.mxu0 %v619
    %825 = vmatpush1.msra.mxu0 %v618
    %826 = vmatprep.subr.mxu0 %v623
    %827 = vmatpush1.msra.mxu0 %v622
    %828 = vmatprep.subr.mxu0 0.0
    %829 = vmatpush1.msra.mxu0 0.0
    %830 = vmatprep.subr.mxu0 0.0
    %831 = vmatpush1.msra.mxu0 0.0
    %832 = vmatprep.subr.mxu0 0.0
    %833 = vmatpush1.msra.mxu0 0.0
    %834 = vmatprep.subr.mxu0 0.0
    %835 = vmatpush1.msra.mxu0 0.0
    %836 = vmatprep.subr.mxu0 0.0
    %837 = vmatpush1.msra.mxu0 0.0
    %838 = vmatprep.subr.mxu0 0.0
    %839 = vmatpush1.msra.mxu0 0.0
    %840 = vmatprep.subr.mxu0 0.0
    %841 = vmatpush1.msra.mxu0 0.0
    %842 = vmatprep.subr.mxu0 0.0
    %843 = vmatpush1.msra.mxu0 0.0
    %844 = vmatprep.subr.mxu0 0.0
    %845 = vmatpush1.msra.mxu0 0.0
    %846 = vmatprep.subr.mxu0 0.0
    %847 = vmatpush1.msra.mxu0 0.0
    %848 = vmatprep.subr.mxu0 0.0
    %849 = vmatpush1.msra.mxu0 0.0
    %850 = vmatprep.subr.mxu0 0.0
    %851 = vmatpush1.msra.mxu0 0.0
    %852 = vmatprep.subr.mxu0 0.0
    %853 = vmatpush1.msra.mxu0 0.0
    %854 = vmatprep.subr.mxu0 0.0
    %855 = vmatpush1.msra.mxu0 0.0
    %856 = vmatprep.subr.mxu0 0.0
    %857 = vmatpush1.msra.mxu0 0.0
    %858 = vmatprep.subr.mxu0 0.0
    %859 = vmatpush1.msra.mxu0 0.0
    %860 = vmatprep.mubr.f32.mxu0 0.0
    %861 = vmatmul.mubr.f32.gmra.mrb[0].mxu0 0.0
    %v862 = vpop.f32.mrb[0].mxu0
    %v863 = vadd.f32 0.0, %v862
    %v864 = vpop.f32.mrb[0].mxu0
    %v865 = vadd.f32 0.0, %v864
    %866 = vdwg.mxu0
    %867 = vmatprep.subr.mxu0 %v565
    %868 = vmatpush1.msra.mxu0 %v564
    %869 = vmatprep.subr.mxu0 %v569
    %870 = vmatpush1.msra.mxu0 %v568
    %871 = vmatprep.subr.mxu0 %v573
    %872 = vmatpush1.msra.mxu0 %v572
    %873 = vmatprep.subr.mxu0 %v577
    %874 = vmatpush1.msra.mxu0 %v576
    %875 = vmatprep.subr.mxu0 %v581
    %876 = vmatpush1.msra.mxu0 %v580
    %877 = vmatprep.subr.mxu0 %v585
    %878 = vmatpush1.msra.mxu0 %v584
    %879 = vmatprep.subr.mxu0 %v589
    %880 = vmatpush1.msra.mxu0 %v588
    %881 = vmatprep.subr.mxu0 %v593
    %882 = vmatpush1.msra.mxu0 %v592
    %883 = vmatprep.subr.mxu0 %v597
    %884 = vmatpush1.msra.mxu0 %v596
    %885 = vmatprep.subr.mxu0 %v601
    %886 = vmatpush1.msra.mxu0 %v600
    %887 = vmatprep.subr.mxu0 %v605
    %888 = vmatpush1.msra.mxu0 %v604
    %889 = vmatprep.subr.mxu0 %v609
    %890 = vmatpush1.msra.mxu0 %v608
    %891 = vmatprep.subr.mxu0 %v613
    %892 = vmatpush1.msra.mxu0 %v612
    %893 = vmatprep.subr.mxu0 %v617
    %894 = vmatpush1.msra.mxu0 %v616
    %895 = vmatprep.subr.mxu0 %v621
    %896 = vmatpush1.msra.mxu0 %v620
    %897 = vmatprep.subr.mxu0 %v625
    %898 = vmatpush1.msra.mxu0 %v624
    %899 = vmatprep.subr.mxu0 0.0
    %900 = vmatpush1.msra.mxu0 0.0
    %901 = vmatprep.subr.mxu0 0.0
    %902 = vmatpush1.msra.mxu0 0.0
    %903 = vmatprep.subr.mxu0 0.0
    %904 = vmatpush1.msra.mxu0 0.0
    %905 = vmatprep.subr.mxu0 0.0
    %906 = vmatpush1.msra.mxu0 0.0
    %907 = vmatprep.subr.mxu0 0.0
    %908 = vmatpush1.msra.mxu0 0.0
    %909 = vmatprep.subr.mxu0 0.0
    %910 = vmatpush1.msra.mxu0 0.0
    %911 = vmatprep.subr.mxu0 0.0
    %912 = vmatpush1.msra.mxu0 0.0
    %913 = vmatprep.subr.mxu0 0.0
    %914 = vmatpush1.msra.mxu0 0.0
    %915 = vmatprep.subr.mxu0 0.0
    %916 = vmatpush1.msra.mxu0 0.0
    %917 = vmatprep.subr.mxu0 0.0
    %918 = vmatpush1.msra.mxu0 0.0
    %919 = vmatprep.subr.mxu0 0.0
    %920 = vmatpush1.msra.mxu0 0.0
    %921 = vmatprep.subr.mxu0 0.0
    %922 = vmatpush1.msra.mxu0 0.0
    %923 = vmatprep.subr.mxu0 0.0
    %924 = vmatpush1.msra.mxu0 0.0
    %925 = vmatprep.subr.mxu0 0.0
    %926 = vmatpush1.msra.mxu0 0.0
    %927 = vmatprep.subr.mxu0 0.0
    %928 = vmatpush1.msra.mxu0 0.0
    %929 = vmatprep.subr.mxu0 0.0
    %930 = vmatpush1.msra.mxu0 0.0
    %931 = vmatprep.mubr.f32.mxu0 0.0
    %932 = vmatmul.mubr.f32.gmra.mrb[0].mxu0 0.0
    %v933 = vpop.f32.mrb[0].mxu0
    %v934 = vadd.f32 0.0, %v933
    %v935 = vpop.f32.mrb[0].mxu0
    %v936 = vadd.f32 0.0, %v935
    %937 = vdwg.mxu0
    %v942 = vrot.slane %v863, 2
    %v943 = vrot.slane %v865, 2
    %v944 = vrot.slane %v934, 2
    %v945 = vrot.slane %v936, 2
    %v950 = vadd.f32 %v417, %v942
    %v951 = vadd.f32 %v419, %v943
    %v952 = vadd.f32 %v494, %v944
    %v953 = vadd.f32 %v496, %v945
    %v954 = vxor.u32 %v950, 2147483648
    %v955 = vmul.f32 %v954, 1.442695
    %v956 = vpow.pop %v955
    %v957 = vadd.f32 %v956, 1.0
    %v958 = vrcp.pop %v957
    %v959 = vmul.f32 1.0, %v958
    %v960 = vxor.u32 %v951, 2147483648
    %v961 = vmul.f32 %v960, 1.442695
    %v962 = vpow.pop %v961
    %v963 = vadd.f32 %v962, 1.0
    %v964 = vrcp.pop %v963
    %v965 = vmul.f32 1.0, %v964
    %v966 = vtanh.pop %v952
    %v967 = vxor.u32 %v953, 2147483648
    %v968 = vmul.f32 %v967, 1.442695
    %v969 = vpow.pop %v968
    %v970 = vadd.f32 %v969, 1.0
    %v971 = vrcp.pop %v970
    %v972 = vmul.f32 1.0, %v971
    %v973 = vmul.f32 %v965, 0.0
    %v974 = vmul.f32 %v959, %v966
    %v975 = vadd.f32 %v973, %v974
    %v976 = vtanh.pop %v975
    %v977 = vmul.f32 %v972, %v976
    %978 = vmatprep.subr.mxu0 %v499
    %979 = vmatpush1.msra.mxu0 %v498
    %980 = vmatprep.subr.mxu0 %v503
    %981 = vmatpush1.msra.mxu0 %v502
    %982 = vmatprep.subr.mxu0 %v507
    %983 = vmatpush1.msra.mxu0 %v506
    %984 = vmatprep.subr.mxu0 %v511
    %985 = vmatpush1.msra.mxu0 %v510
    %986 = vmatprep.subr.mxu0 %v515
    %987 = vmatpush1.msra.mxu0 %v514
    %988 = vmatprep.subr.mxu0 %v519
    %989 = vmatpush1.msra.mxu0 %v518
    %990 = vmatprep.subr.mxu0 %v523
    %991 = vmatpush1.msra.mxu0 %v522
    %992 = vmatprep.subr.mxu0 %v527
    %993 = vmatpush1.msra.mxu0 %v526
    %994 = vmatprep.subr.mxu0 %v531
    %995 = vmatpush1.msra.mxu0 %v530
    %996 = vmatprep.subr.mxu0 %v535
    %997 = vmatpush1.msra.mxu0 %v534
    %998 = vmatprep.subr.mxu0 %v539
    %999 = vmatpush1.msra.mxu0 %v538
    %1000 = vmatprep.subr.mxu0 %v543
    %1001 = vmatpush1.msra.mxu0 %v542
    %1002 = vmatprep.subr.mxu0 %v547
    %1003 = vmatpush1.msra.mxu0 %v546
    %1004 = vmatprep.subr.mxu0 %v551
    %1005 = vmatpush1.msra.mxu0 %v550
    %1006 = vmatprep.subr.mxu0 %v555
    %1007 = vmatpush1.msra.mxu0 %v554
    %1008 = vmatprep.subr.mxu0 %v559
    %1009 = vmatpush1.msra.mxu0 %v558
    %1010 = vmatprep.subr.mxu0 0.0
    %1011 = vmatpush1.msra.mxu0 0.0
    %1012 = vmatprep.subr.mxu0 0.0
    %1013 = vmatpush1.msra.mxu0 0.0
    %1014 = vmatprep.subr.mxu0 0.0
    %1015 = vmatpush1.msra.mxu0 0.0
    %1016 = vmatprep.subr.mxu0 0.0
    %1017 = vmatpush1.msra.mxu0 0.0
    %1018 = vmatprep.subr.mxu0 0.0
    %1019 = vmatpush1.msra.mxu0 0.0
    %1020 = vmatprep.subr.mxu0 0.0
    %1021 = vmatpush1.msra.mxu0 0.0
    %1022 = vmatprep.subr.mxu0 0.0
    %1023 = vmatpush1.msra.mxu0 0.0
    %1024 = vmatprep.subr.mxu0 0.0
    %1025 = vmatpush1.msra.mxu0 0.0
    %1026 = vmatprep.subr.mxu0 0.0
    %1027 = vmatpush1.msra.mxu0 0.0
    %1028 = vmatprep.subr.mxu0 0.0
    %1029 = vmatpush1.msra.mxu0 0.0
    %1030 = vmatprep.subr.mxu0 0.0
    %1031 = vmatpush1.msra.mxu0 0.0
    %1032 = vmatprep.subr.mxu0 0.0
    %1033 = vmatpush1.msra.mxu0 0.0
    %1034 = vmatprep.subr.mxu0 0.0
    %1035 = vmatpush1.msra.mxu0 0.0
    %1036 = vmatprep.subr.mxu0 0.0
    %1037 = vmatpush1.msra.mxu0 0.0
    %1038 = vmatprep.subr.mxu0 0.0
    %1039 = vmatpush1.msra.mxu0 0.0
    %1040 = vmatprep.subr.mxu0 0.0
    %1041 = vmatpush1.msra.mxu0 0.0
    %1042 = vmatprep.mubr.f32.mxu0 0.0
    %1043 = vmatmul.mubr.f32.gmra.mrb[0].mxu0 %v795
    %v1044 = vpop.f32.mrb[0].mxu0
    %v1045 = vadd.f32 0.0, %v1044
    %v1046 = vpop.f32.mrb[0].mxu0
    %v1047 = vadd.f32 0.0, %v1046
    %1048 = vdwg.mxu0
    %1049 = vmatprep.subr.mxu0 %v501
    %1050 = vmatpush1.msra.mxu0 %v500
    %1051 = vmatprep.subr.mxu0 %v505
    %1052 = vmatpush1.msra.mxu0 %v504
    %1053 = vmatprep.subr.mxu0 %v509
    %1054 = vmatpush1.msra.mxu0 %v508
    %1055 = vmatprep.subr.mxu0 %v513
    %1056 = vmatpush1.msra.mxu0 %v512
    %1057 = vmatprep.subr.mxu0 %v517
    %1058 = vmatpush1.msra.mxu0 %v516
    %1059 = vmatprep.subr.mxu0 %v521
    %1060 = vmatpush1.msra.mxu0 %v520
    %1061 = vmatprep.subr.mxu0 %v525
    %1062 = vmatpush1.msra.mxu0 %v524
    %1063 = vmatprep.subr.mxu0 %v529
    %1064 = vmatpush1.msra.mxu0 %v528
    %1065 = vmatprep.subr.mxu0 %v533
    %1066 = vmatpush1.msra.mxu0 %v532
    %1067 = vmatprep.subr.mxu0 %v537
    %1068 = vmatpush1.msra.mxu0 %v536
    %1069 = vmatprep.subr.mxu0 %v541
    %1070 = vmatpush1.msra.mxu0 %v540
    %1071 = vmatprep.subr.mxu0 %v545
    %1072 = vmatpush1.msra.mxu0 %v544
    %1073 = vmatprep.subr.mxu0 %v549
    %1074 = vmatpush1.msra.mxu0 %v548
    %1075 = vmatprep.subr.mxu0 %v553
    %1076 = vmatpush1.msra.mxu0 %v552
    %1077 = vmatprep.subr.mxu0 %v557
    %1078 = vmatpush1.msra.mxu0 %v556
    %1079 = vmatprep.subr.mxu0 %v561
    %1080 = vmatpush1.msra.mxu0 %v560
    %1081 = vmatprep.subr.mxu0 0.0
    %1082 = vmatpush1.msra.mxu0 0.0
    %1083 = vmatprep.subr.mxu0 0.0
    %1084 = vmatpush1.msra.mxu0 0.0
    %1085 = vmatprep.subr.mxu0 0.0
    %1086 = vmatpush1.msra.mxu0 0.0
    %1087 = vmatprep.subr.mxu0 0.0
    %1088 = vmatpush1.msra.mxu0 0.0
    %1089 = vmatprep.subr.mxu0 0.0
    %1090 = vmatpush1.msra.mxu0 0.0
    %1091 = vmatprep.subr.mxu0 0.0
    %1092 = vmatpush1.msra.mxu0 0.0
    %1093 = vmatprep.subr.mxu0 0.0
    %1094 = vmatpush1.msra.mxu0 0.0
    %1095 = vmatprep.subr.mxu0 0.0
    %1096 = vmatpush1.msra.mxu0 0.0
    %1097 = vmatprep.subr.mxu0 0.0
    %1098 = vmatpush1.msra.mxu0 0.0
    %1099 = vmatprep.subr.mxu0 0.0
    %1100 = vmatpush1.msra.mxu0 0.0
    %1101 = vmatprep.subr.mxu0 0.0
    %1102 = vmatpush1.msra.mxu0 0.0
    %1103 = vmatprep.subr.mxu0 0.0
    %1104 = vmatpush1.msra.mxu0 0.0
    %1105 = vmatprep.subr.mxu0 0.0
    %1106 = vmatpush1.msra.mxu0 0.0
    %1107 = vmatprep.subr.mxu0 0.0
    %1108 = vmatpush1.msra.mxu0 0.0
    %1109 = vmatprep.subr.mxu0 0.0
    %1110 = vmatpush1.msra.mxu0 0.0
    %1111 = vmatprep.subr.mxu0 0.0
    %1112 = vmatpush1.msra.mxu0 0.0
    %1113 = vmatprep.mubr.f32.mxu0 0.0
    %1114 = vmatmul.mubr.f32.gmra.mrb[0].mxu0 %v795
    %v1115 = vpop.f32.mrb[0].mxu0
    %v1116 = vadd.f32 0.0, %v1115
    %v1117 = vpop.f32.mrb[0].mxu0
    %v1118 = vadd.f32 0.0, %v1117
    %1119 = vdwg.mxu0
    %v1124 = vrot.slane %v1045, 6
    %v1125 = vrot.slane %v1047, 6
    %v1126 = vrot.slane %v1116, 6
    %v1127 = vrot.slane %v1118, 6
    %v1132 = vadd.f32 %v257, %v1124
    %v1133 = vadd.f32 %v259, %v1125
    %v1134 = vadd.f32 %v334, %v1126
    %v1135 = vadd.f32 %v336, %v1127
    %v1136 = vxor.u32 %v1132, 2147483648
    %v1137 = vmul.f32 %v1136, 1.442695
    %v1138 = vpow.pop %v1137
    %v1139 = vadd.f32 %v1138, 1.0
    %v1140 = vrcp.pop %v1139
    %v1141 = vmul.f32 1.0, %v1140
    %v1142 = vxor.u32 %v1133, 2147483648
    %v1143 = vmul.f32 %v1142, 1.442695
    %v1144 = vpow.pop %v1143
    %v1145 = vadd.f32 %v1144, 1.0
    %v1146 = vrcp.pop %v1145
    %v1147 = vmul.f32 1.0, %v1146
    %v1148 = vtanh.pop %v1134
    %v1149 = vxor.u32 %v1135, 2147483648
    %v1150 = vmul.f32 %v1149, 1.442695
    %v1151 = vpow.pop %v1150
    %v1152 = vadd.f32 %v1151, 1.0
    %v1153 = vrcp.pop %v1152
    %v1154 = vmul.f32 1.0, %v1153
    %v1156 = vrot.slane %v793, 6
    %v1158 = vmul.f32 %v1147, %v1156
    %v1159 = vmul.f32 %v1141, %v1148
    %v1160 = vadd.f32 %v1158, %v1159
    %v1161 = vtanh.pop %v1160
    %v1162 = vmul.f32 %v1154, %v1161
    %v1164 = vrot.slane %v977, 6
    %1166 = vmatprep.subr.mxu0 %v563
    %1167 = vmatpush1.msra.mxu0 %v562
    %1168 = vmatprep.subr.mxu0 %v567
    %1169 = vmatpush1.msra.mxu0 %v566
    %1170 = vmatprep.subr.mxu0 %v571
    %1171 = vmatpush1.msra.mxu0 %v570
    %1172 = vmatprep.subr.mxu0 %v575
    %1173 = vmatpush1.msra.mxu0 %v574
    %1174 = vmatprep.subr.mxu0 %v579
    %1175 = vmatpush1.msra.mxu0 %v578
    %1176 = vmatprep.subr.mxu0 %v583
    %1177 = vmatpush1.msra.mxu0 %v582
    %1178 = vmatprep.subr.mxu0 %v587
    %1179 = vmatpush1.msra.mxu0 %v586
    %1180 = vmatprep.subr.mxu0 %v591
    %1181 = vmatpush1.msra.mxu0 %v590
    %1182 = vmatprep.subr.mxu0 %v595
    %1183 = vmatpush1.msra.mxu0 %v594
    %1184 = vmatprep.subr.mxu0 %v599
    %1185 = vmatpush1.msra.mxu0 %v598
    %1186 = vmatprep.subr.mxu0 %v603
    %1187 = vmatpush1.msra.mxu0 %v602
    %1188 = vmatprep.subr.mxu0 %v607
    %1189 = vmatpush1.msra.mxu0 %v606
    %1190 = vmatprep.subr.mxu0 %v611
    %1191 = vmatpush1.msra.mxu0 %v610
    %1192 = vmatprep.subr.mxu0 %v615
    %1193 = vmatpush1.msra.mxu0 %v614
    %1194 = vmatprep.subr.mxu0 %v619
    %1195 = vmatpush1.msra.mxu0 %v618
    %1196 = vmatprep.subr.mxu0 %v623
    %1197 = vmatpush1.msra.mxu0 %v622
    %1198 = vmatprep.subr.mxu0 0.0
    %1199 = vmatpush1.msra.mxu0 0.0
    %1200 = vmatprep.subr.mxu0 0.0
    %1201 = vmatpush1.msra.mxu0 0.0
    %1202 = vmatprep.subr.mxu0 0.0
    %1203 = vmatpush1.msra.mxu0 0.0
    %1204 = vmatprep.subr.mxu0 0.0
    %1205 = vmatpush1.msra.mxu0 0.0
    %1206 = vmatprep.subr.mxu0 0.0
    %1207 = vmatpush1.msra.mxu0 0.0
    %1208 = vmatprep.subr.mxu0 0.0
    %1209 = vmatpush1.msra.mxu0 0.0
    %1210 = vmatprep.subr.mxu0 0.0
    %1211 = vmatpush1.msra.mxu0 0.0
    %1212 = vmatprep.subr.mxu0 0.0
    %1213 = vmatpush1.msra.mxu0 0.0
    %1214 = vmatprep.subr.mxu0 0.0
    %1215 = vmatpush1.msra.mxu0 0.0
    %1216 = vmatprep.subr.mxu0 0.0
    %1217 = vmatpush1.msra.mxu0 0.0
    %1218 = vmatprep.subr.mxu0 0.0
    %1219 = vmatpush1.msra.mxu0 0.0
    %1220 = vmatprep.subr.mxu0 0.0
    %1221 = vmatpush1.msra.mxu0 0.0
    %1222 = vmatprep.subr.mxu0 0.0
    %1223 = vmatpush1.msra.mxu0 0.0
    %1224 = vmatprep.subr.mxu0 0.0
    %1225 = vmatpush1.msra.mxu0 0.0
    %1226 = vmatprep.subr.mxu0 0.0
    %1227 = vmatpush1.msra.mxu0 0.0
    %1228 = vmatprep.subr.mxu0 0.0
    %1229 = vmatpush1.msra.mxu0 0.0
    %1230 = vmatprep.mubr.f32.mxu0 0.0
    %1231 = vmatmul.mubr.f32.gmra.mrb[0].mxu0 %v1164
    %v1232 = vpop.f32.mrb[0].mxu0
    %v1233 = vadd.f32 0.0, %v1232
    %v1234 = vpop.f32.mrb[0].mxu0
    %v1235 = vadd.f32 0.0, %v1234
    %1236 = vdwg.mxu0
    %1237 = vmatprep.subr.mxu0 %v565
    %1238 = vmatpush1.msra.mxu0 %v564
    %1239 = vmatprep.subr.mxu0 %v569
    %1240 = vmatpush1.msra.mxu0 %v568
    %1241 = vmatprep.subr.mxu0 %v573
    %1242 = vmatpush1.msra.mxu0 %v572
    %1243 = vmatprep.subr.mxu0 %v577
    %1244 = vmatpush1.msra.mxu0 %v576
    %1245 = vmatprep.subr.mxu0 %v581
    %1246 = vmatpush1.msra.mxu0 %v580
    %1247 = vmatprep.subr.mxu0 %v585
    %1248 = vmatpush1.msra.mxu0 %v584
    %1249 = vmatprep.subr.mxu0 %v589
    %1250 = vmatpush1.msra.mxu0 %v588
    %1251 = vmatprep.subr.mxu0 %v593
    %1252 = vmatpush1.msra.mxu0 %v592
    %1253 = vmatprep.subr.mxu0 %v597
    %1254 = vmatpush1.msra.mxu0 %v596
    %1255 = vmatprep.subr.mxu0 %v601
    %1256 = vmatpush1.msra.mxu0 %v600
    %1257 = vmatprep.subr.mxu0 %v605
    %1258 = vmatpush1.msra.mxu0 %v604
    %1259 = vmatprep.subr.mxu0 %v609
    %1260 = vmatpush1.msra.mxu0 %v608
    %1261 = vmatprep.subr.mxu0 %v613
    %1262 = vmatpush1.msra.mxu0 %v612
    %1263 = vmatprep.subr.mxu0 %v617
    %1264 = vmatpush1.msra.mxu0 %v616
    %1265 = vmatprep.subr.mxu0 %v621
    %1266 = vmatpush1.msra.mxu0 %v620
    %1267 = vmatprep.subr.mxu0 %v625
    %1268 = vmatpush1.msra.mxu0 %v624
    %1269 = vmatprep.subr.mxu0 0.0
    %1270 = vmatpush1.msra.mxu0 0.0
    %1271 = vmatprep.subr.mxu0 0.0
    %1272 = vmatpush1.msra.mxu0 0.0
    %1273 = vmatprep.subr.mxu0 0.0
    %1274 = vmatpush1.msra.mxu0 0.0
    %1275 = vmatprep.subr.mxu0 0.0
    %1276 = vmatpush1.msra.mxu0 0.0
    %1277 = vmatprep.subr.mxu0 0.0
    %1278 = vmatpush1.msra.mxu0 0.0
    %1279 = vmatprep.subr.mxu0 0.0
    %1280 = vmatpush1.msra.mxu0 0.0
    %1281 = vmatprep.subr.mxu0 0.0
    %1282 = vmatpush1.msra.mxu0 0.0
    %1283 = vmatprep.subr.mxu0 0.0
    %1284 = vmatpush1.msra.mxu0 0.0
    %1285 = vmatprep.subr.mxu0 0.0
    %1286 = vmatpush1.msra.mxu0 0.0
    %1287 = vmatprep.subr.mxu0 0.0
    %1288 = vmatpush1.msra.mxu0 0.0
    %1289 = vmatprep.subr.mxu0 0.0
    %1290 = vmatpush1.msra.mxu0 0.0
    %1291 = vmatprep.subr.mxu0 0.0
    %1292 = vmatpush1.msra.mxu0 0.0
    %1293 = vmatprep.subr.mxu0 0.0
    %1294 = vmatpush1.msra.mxu0 0.0
    %1295 = vmatprep.subr.mxu0 0.0
    %1296 = vmatpush1.msra.mxu0 0.0
    %1297 = vmatprep.subr.mxu0 0.0
    %1298 = vmatpush1.msra.mxu0 0.0
    %1299 = vmatprep.subr.mxu0 0.0
    %1300 = vmatpush1.msra.mxu0 0.0
    %1301 = vmatprep.mubr.f32.mxu0 0.0
    %1302 = vmatmul.mubr.f32.gmra.mrb[0].mxu0 %v1164
    %v1303 = vpop.f32.mrb[0].mxu0
    %v1304 = vadd.f32 0.0, %v1303
    %v1305 = vpop.f32.mrb[0].mxu0
    %v1306 = vadd.f32 0.0, %v1305
    %1307 = vdwg.mxu0
    %v1312 = vrot.slane %v1233, 4
    %v1313 = vrot.slane %v1235, 4
    %v1314 = vrot.slane %v1304, 4
    %v1315 = vrot.slane %v1306, 4
    %v1320 = vadd.f32 %v417, %v1312
    %v1321 = vadd.f32 %v419, %v1313
    %v1322 = vadd.f32 %v494, %v1314
    %v1323 = vadd.f32 %v496, %v1315
    %v1324 = vxor.u32 %v1320, 2147483648
    %v1325 = vmul.f32 %v1324, 1.442695
    %v1326 = vpow.pop %v1325
    %v1327 = vadd.f32 %v1326, 1.0
    %v1328 = vrcp.pop %v1327
    %v1329 = vmul.f32 1.0, %v1328
    %v1330 = vxor.u32 %v1321, 2147483648
    %v1331 = vmul.f32 %v1330, 1.442695
    %v1332 = vpow.pop %v1331
    %v1333 = vadd.f32 %v1332, 1.0
    %v1334 = vrcp.pop %v1333
    %v1335 = vmul.f32 1.0, %v1334
    %v1336 = vtanh.pop %v1322
    %v1337 = vxor.u32 %v1323, 2147483648
    %v1338 = vmul.f32 %v1337, 1.442695
    %v1339 = vpow.pop %v1338
    %v1340 = vadd.f32 %v1339, 1.0
    %v1341 = vrcp.pop %v1340
    %v1342 = vmul.f32 1.0, %v1341
    %v1344 = vrot.slane %v975, 2
    %v1346 = vmul.f32 %v1335, %v1344
    %v1347 = vmul.f32 %v1329, %v1336
    %v1348 = vadd.f32 %v1346, %v1347
    %v1349 = vtanh.pop %v1348
    %v1350 = vmul.f32 %v1342, %v1349
    %v1352 = vrot.slane %v1162, 2
    %1354 = vmatprep.subr.mxu0 %v499
    %1355 = vmatpush1.msra.mxu0 %v498
    %1356 = vmatprep.subr.mxu0 %v503
    %1357 = vmatpush1.msra.mxu0 %v502
    %1358 = vmatprep.subr.mxu0 %v507
    %1359 = vmatpush1.msra.mxu0 %v506
    %1360 = vmatprep.subr.mxu0 %v511
    %1361 = vmatpush1.msra.mxu0 %v510
    %1362 = vmatprep.subr.mxu0 %v515
    %1363 = vmatpush1.msra.mxu0 %v514
    %1364 = vmatprep.subr.mxu0 %v519
    %1365 = vmatpush1.msra.mxu0 %v518
    %1366 = vmatprep.subr.mxu0 %v523
    %1367 = vmatpush1.msra.mxu0 %v522
    %1368 = vmatprep.subr.mxu0 %v527
    %1369 = vmatpush1.msra.mxu0 %v526
    %1370 = vmatprep.subr.mxu0 %v531
    %1371 = vmatpush1.msra.mxu0 %v530
    %1372 = vmatprep.subr.mxu0 %v535
    %1373 = vmatpush1.msra.mxu0 %v534
    %1374 = vmatprep.subr.mxu0 %v539
    %1375 = vmatpush1.msra.mxu0 %v538
    %1376 = vmatprep.subr.mxu0 %v543
    %1377 = vmatpush1.msra.mxu0 %v542
    %1378 = vmatprep.subr.mxu0 %v547
    %1379 = vmatpush1.msra.mxu0 %v546
    %1380 = vmatprep.subr.mxu0 %v551
    %1381 = vmatpush1.msra.mxu0 %v550
    %1382 = vmatprep.subr.mxu0 %v555
    %1383 = vmatpush1.msra.mxu0 %v554
    %1384 = vmatprep.subr.mxu0 %v559
    %1385 = vmatpush1.msra.mxu0 %v558
    %1386 = vmatprep.subr.mxu0 0.0
    %1387 = vmatpush1.msra.mxu0 0.0
    %1388 = vmatprep.subr.mxu0 0.0
    %1389 = vmatpush1.msra.mxu0 0.0
    %1390 = vmatprep.subr.mxu0 0.0
    %1391 = vmatpush1.msra.mxu0 0.0
    %1392 = vmatprep.subr.mxu0 0.0
    %1393 = vmatpush1.msra.mxu0 0.0
    %1394 = vmatprep.subr.mxu0 0.0
    %1395 = vmatpush1.msra.mxu0 0.0
    %1396 = vmatprep.subr.mxu0 0.0
    %1397 = vmatpush1.msra.mxu0 0.0
    %1398 = vmatprep.subr.mxu0 0.0
    %1399 = vmatpush1.msra.mxu0 0.0
    %1400 = vmatprep.subr.mxu0 0.0
    %1401 = vmatpush1.msra.mxu0 0.0
    %1402 = vmatprep.subr.mxu0 0.0
    %1403 = vmatpush1.msra.mxu0 0.0
    %1404 = vmatprep.subr.mxu0 0.0
    %1405 = vmatpush1.msra.mxu0 0.0
    %1406 = vmatprep.subr.mxu0 0.0
    %1407 = vmatpush1.msra.mxu0 0.0
    %1408 = vmatprep.subr.mxu0 0.0
    %1409 = vmatpush1.msra.mxu0 0.0
    %1410 = vmatprep.subr.mxu0 0.0
    %1411 = vmatpush1.msra.mxu0 0.0
    %1412 = vmatprep.subr.mxu0 0.0
    %1413 = vmatpush1.msra.mxu0 0.0
    %1414 = vmatprep.subr.mxu0 0.0
    %1415 = vmatpush1.msra.mxu0 0.0
    %1416 = vmatprep.subr.mxu0 0.0
    %1417 = vmatpush1.msra.mxu0 0.0
    %1418 = vmatprep.mubr.f32.mxu0 0.0
    %1419 = vmatmul.mubr.f32.gmra.mrb[0].mxu0 %v1352
    %v1420 = vpop.f32.mrb[0].mxu0
    %v1421 = vadd.f32 0.0, %v1420
    %v1422 = vpop.f32.mrb[0].mxu0
    %v1423 = vadd.f32 0.0, %v1422
    %1424 = vdwg.mxu0
    %1425 = vmatprep.subr.mxu0 %v501
    %1426 = vmatpush1.msra.mxu0 %v500
    %1427 = vmatprep.subr.mxu0 %v505
    %1428 = vmatpush1.msra.mxu0 %v504
    %1429 = vmatprep.subr.mxu0 %v509
    %1430 = vmatpush1.msra.mxu0 %v508
    %1431 = vmatprep.subr.mxu0 %v513
    %1432 = vmatpush1.msra.mxu0 %v512
    %1433 = vmatprep.subr.mxu0 %v517
    %1434 = vmatpush1.msra.mxu0 %v516
    %1435 = vmatprep.subr.mxu0 %v521
    %1436 = vmatpush1.msra.mxu0 %v520
    %1437 = vmatprep.subr.mxu0 %v525
    %1438 = vmatpush1.msra.mxu0 %v524
    %1439 = vmatprep.subr.mxu0 %v529
    %1440 = vmatpush1.msra.mxu0 %v528
    %1441 = vmatprep.subr.mxu0 %v533
    %1442 = vmatpush1.msra.mxu0 %v532
    %1443 = vmatprep.subr.mxu0 %v537
    %1444 = vmatpush1.msra.mxu0 %v536
    %1445 = vmatprep.subr.mxu0 %v541
    %1446 = vmatpush1.msra.mxu0 %v540
    %1447 = vmatprep.subr.mxu0 %v545
    %1448 = vmatpush1.msra.mxu0 %v544
    %1449 = vmatprep.subr.mxu0 %v549
    %1450 = vmatpush1.msra.mxu0 %v548
    %1451 = vmatprep.subr.mxu0 %v553
    %1452 = vmatpush1.msra.mxu0 %v552
    %1453 = vmatprep.subr.mxu0 %v557
    %1454 = vmatpush1.msra.mxu0 %v556
    %1455 = vmatprep.subr.mxu0 %v561
    %1456 = vmatpush1.msra.mxu0 %v560
    %1457 = vmatprep.subr.mxu0 0.0
    %1458 = vmatpush1.msra.mxu0 0.0
    %1459 = vmatprep.subr.mxu0 0.0
    %1460 = vmatpush1.msra.mxu0 0.0
    %1461 = vmatprep.subr.mxu0 0.0
    %1462 = vmatpush1.msra.mxu0 0.0
    %1463 = vmatprep.subr.mxu0 0.0
    %1464 = vmatpush1.msra.mxu0 0.0
    %1465 = vmatprep.subr.mxu0 0.0
    %1466 = vmatpush1.msra.mxu0 0.0
    %1467 = vmatprep.subr.mxu0 0.0
    %1468 = vmatpush1.msra.mxu0 0.0
    %1469 = vmatprep.subr.mxu0 0.0
    %1470 = vmatpush1.msra.mxu0 0.0
    %1471 = vmatprep.subr.mxu0 0.0
    %1472 = vmatpush1.msra.mxu0 0.0
    %1473 = vmatprep.subr.mxu0 0.0
    %1474 = vmatpush1.msra.mxu0 0.0
    %1475 = vmatprep.subr.mxu0 0.0
    %1476 = vmatpush1.msra.mxu0 0.0
    %1477 = vmatprep.subr.mxu0 0.0
    %1478 = vmatpush1.msra.mxu0 0.0
    %1479 = vmatprep.subr.mxu0 0.0
    %1480 = vmatpush1.msra.mxu0 0.0
    %1481 = vmatprep.subr.mxu0 0.0
    %1482 = vmatpush1.msra.mxu0 0.0
    %1483 = vmatprep.subr.mxu0 0.0
    %1484 = vmatpush1.msra.mxu0 0.0
    %1485 = vmatprep.subr.mxu0 0.0
    %1486 = vmatpush1.msra.mxu0 0.0
    %1487 = vmatprep.subr.mxu0 0.0
    %1488 = vmatpush1.msra.mxu0 0.0
    %1489 = vmatprep.mubr.f32.mxu0 0.0
    %1490 = vmatmul.mubr.f32.gmra.mrb[0].mxu0 %v1352
    %v1491 = vpop.f32.mrb[0].mxu0
    %v1492 = vadd.f32 0.0, %v1491
    %v1493 = vpop.f32.mrb[0].mxu0
    %v1494 = vadd.f32 0.0, %v1493
    %1495 = vdwg.mxu0
    %v1500 = vrot.slane %v1421, 4
    %v1501 = vrot.slane %v1423, 4
    %v1502 = vrot.slane %v1492, 4
    %v1503 = vrot.slane %v1494, 4
    %v1508 = vadd.f32 %v257, %v1500
    %v1509 = vadd.f32 %v259, %v1501
    %v1510 = vadd.f32 %v334, %v1502
    %v1511 = vadd.f32 %v336, %v1503
    %v1512 = vxor.u32 %v1508, 2147483648
    %v1513 = vmul.f32 %v1512, 1.442695
    %v1514 = vpow.pop %v1513
    %v1515 = vadd.f32 %v1514, 1.0
    %v1516 = vrcp.pop %v1515
    %v1517 = vmul.f32 1.0, %v1516
    %v1518 = vxor.u32 %v1509, 2147483648
    %v1519 = vmul.f32 %v1518, 1.442695
    %v1520 = vpow.pop %v1519
    %v1521 = vadd.f32 %v1520, 1.0
    %v1522 = vrcp.pop %v1521
    %v1523 = vmul.f32 1.0, %v1522
    %v1524 = vtanh.pop %v1510
    %v1525 = vxor.u32 %v1511, 2147483648
    %v1526 = vmul.f32 %v1525, 1.442695
    %v1527 = vpow.pop %v1526
    %v1528 = vadd.f32 %v1527, 1.0
    %v1529 = vrcp.pop %v1528
    %v1530 = vmul.f32 1.0, %v1529
    %v1532 = vrot.slane %v1160, 6
    %v1534 = vmul.f32 %v1523, %v1532
    %v1535 = vmul.f32 %v1517, %v1524
    %v1536 = vadd.f32 %v1534, %v1535
    %v1537 = vtanh.pop %v1536
    %v1538 = vmul.f32 %v1530, %v1537
    %v1540 = vrot.slane %v1350, 4
    %1542 = vmatprep.subr.mxu0 %v563
    %1543 = vmatpush1.msra.mxu0 %v562
    %1544 = vmatprep.subr.mxu0 %v567
    %1545 = vmatpush1.msra.mxu0 %v566
    %1546 = vmatprep.subr.mxu0 %v571
    %1547 = vmatpush1.msra.mxu0 %v570
    %1548 = vmatprep.subr.mxu0 %v575
    %1549 = vmatpush1.msra.mxu0 %v574
    %1550 = vmatprep.subr.mxu0 %v579
    %1551 = vmatpush1.msra.mxu0 %v578
    %1552 = vmatprep.subr.mxu0 %v583
    %1553 = vmatpush1.msra.mxu0 %v582
    %1554 = vmatprep.subr.mxu0 %v587
    %1555 = vmatpush1.msra.mxu0 %v586
    %1556 = vmatprep.subr.mxu0 %v591
    %1557 = vmatpush1.msra.mxu0 %v590
    %1558 = vmatprep.subr.mxu0 %v595
    %1559 = vmatpush1.msra.mxu0 %v594
    %1560 = vmatprep.subr.mxu0 %v599
    %1561 = vmatpush1.msra.mxu0 %v598
    %1562 = vmatprep.subr.mxu0 %v603
    %1563 = vmatpush1.msra.mxu0 %v602
    %1564 = vmatprep.subr.mxu0 %v607
    %1565 = vmatpush1.msra.mxu0 %v606
    %1566 = vmatprep.subr.mxu0 %v611
    %1567 = vmatpush1.msra.mxu0 %v610
    %1568 = vmatprep.subr.mxu0 %v615
    %1569 = vmatpush1.msra.mxu0 %v614
    %1570 = vmatprep.subr.mxu0 %v619
    %1571 = vmatpush1.msra.mxu0 %v618
    %1572 = vmatprep.subr.mxu0 %v623
    %1573 = vmatpush1.msra.mxu0 %v622
    %1574 = vmatprep.subr.mxu0 0.0
    %1575 = vmatpush1.msra.mxu0 0.0
    %1576 = vmatprep.subr.mxu0 0.0
    %1577 = vmatpush1.msra.mxu0 0.0
    %1578 = vmatprep.subr.mxu0 0.0
    %1579 = vmatpush1.msra.mxu0 0.0
    %1580 = vmatprep.subr.mxu0 0.0
    %1581 = vmatpush1.msra.mxu0 0.0
    %1582 = vmatprep.subr.mxu0 0.0
    %1583 = vmatpush1.msra.mxu0 0.0
    %1584 = vmatprep.subr.mxu0 0.0
    %1585 = vmatpush1.msra.mxu0 0.0
    %1586 = vmatprep.subr.mxu0 0.0
    %1587 = vmatpush1.msra.mxu0 0.0
    %1588 = vmatprep.subr.mxu0 0.0
    %1589 = vmatpush1.msra.mxu0 0.0
    %1590 = vmatprep.subr.mxu0 0.0
    %1591 = vmatpush1.msra.mxu0 0.0
    %1592 = vmatprep.subr.mxu0 0.0
    %1593 = vmatpush1.msra.mxu0 0.0
    %1594 = vmatprep.subr.mxu0 0.0
    %1595 = vmatpush1.msra.mxu0 0.0
    %1596 = vmatprep.subr.mxu0 0.0
    %1597 = vmatpush1.msra.mxu0 0.0
    %1598 = vmatprep.subr.mxu0 0.0
    %1599 = vmatpush1.msra.mxu0 0.0
    %1600 = vmatprep.subr.mxu0 0.0
    %1601 = vmatpush1.msra.mxu0 0.0
    %1602 = vmatprep.subr.mxu0 0.0
    %1603 = vmatpush1.msra.mxu0 0.0
    %1604 = vmatprep.subr.mxu0 0.0
    %1605 = vmatpush1.msra.mxu0 0.0
    %1606 = vmatprep.mubr.f32.mxu0 0.0
    %1607 = vmatmul.mubr.f32.gmra.mrb[0].mxu0 %v1540
    %v1608 = vpop.f32.mrb[0].mxu0
    %v1609 = vadd.f32 0.0, %v1608
    %v1610 = vpop.f32.mrb[0].mxu0
    %v1611 = vadd.f32 0.0, %v1610
    %1612 = vdwg.mxu0
    %1613 = vmatprep.subr.mxu0 %v565
    %1614 = vmatpush1.msra.mxu0 %v564
    %1615 = vmatprep.subr.mxu0 %v569
    %1616 = vmatpush1.msra.mxu0 %v568
    %1617 = vmatprep.subr.mxu0 %v573
    %1618 = vmatpush1.msra.mxu0 %v572
    %1619 = vmatprep.subr.mxu0 %v577
    %1620 = vmatpush1.msra.mxu0 %v576
    %1621 = vmatprep.subr.mxu0 %v581
    %1622 = vmatpush1.msra.mxu0 %v580
    %1623 = vmatprep.subr.mxu0 %v585
    %1624 = vmatpush1.msra.mxu0 %v584
    %1625 = vmatprep.subr.mxu0 %v589
    %1626 = vmatpush1.msra.mxu0 %v588
    %1627 = vmatprep.subr.mxu0 %v593
    %1628 = vmatpush1.msra.mxu0 %v592
    %1629 = vmatprep.subr.mxu0 %v597
    %1630 = vmatpush1.msra.mxu0 %v596
    %1631 = vmatprep.subr.mxu0 %v601
    %1632 = vmatpush1.msra.mxu0 %v600
    %1633 = vmatprep.subr.mxu0 %v605
    %1634 = vmatpush1.msra.mxu0 %v604
    %1635 = vmatprep.subr.mxu0 %v609
    %1636 = vmatpush1.msra.mxu0 %v608
    %1637 = vmatprep.subr.mxu0 %v613
    %1638 = vmatpush1.msra.mxu0 %v612
    %1639 = vmatprep.subr.mxu0 %v617
    %1640 = vmatpush1.msra.mxu0 %v616
    %1641 = vmatprep.subr.mxu0 %v621
    %1642 = vmatpush1.msra.mxu0 %v620
    %1643 = vmatprep.subr.mxu0 %v625
    %1644 = vmatpush1.msra.mxu0 %v624
    %1645 = vmatprep.subr.mxu0 0.0
    %1646 = vmatpush1.msra.mxu0 0.0
    %1647 = vmatprep.subr.mxu0 0.0
    %1648 = vmatpush1.msra.mxu0 0.0
    %1649 = vmatprep.subr.mxu0 0.0
    %1650 = vmatpush1.msra.mxu0 0.0
    %1651 = vmatprep.subr.mxu0 0.0
    %1652 = vmatpush1.msra.mxu0 0.0
    %1653 = vmatprep.subr.mxu0 0.0
    %1654 = vmatpush1.msra.mxu0 0.0
    %1655 = vmatprep.subr.mxu0 0.0
    %1656 = vmatpush1.msra.mxu0 0.0
    %1657 = vmatprep.subr.mxu0 0.0
    %1658 = vmatpush1.msra.mxu0 0.0
    %1659 = vmatprep.subr.mxu0 0.0
    %1660 = vmatpush1.msra.mxu0 0.0
    %1661 = vmatprep.subr.mxu0 0.0
    %1662 = vmatpush1.msra.mxu0 0.0
    %1663 = vmatprep.subr.mxu0 0.0
    %1664 = vmatpush1.msra.mxu0 0.0
    %1665 = vmatprep.subr.mxu0 0.0
    %1666 = vmatpush1.msra.mxu0 0.0
    %1667 = vmatprep.subr.mxu0 0.0
    %1668 = vmatpush1.msra.mxu0 0.0
    %1669 = vmatprep.subr.mxu0 0.0
    %1670 = vmatpush1.msra.mxu0 0.0
    %1671 = vmatprep.subr.mxu0 0.0
    %1672 = vmatpush1.msra.mxu0 0.0
    %1673 = vmatprep.subr.mxu0 0.0
    %1674 = vmatpush1.msra.mxu0 0.0
    %1675 = vmatprep.subr.mxu0 0.0
    %1676 = vmatpush1.msra.mxu0 0.0
    %1677 = vmatprep.mubr.f32.mxu0 0.0
    %1678 = vmatmul.mubr.f32.gmra.mrb[0].mxu0 %v1540
    %v1679 = vpop.f32.mrb[0].mxu0
    %v1680 = vadd.f32 0.0, %v1679
    %v1681 = vpop.f32.mrb[0].mxu0
    %v1682 = vadd.f32 0.0, %v1681
    %1683 = vdwg.mxu0
    %v1688 = vrot.slane %v1609, 6
    %v1689 = vrot.slane %v1611, 6
    %v1690 = vrot.slane %v1680, 6
    %v1691 = vrot.slane %v1682, 6
    %v1696 = vadd.f32 %v417, %v1688
    %v1697 = vadd.f32 %v419, %v1689
    %v1698 = vadd.f32 %v494, %v1690
    %v1699 = vadd.f32 %v496, %v1691
    %v1700 = vxor.u32 %v1696, 2147483648
    %v1701 = vmul.f32 %v1700, 1.442695
    %v1702 = vpow.pop %v1701
    %v1703 = vadd.f32 %v1702, 1.0
    %v1704 = vrcp.pop %v1703
    %v1705 = vmul.f32 1.0, %v1704
    %v1706 = vxor.u32 %v1697, 2147483648
    %v1707 = vmul.f32 %v1706, 1.442695
    %v1708 = vpow.pop %v1707
    %v1709 = vadd.f32 %v1708, 1.0
    %v1710 = vrcp.pop %v1709
    %v1711 = vmul.f32 1.0, %v1710
    %v1712 = vtanh.pop %v1698
    %v1713 = vxor.u32 %v1699, 2147483648
    %v1714 = vmul.f32 %v1713, 1.442695
    %v1715 = vpow.pop %v1714
    %v1716 = vadd.f32 %v1715, 1.0
    %v1717 = vrcp.pop %v1716
    %v1718 = vmul.f32 1.0, %v1717
    %v1720 = vrot.slane %v1348, 2
    %v1722 = vmul.f32 %v1711, %v1720
    %v1723 = vmul.f32 %v1705, %v1712
    %v1724 = vadd.f32 %v1722, %v1723
    %v1725 = vtanh.pop %v1724
    %v1726 = vmul.f32 %v1718, %v1725
    %v1728 = vrot.slane %v1538, 4
    %1730 = vmatprep.subr.mxu0 %v499
    %1731 = vmatpush1.msra.mxu0 %v498
    %1732 = vmatprep.subr.mxu0 %v503
    %1733 = vmatpush1.msra.mxu0 %v502
    %1734 = vmatprep.subr.mxu0 %v507
    %1735 = vmatpush1.msra.mxu0 %v506
    %1736 = vmatprep.subr.mxu0 %v511
    %1737 = vmatpush1.msra.mxu0 %v510
    %1738 = vmatprep.subr.mxu0 %v515
    %1739 = vmatpush1.msra.mxu0 %v514
    %1740 = vmatprep.subr.mxu0 %v519
    %1741 = vmatpush1.msra.mxu0 %v518
    %1742 = vmatprep.subr.mxu0 %v523
    %1743 = vmatpush1.msra.mxu0 %v522
    %1744 = vmatprep.subr.mxu0 %v527
    %1745 = vmatpush1.msra.mxu0 %v526
    %1746 = vmatprep.subr.mxu0 %v531
    %1747 = vmatpush1.msra.mxu0 %v530
    %1748 = vmatprep.subr.mxu0 %v535
    %1749 = vmatpush1.msra.mxu0 %v534
    %1750 = vmatprep.subr.mxu0 %v539
    %1751 = vmatpush1.msra.mxu0 %v538
    %1752 = vmatprep.subr.mxu0 %v543
    %1753 = vmatpush1.msra.mxu0 %v542
    %1754 = vmatprep.subr.mxu0 %v547
    %1755 = vmatpush1.msra.mxu0 %v546
    %1756 = vmatprep.subr.mxu0 %v551
    %1757 = vmatpush1.msra.mxu0 %v550
    %1758 = vmatprep.subr.mxu0 %v555
    %1759 = vmatpush1.msra.mxu0 %v554
    %1760 = vmatprep.subr.mxu0 %v559
    %1761 = vmatpush1.msra.mxu0 %v558
    %1762 = vmatprep.subr.mxu0 0.0
    %1763 = vmatpush1.msra.mxu0 0.0
    %1764 = vmatprep.subr.mxu0 0.0
    %1765 = vmatpush1.msra.mxu0 0.0
    %1766 = vmatprep.subr.mxu0 0.0
    %1767 = vmatpush1.msra.mxu0 0.0
    %1768 = vmatprep.subr.mxu0 0.0
    %1769 = vmatpush1.msra.mxu0 0.0
    %1770 = vmatprep.subr.mxu0 0.0
    %1771 = vmatpush1.msra.mxu0 0.0
    %1772 = vmatprep.subr.mxu0 0.0
    %1773 = vmatpush1.msra.mxu0 0.0
    %1774 = vmatprep.subr.mxu0 0.0
    %1775 = vmatpush1.msra.mxu0 0.0
    %1776 = vmatprep.subr.mxu0 0.0
    %1777 = vmatpush1.msra.mxu0 0.0
    %1778 = vmatprep.subr.mxu0 0.0
    %1779 = vmatpush1.msra.mxu0 0.0
    %1780 = vmatprep.subr.mxu0 0.0
    %1781 = vmatpush1.msra.mxu0 0.0
    %1782 = vmatprep.subr.mxu0 0.0
    %1783 = vmatpush1.msra.mxu0 0.0
    %1784 = vmatprep.subr.mxu0 0.0
    %1785 = vmatpush1.msra.mxu0 0.0
    %1786 = vmatprep.subr.mxu0 0.0
    %1787 = vmatpush1.msra.mxu0 0.0
    %1788 = vmatprep.subr.mxu0 0.0
    %1789 = vmatpush1.msra.mxu0 0.0
    %1790 = vmatprep.subr.mxu0 0.0
    %1791 = vmatpush1.msra.mxu0 0.0
    %1792 = vmatprep.subr.mxu0 0.0
    %1793 = vmatpush1.msra.mxu0 0.0
    %1794 = vmatprep.mubr.f32.mxu0 0.0
    %1795 = vmatmul.mubr.f32.gmra.mrb[0].mxu0 %v1728
    %v1796 = vpop.f32.mrb[0].mxu0
    %v1797 = vadd.f32 0.0, %v1796
    %v1798 = vpop.f32.mrb[0].mxu0
    %v1799 = vadd.f32 0.0, %v1798
    %1800 = vdwg.mxu0
    %1801 = vmatprep.subr.mxu0 %v501
    %1802 = vmatpush1.msra.mxu0 %v500
    %1803 = vmatprep.subr.mxu0 %v505
    %1804 = vmatpush1.msra.mxu0 %v504
    %1805 = vmatprep.subr.mxu0 %v509
    %1806 = vmatpush1.msra.mxu0 %v508
    %1807 = vmatprep.subr.mxu0 %v513
    %1808 = vmatpush1.msra.mxu0 %v512
    %1809 = vmatprep.subr.mxu0 %v517
    %1810 = vmatpush1.msra.mxu0 %v516
    %1811 = vmatprep.subr.mxu0 %v521
    %1812 = vmatpush1.msra.mxu0 %v520
    %1813 = vmatprep.subr.mxu0 %v525
    %1814 = vmatpush1.msra.mxu0 %v524
    %1815 = vmatprep.subr.mxu0 %v529
    %1816 = vmatpush1.msra.mxu0 %v528
    %1817 = vmatprep.subr.mxu0 %v533
    %1818 = vmatpush1.msra.mxu0 %v532
    %1819 = vmatprep.subr.mxu0 %v537
    %1820 = vmatpush1.msra.mxu0 %v536
    %1821 = vmatprep.subr.mxu0 %v541
    %1822 = vmatpush1.msra.mxu0 %v540
    %1823 = vmatprep.subr.mxu0 %v545
    %1824 = vmatpush1.msra.mxu0 %v544
    %1825 = vmatprep.subr.mxu0 %v549
    %1826 = vmatpush1.msra.mxu0 %v548
    %1827 = vmatprep.subr.mxu0 %v553
    %1828 = vmatpush1.msra.mxu0 %v552
    %1829 = vmatprep.subr.mxu0 %v557
    %1830 = vmatpush1.msra.mxu0 %v556
    %1831 = vmatprep.subr.mxu0 %v561
    %1832 = vmatpush1.msra.mxu0 %v560
    %1833 = vmatprep.subr.mxu0 0.0
    %1834 = vmatpush1.msra.mxu0 0.0
    %1835 = vmatprep.subr.mxu0 0.0
    %1836 = vmatpush1.msra.mxu0 0.0
    %1837 = vmatprep.subr.mxu0 0.0
    %1838 = vmatpush1.msra.mxu0 0.0
    %1839 = vmatprep.subr.mxu0 0.0
    %1840 = vmatpush1.msra.mxu0 0.0
    %1841 = vmatprep.subr.mxu0 0.0
    %1842 = vmatpush1.msra.mxu0 0.0
    %1843 = vmatprep.subr.mxu0 0.0
    %1844 = vmatpush1.msra.mxu0 0.0
    %1845 = vmatprep.subr.mxu0 0.0
    %1846 = vmatpush1.msra.mxu0 0.0
    %1847 = vmatprep.subr.mxu0 0.0
    %1848 = vmatpush1.msra.mxu0 0.0
    %1849 = vmatprep.subr.mxu0 0.0
    %1850 = vmatpush1.msra.mxu0 0.0
    %1851 = vmatprep.subr.mxu0 0.0
    %1852 = vmatpush1.msra.mxu0 0.0
    %1853 = vmatprep.subr.mxu0 0.0
    %1854 = vmatpush1.msra.mxu0 0.0
    %1855 = vmatprep.subr.mxu0 0.0
    %1856 = vmatpush1.msra.mxu0 0.0
    %1857 = vmatprep.subr.mxu0 0.0
    %1858 = vmatpush1.msra.mxu0 0.0
    %1859 = vmatprep.subr.mxu0 0.0
    %1860 = vmatpush1.msra.mxu0 0.0
    %1861 = vmatprep.subr.mxu0 0.0
    %1862 = vmatpush1.msra.mxu0 0.0
    %1863 = vmatprep.subr.mxu0 0.0
    %1864 = vmatpush1.msra.mxu0 0.0
    %1865 = vmatprep.mubr.f32.mxu0 0.0
    %1866 = vmatmul.mubr.f32.gmra.mrb[0].mxu0 %v1728
    %v1867 = vpop.f32.mrb[0].mxu0
    %v1868 = vadd.f32 0.0, %v1867
    %v1869 = vpop.f32.mrb[0].mxu0
    %v1870 = vadd.f32 0.0, %v1869
    %1871 = vdwg.mxu0
    %v1876 = vrot.slane %v1797, 2
    %v1877 = vrot.slane %v1799, 2
    %v1878 = vrot.slane %v1868, 2
    %v1879 = vrot.slane %v1870, 2
    %v1884 = vadd.f32 %v257, %v1876
    %v1885 = vadd.f32 %v259, %v1877
    %v1886 = vadd.f32 %v334, %v1878
    %v1887 = vadd.f32 %v336, %v1879
    %v1888 = vxor.u32 %v1884, 2147483648
    %v1889 = vmul.f32 %v1888, 1.442695
    %v1890 = vpow.pop %v1889
    %v1891 = vadd.f32 %v1890, 1.0
    %v1892 = vrcp.pop %v1891
    %v1893 = vmul.f32 1.0, %v1892
    %v1894 = vxor.u32 %v1885, 2147483648
    %v1895 = vmul.f32 %v1894, 1.442695
    %v1896 = vpow.pop %v1895
    %v1897 = vadd.f32 %v1896, 1.0
    %v1898 = vrcp.pop %v1897
    %v1899 = vmul.f32 1.0, %v1898
    %v1900 = vtanh.pop %v1886
    %v1901 = vxor.u32 %v1887, 2147483648
    %v1902 = vmul.f32 %v1901, 1.442695
    %v1903 = vpow.pop %v1902
    %v1904 = vadd.f32 %v1903, 1.0
    %v1905 = vrcp.pop %v1904
    %v1906 = vmul.f32 1.0, %v1905
    %v1908 = vrot.slane %v1536, 6
    %v1910 = vmul.f32 %v1899, %v1908
    %v1911 = vmul.f32 %v1893, %v1900
    %v1912 = vadd.f32 %v1910, %v1911
    %v1913 = vtanh.pop %v1912
    %v1914 = vmul.f32 %v1906, %v1913
    %v1916 = vrot.slane %v1726, 2
    %1918 = vmatprep.subr.mxu0 %v563
    %1919 = vmatpush1.msra.mxu0 %v562
    %1920 = vmatprep.subr.mxu0 %v567
    %1921 = vmatpush1.msra.mxu0 %v566
    %1922 = vmatprep.subr.mxu0 %v571
    %1923 = vmatpush1.msra.mxu0 %v570
    %1924 = vmatprep.subr.mxu0 %v575
    %1925 = vmatpush1.msra.mxu0 %v574
    %1926 = vmatprep.subr.mxu0 %v579
    %1927 = vmatpush1.msra.mxu0 %v578
    %1928 = vmatprep.subr.mxu0 %v583
    %1929 = vmatpush1.msra.mxu0 %v582
    %1930 = vmatprep.subr.mxu0 %v587
    %1931 = vmatpush1.msra.mxu0 %v586
    %1932 = vmatprep.subr.mxu0 %v591
    %1933 = vmatpush1.msra.mxu0 %v590
    %1934 = vmatprep.subr.mxu0 %v595
    %1935 = vmatpush1.msra.mxu0 %v594
    %1936 = vmatprep.subr.mxu0 %v599
    %1937 = vmatpush1.msra.mxu0 %v598
    %1938 = vmatprep.subr.mxu0 %v603
    %1939 = vmatpush1.msra.mxu0 %v602
    %1940 = vmatprep.subr.mxu0 %v607
    %1941 = vmatpush1.msra.mxu0 %v606
    %1942 = vmatprep.subr.mxu0 %v611
    %1943 = vmatpush1.msra.mxu0 %v610
    %1944 = vmatprep.subr.mxu0 %v615
    %1945 = vmatpush1.msra.mxu0 %v614
    %1946 = vmatprep.subr.mxu0 %v619
    %1947 = vmatpush1.msra.mxu0 %v618
    %1948 = vmatprep.subr.mxu0 %v623
    %1949 = vmatpush1.msra.mxu0 %v622
    %1950 = vmatprep.subr.mxu0 0.0
    %1951 = vmatpush1.msra.mxu0 0.0
    %1952 = vmatprep.subr.mxu0 0.0
    %1953 = vmatpush1.msra.mxu0 0.0
    %1954 = vmatprep.subr.mxu0 0.0
    %1955 = vmatpush1.msra.mxu0 0.0
    %1956 = vmatprep.subr.mxu0 0.0
    %1957 = vmatpush1.msra.mxu0 0.0
    %1958 = vmatprep.subr.mxu0 0.0
    %1959 = vmatpush1.msra.mxu0 0.0
    %1960 = vmatprep.subr.mxu0 0.0
    %1961 = vmatpush1.msra.mxu0 0.0
    %1962 = vmatprep.subr.mxu0 0.0
    %1963 = vmatpush1.msra.mxu0 0.0
    %1964 = vmatprep.subr.mxu0 0.0
    %1965 = vmatpush1.msra.mxu0 0.0
    %1966 = vmatprep.subr.mxu0 0.0
    %1967 = vmatpush1.msra.mxu0 0.0
    %1968 = vmatprep.subr.mxu0 0.0
    %1969 = vmatpush1.msra.mxu0 0.0
    %1970 = vmatprep.subr.mxu0 0.0
    %1971 = vmatpush1.msra.mxu0 0.0
    %1972 = vmatprep.subr.mxu0 0.0
    %1973 = vmatpush1.msra.mxu0 0.0
    %1974 = vmatprep.subr.mxu0 0.0
    %1975 = vmatpush1.msra.mxu0 0.0
    %1976 = vmatprep.subr.mxu0 0.0
    %1977 = vmatpush1.msra.mxu0 0.0
    %1978 = vmatprep.subr.mxu0 0.0
    %1979 = vmatpush1.msra.mxu0 0.0
    %1980 = vmatprep.subr.mxu0 0.0
    %1981 = vmatpush1.msra.mxu0 0.0
    %1982 = vmatprep.mubr.f32.mxu0 0.0
    %1983 = vmatmul.mubr.f32.gmra.mrb[0].mxu0 %v1916
    %v1984 = vpop.f32.mrb[0].mxu0
    %v1985 = vadd.f32 0.0, %v1984
    %v1986 = vpop.f32.mrb[0].mxu0
    %v1987 = vadd.f32 0.0, %v1986
    %1988 = vdwg.mxu0
    %1989 = vmatprep.subr.mxu0 %v565
    %1990 = vmatpush1.msra.mxu0 %v564
    %1991 = vmatprep.subr.mxu0 %v569
    %1992 = vmatpush1.msra.mxu0 %v568
    %1993 = vmatprep.subr.mxu0 %v573
    %1994 = vmatpush1.msra.mxu0 %v572
    %1995 = vmatprep.subr.mxu0 %v577
    %1996 = vmatpush1.msra.mxu0 %v576
    %1997 = vmatprep.subr.mxu0 %v581
    %1998 = vmatpush1.msra.mxu0 %v580
    %1999 = vmatprep.subr.mxu0 %v585
    %2000 = vmatpush1.msra.mxu0 %v584
    %2001 = vmatprep.subr.mxu0 %v589
    %2002 = vmatpush1.msra.mxu0 %v588
    %2003 = vmatprep.subr.mxu0 %v593
    %2004 = vmatpush1.msra.mxu0 %v592
    %2005 = vmatprep.subr.mxu0 %v597
    %2006 = vmatpush1.msra.mxu0 %v596
    %2007 = vmatprep.subr.mxu0 %v601
    %2008 = vmatpush1.msra.mxu0 %v600
    %2009 = vmatprep.subr.mxu0 %v605
    %2010 = vmatpush1.msra.mxu0 %v604
    %2011 = vmatprep.subr.mxu0 %v609
    %2012 = vmatpush1.msra.mxu0 %v608
    %2013 = vmatprep.subr.mxu0 %v613
    %2014 = vmatpush1.msra.mxu0 %v612
    %2015 = vmatprep.subr.mxu0 %v617
    %2016 = vmatpush1.msra.mxu0 %v616
    %2017 = vmatprep.subr.mxu0 %v621
    %2018 = vmatpush1.msra.mxu0 %v620
    %2019 = vmatprep.subr.mxu0 %v625
    %2020 = vmatpush1.msra.mxu0 %v624
    %2021 = vmatprep.subr.mxu0 0.0
    %2022 = vmatpush1.msra.mxu0 0.0
    %2023 = vmatprep.subr.mxu0 0.0
    %2024 = vmatpush1.msra.mxu0 0.0
    %2025 = vmatprep.subr.mxu0 0.0
    %2026 = vmatpush1.msra.mxu0 0.0
    %2027 = vmatprep.subr.mxu0 0.0
    %2028 = vmatpush1.msra.mxu0 0.0
    %2029 = vmatprep.subr.mxu0 0.0
    %2030 = vmatpush1.msra.mxu0 0.0
    %2031 = vmatprep.subr.mxu0 0.0
    %2032 = vmatpush1.msra.mxu0 0.0
    %2033 = vmatprep.subr.mxu0 0.0
    %2034 = vmatpush1.msra.mxu0 0.0
    %2035 = vmatprep.subr.mxu0 0.0
    %2036 = vmatpush1.msra.mxu0 0.0
    %2037 = vmatprep.subr.mxu0 0.0
    %2038 = vmatpush1.msra.mxu0 0.0
    %2039 = vmatprep.subr.mxu0 0.0
    %2040 = vmatpush1.msra.mxu0 0.0
    %2041 = vmatprep.subr.mxu0 0.0
    %2042 = vmatpush1.msra.mxu0 0.0
    %2043 = vmatprep.subr.mxu0 0.0
    %2044 = vmatpush1.msra.mxu0 0.0
    %2045 = vmatprep.subr.mxu0 0.0
    %2046 = vmatpush1.msra.mxu0 0.0
    %2047 = vmatprep.subr.mxu0 0.0
    %2048 = vmatpush1.msra.mxu0 0.0
    %2049 = vmatprep.subr.mxu0 0.0
    %2050 = vmatpush1.msra.mxu0 0.0
    %2051 = vmatprep.subr.mxu0 0.0
    %2052 = vmatpush1.msra.mxu0 0.0
    %2053 = vmatprep.mubr.f32.mxu0 0.0
    %2054 = vmatmul.mubr.f32.gmra.mrb[0].mxu0 %v1916
    %v2055 = vpop.f32.mrb[0].mxu0
    %v2056 = vadd.f32 0.0, %v2055
    %v2057 = vpop.f32.mrb[0].mxu0
    %v2058 = vadd.f32 0.0, %v2057
    %2059 = vdwg.mxu0
    %v2060 = vadd.f32 %v417, %v1985
    %v2061 = vadd.f32 %v419, %v1987
    %v2062 = vadd.f32 %v494, %v2056
    %v2063 = vadd.f32 %v496, %v2058
    %v2064 = vxor.u32 %v2060, 2147483648
    %v2065 = vmul.f32 %v2064, 1.442695
    %v2066 = vpow.pop %v2065
    %v2067 = vadd.f32 %v2066, 1.0
    %v2068 = vrcp.pop %v2067
    %v2069 = vmul.f32 1.0, %v2068
    %v2070 = vxor.u32 %v2061, 2147483648
    %v2071 = vmul.f32 %v2070, 1.442695
    %v2072 = vpow.pop %v2071
    %v2073 = vadd.f32 %v2072, 1.0
    %v2074 = vrcp.pop %v2073
    %v2075 = vmul.f32 1.0, %v2074
    %v2076 = vtanh.pop %v2062
    %v2077 = vxor.u32 %v2063, 2147483648
    %v2078 = vmul.f32 %v2077, 1.442695
    %v2079 = vpow.pop %v2078
    %v2080 = vadd.f32 %v2079, 1.0
    %v2081 = vrcp.pop %v2080
    %v2082 = vmul.f32 1.0, %v2081
    %v2084 = vrot.slane %v1724, 2
    %v2086 = vmul.f32 %v2075, %v2084
    %v2087 = vmul.f32 %v2069, %v2076
    %v2088 = vadd.f32 %v2086, %v2087
    %v2089 = vtanh.pop %v2088
    %v2090 = vmul.f32 %v2082, %v2089
    %v2092 = vrot.slane %v1914, 6
    %2094 = vmatprep.subr.mxu0 %v499
    %2095 = vmatpush1.msra.mxu0 %v498
    %2096 = vmatprep.subr.mxu0 %v503
    %2097 = vmatpush1.msra.mxu0 %v502
    %2098 = vmatprep.subr.mxu0 %v507
    %2099 = vmatpush1.msra.mxu0 %v506
    %2100 = vmatprep.subr.mxu0 %v511
    %2101 = vmatpush1.msra.mxu0 %v510
    %2102 = vmatprep.subr.mxu0 %v515
    %2103 = vmatpush1.msra.mxu0 %v514
    %2104 = vmatprep.subr.mxu0 %v519
    %2105 = vmatpush1.msra.mxu0 %v518
    %2106 = vmatprep.subr.mxu0 %v523
    %2107 = vmatpush1.msra.mxu0 %v522
    %2108 = vmatprep.subr.mxu0 %v527
    %2109 = vmatpush1.msra.mxu0 %v526
    %2110 = vmatprep.subr.mxu0 %v531
    %2111 = vmatpush1.msra.mxu0 %v530
    %2112 = vmatprep.subr.mxu0 %v535
    %2113 = vmatpush1.msra.mxu0 %v534
    %2114 = vmatprep.subr.mxu0 %v539
    %2115 = vmatpush1.msra.mxu0 %v538
    %2116 = vmatprep.subr.mxu0 %v543
    %2117 = vmatpush1.msra.mxu0 %v542
    %2118 = vmatprep.subr.mxu0 %v547
    %2119 = vmatpush1.msra.mxu0 %v546
    %2120 = vmatprep.subr.mxu0 %v551
    %2121 = vmatpush1.msra.mxu0 %v550
    %2122 = vmatprep.subr.mxu0 %v555
    %2123 = vmatpush1.msra.mxu0 %v554
    %2124 = vmatprep.subr.mxu0 %v559
    %2125 = vmatpush1.msra.mxu0 %v558
    %2126 = vmatprep.subr.mxu0 0.0
    %2127 = vmatpush1.msra.mxu0 0.0
    %2128 = vmatprep.subr.mxu0 0.0
    %2129 = vmatpush1.msra.mxu0 0.0
    %2130 = vmatprep.subr.mxu0 0.0
    %2131 = vmatpush1.msra.mxu0 0.0
    %2132 = vmatprep.subr.mxu0 0.0
    %2133 = vmatpush1.msra.mxu0 0.0
    %2134 = vmatprep.subr.mxu0 0.0
    %2135 = vmatpush1.msra.mxu0 0.0
    %2136 = vmatprep.subr.mxu0 0.0
    %2137 = vmatpush1.msra.mxu0 0.0
    %2138 = vmatprep.subr.mxu0 0.0
    %2139 = vmatpush1.msra.mxu0 0.0
    %2140 = vmatprep.subr.mxu0 0.0
    %2141 = vmatpush1.msra.mxu0 0.0
    %2142 = vmatprep.subr.mxu0 0.0
    %2143 = vmatpush1.msra.mxu0 0.0
    %2144 = vmatprep.subr.mxu0 0.0
    %2145 = vmatpush1.msra.mxu0 0.0
    %2146 = vmatprep.subr.mxu0 0.0
    %2147 = vmatpush1.msra.mxu0 0.0
    %2148 = vmatprep.subr.mxu0 0.0
    %2149 = vmatpush1.msra.mxu0 0.0
    %2150 = vmatprep.subr.mxu0 0.0
    %2151 = vmatpush1.msra.mxu0 0.0
    %2152 = vmatprep.subr.mxu0 0.0
    %2153 = vmatpush1.msra.mxu0 0.0
    %2154 = vmatprep.subr.mxu0 0.0
    %2155 = vmatpush1.msra.mxu0 0.0
    %2156 = vmatprep.subr.mxu0 0.0
    %2157 = vmatpush1.msra.mxu0 0.0
    %2158 = vmatprep.mubr.f32.mxu0 0.0
    %2159 = vmatmul.mubr.f32.gmra.mrb[0].mxu0 %v2092
    %v2160 = vpop.f32.mrb[0].mxu0
    %v2161 = vadd.f32 0.0, %v2160
    %v2162 = vpop.f32.mrb[0].mxu0
    %v2163 = vadd.f32 0.0, %v2162
    %2164 = vdwg.mxu0
    %2165 = vmatprep.subr.mxu0 %v501
    %2166 = vmatpush1.msra.mxu0 %v500
    %2167 = vmatprep.subr.mxu0 %v505
    %2168 = vmatpush1.msra.mxu0 %v504
    %2169 = vmatprep.subr.mxu0 %v509
    %2170 = vmatpush1.msra.mxu0 %v508
    %2171 = vmatprep.subr.mxu0 %v513
    %2172 = vmatpush1.msra.mxu0 %v512
    %2173 = vmatprep.subr.mxu0 %v517
    %2174 = vmatpush1.msra.mxu0 %v516
    %2175 = vmatprep.subr.mxu0 %v521
    %2176 = vmatpush1.msra.mxu0 %v520
    %2177 = vmatprep.subr.mxu0 %v525
    %2178 = vmatpush1.msra.mxu0 %v524
    %2179 = vmatprep.subr.mxu0 %v529
    %2180 = vmatpush1.msra.mxu0 %v528
    %2181 = vmatprep.subr.mxu0 %v533
    %2182 = vmatpush1.msra.mxu0 %v532
    %2183 = vmatprep.subr.mxu0 %v537
    %2184 = vmatpush1.msra.mxu0 %v536
    %2185 = vmatprep.subr.mxu0 %v541
    %2186 = vmatpush1.msra.mxu0 %v540
    %2187 = vmatprep.subr.mxu0 %v545
    %2188 = vmatpush1.msra.mxu0 %v544
    %2189 = vmatprep.subr.mxu0 %v549
    %2190 = vmatpush1.msra.mxu0 %v548
    %2191 = vmatprep.subr.mxu0 %v553
    %2192 = vmatpush1.msra.mxu0 %v552
    %2193 = vmatprep.subr.mxu0 %v557
    %2194 = vmatpush1.msra.mxu0 %v556
    %2195 = vmatprep.subr.mxu0 %v561
    %2196 = vmatpush1.msra.mxu0 %v560
    %2197 = vmatprep.subr.mxu0 0.0
    %2198 = vmatpush1.msra.mxu0 0.0
    %2199 = vmatprep.subr.mxu0 0.0
    %2200 = vmatpush1.msra.mxu0 0.0
    %2201 = vmatprep.subr.mxu0 0.0
    %2202 = vmatpush1.msra.mxu0 0.0
    %2203 = vmatprep.subr.mxu0 0.0
    %2204 = vmatpush1.msra.mxu0 0.0
    %2205 = vmatprep.subr.mxu0 0.0
    %2206 = vmatpush1.msra.mxu0 0.0
    %2207 = vmatprep.subr.mxu0 0.0
    %2208 = vmatpush1.msra.mxu0 0.0
    %2209 = vmatprep.subr.mxu0 0.0
    %2210 = vmatpush1.msra.mxu0 0.0
    %2211 = vmatprep.subr.mxu0 0.0
    %2212 = vmatpush1.msra.mxu0 0.0
    %2213 = vmatprep.subr.mxu0 0.0
    %2214 = vmatpush1.msra.mxu0 0.0
    %2215 = vmatprep.subr.mxu0 0.0
    %2216 = vmatpush1.msra.mxu0 0.0
    %2217 = vmatprep.subr.mxu0 0.0
    %2218 = vmatpush1.msra.mxu0 0.0
    %2219 = vmatprep.subr.mxu0 0.0
    %2220 = vmatpush1.msra.mxu0 0.0
    %2221 = vmatprep.subr.mxu0 0.0
    %2222 = vmatpush1.msra.mxu0 0.0
    %2223 = vmatprep.subr.mxu0 0.0
    %2224 = vmatpush1.msra.mxu0 0.0
    %2225 = vmatprep.subr.mxu0 0.0
    %2226 = vmatpush1.msra.mxu0 0.0
    %2227 = vmatprep.subr.mxu0 0.0
    %2228 = vmatpush1.msra.mxu0 0.0
    %2229 = vmatprep.mubr.f32.mxu0 0.0
    %2230 = vmatmul.mubr.f32.gmra.mrb[0].mxu0 %v2092
    %v2231 = vpop.f32.mrb[0].mxu0
    %v2232 = vadd.f32 0.0, %v2231
    %v2233 = vpop.f32.mrb[0].mxu0
    %v2234 = vadd.f32 0.0, %v2233
    %2235 = vdwg.mxu0
    %v2236 = vadd.f32 %v263, %v2161
    %v2237 = vadd.f32 %v265, %v2163
    %v2238 = vadd.f32 %v340, %v2232
    %v2239 = vadd.f32 %v342, %v2234
    %v2240 = vxor.u32 %v2236, 2147483648
    %v2241 = vmul.f32 %v2240, 1.442695
    %v2242 = vpow.pop %v2241
    %v2243 = vadd.f32 %v2242, 1.0
    %v2244 = vrcp.pop %v2243
    %v2245 = vmul.f32 1.0, %v2244
    %v2246 = vxor.u32 %v2237, 2147483648
    %v2247 = vmul.f32 %v2246, 1.442695
    %v2248 = vpow.pop %v2247
    %v2249 = vadd.f32 %v2248, 1.0
    %v2250 = vrcp.pop %v2249
    %v2251 = vmul.f32 1.0, %v2250
    %v2252 = vtanh.pop %v2238
    %v2253 = vxor.u32 %v2239, 2147483648
    %v2254 = vmul.f32 %v2253, 1.442695
    %v2255 = vpow.pop %v2254
    %v2256 = vadd.f32 %v2255, 1.0
    %v2257 = vrcp.pop %v2256
    %v2258 = vmul.f32 1.0, %v2257
    %v2260 = vrot.slane %v1912, 6
    %v2262 = vmul.f32 %v2251, %v2260
    %v2263 = vmul.f32 %v2245, %v2252
    %v2264 = vadd.f32 %v2262, %v2263
    %v2265 = vtanh.pop %v2264
    %v2266 = vmul.f32 %v2258, %v2265
    %2267 = vmatprep.subr.mxu0 %v563
    %2268 = vmatpush1.msra.mxu0 %v562
    %2269 = vmatprep.subr.mxu0 %v567
    %2270 = vmatpush1.msra.mxu0 %v566
    %2271 = vmatprep.subr.mxu0 %v571
    %2272 = vmatpush1.msra.mxu0 %v570
    %2273 = vmatprep.subr.mxu0 %v575
    %2274 = vmatpush1.msra.mxu0 %v574
    %2275 = vmatprep.subr.mxu0 %v579
    %2276 = vmatpush1.msra.mxu0 %v578
    %2277 = vmatprep.subr.mxu0 %v583
    %2278 = vmatpush1.msra.mxu0 %v582
    %2279 = vmatprep.subr.mxu0 %v587
    %2280 = vmatpush1.msra.mxu0 %v586
    %2281 = vmatprep.subr.mxu0 %v591
    %2282 = vmatpush1.msra.mxu0 %v590
    %2283 = vmatprep.subr.mxu0 %v595
    %2284 = vmatpush1.msra.mxu0 %v594
    %2285 = vmatprep.subr.mxu0 %v599
    %2286 = vmatpush1.msra.mxu0 %v598
    %2287 = vmatprep.subr.mxu0 %v603
    %2288 = vmatpush1.msra.mxu0 %v602
    %2289 = vmatprep.subr.mxu0 %v607
    %2290 = vmatpush1.msra.mxu0 %v606
    %2291 = vmatprep.subr.mxu0 %v611
    %2292 = vmatpush1.msra.mxu0 %v610
    %2293 = vmatprep.subr.mxu0 %v615
    %2294 = vmatpush1.msra.mxu0 %v614
    %2295 = vmatprep.subr.mxu0 %v619
    %2296 = vmatpush1.msra.mxu0 %v618
    %2297 = vmatprep.subr.mxu0 %v623
    %2298 = vmatpush1.msra.mxu0 %v622
    %2299 = vmatprep.subr.mxu0 0.0
    %2300 = vmatpush1.msra.mxu0 0.0
    %2301 = vmatprep.subr.mxu0 0.0
    %2302 = vmatpush1.msra.mxu0 0.0
    %2303 = vmatprep.subr.mxu0 0.0
    %2304 = vmatpush1.msra.mxu0 0.0
    %2305 = vmatprep.subr.mxu0 0.0
    %2306 = vmatpush1.msra.mxu0 0.0
    %2307 = vmatprep.subr.mxu0 0.0
    %2308 = vmatpush1.msra.mxu0 0.0
    %2309 = vmatprep.subr.mxu0 0.0
    %2310 = vmatpush1.msra.mxu0 0.0
    %2311 = vmatprep.subr.mxu0 0.0
    %2312 = vmatpush1.msra.mxu0 0.0
    %2313 = vmatprep.subr.mxu0 0.0
    %2314 = vmatpush1.msra.mxu0 0.0
    %2315 = vmatprep.subr.mxu0 0.0
    %2316 = vmatpush1.msra.mxu0 0.0
    %2317 = vmatprep.subr.mxu0 0.0
    %2318 = vmatpush1.msra.mxu0 0.0
    %2319 = vmatprep.subr.mxu0 0.0
    %2320 = vmatpush1.msra.mxu0 0.0
    %2321 = vmatprep.subr.mxu0 0.0
    %2322 = vmatpush1.msra.mxu0 0.0
    %2323 = vmatprep.subr.mxu0 0.0
    %2324 = vmatpush1.msra.mxu0 0.0
    %2325 = vmatprep.subr.mxu0 0.0
    %2326 = vmatpush1.msra.mxu0 0.0
    %2327 = vmatprep.subr.mxu0 0.0
    %2328 = vmatpush1.msra.mxu0 0.0
    %2329 = vmatprep.subr.mxu0 0.0
    %2330 = vmatpush1.msra.mxu0 0.0
    %2331 = vmatprep.mubr.f32.mxu0 0.0
    %2332 = vmatmul.mubr.f32.gmra.mrb[0].mxu0 %v2090
    %v2333 = vpop.f32.mrb[0].mxu0
    %v2334 = vadd.f32 0.0, %v2333
    %v2335 = vpop.f32.mrb[0].mxu0
    %v2336 = vadd.f32 0.0, %v2335
    %2337 = vdwg.mxu0
    %2338 = vmatprep.subr.mxu0 %v565
    %2339 = vmatpush1.msra.mxu0 %v564
    %2340 = vmatprep.subr.mxu0 %v569
    %2341 = vmatpush1.msra.mxu0 %v568
    %2342 = vmatprep.subr.mxu0 %v573
    %2343 = vmatpush1.msra.mxu0 %v572
    %2344 = vmatprep.subr.mxu0 %v577
    %2345 = vmatpush1.msra.mxu0 %v576
    %2346 = vmatprep.subr.mxu0 %v581
    %2347 = vmatpush1.msra.mxu0 %v580
    %2348 = vmatprep.subr.mxu0 %v585
    %2349 = vmatpush1.msra.mxu0 %v584
    %2350 = vmatprep.subr.mxu0 %v589
    %2351 = vmatpush1.msra.mxu0 %v588
    %2352 = vmatprep.subr.mxu0 %v593
    %2353 = vmatpush1.msra.mxu0 %v592
    %2354 = vmatprep.subr.mxu0 %v597
    %2355 = vmatpush1.msra.mxu0 %v596
    %2356 = vmatprep.subr.mxu0 %v601
    %2357 = vmatpush1.msra.mxu0 %v600
    %2358 = vmatprep.subr.mxu0 %v605
    %2359 = vmatpush1.msra.mxu0 %v604
    %2360 = vmatprep.subr.mxu0 %v609
    %2361 = vmatpush1.msra.mxu0 %v608
    %2362 = vmatprep.subr.mxu0 %v613
    %2363 = vmatpush1.msra.mxu0 %v612
    %2364 = vmatprep.subr.mxu0 %v617
    %2365 = vmatpush1.msra.mxu0 %v616
    %2366 = vmatprep.subr.mxu0 %v621
    %2367 = vmatpush1.msra.mxu0 %v620
    %2368 = vmatprep.subr.mxu0 %v625
    %2369 = vmatpush1.msra.mxu0 %v624
    %2370 = vmatprep.subr.mxu0 0.0
    %2371 = vmatpush1.msra.mxu0 0.0
    %2372 = vmatprep.subr.mxu0 0.0
    %2373 = vmatpush1.msra.mxu0 0.0
    %2374 = vmatprep.subr.mxu0 0.0
    %2375 = vmatpush1.msra.mxu0 0.0
    %2376 = vmatprep.subr.mxu0 0.0
    %2377 = vmatpush1.msra.mxu0 0.0
    %2378 = vmatprep.subr.mxu0 0.0
    %2379 = vmatpush1.msra.mxu0 0.0
    %2380 = vmatprep.subr.mxu0 0.0
    %2381 = vmatpush1.msra.mxu0 0.0
    %2382 = vmatprep.subr.mxu0 0.0
    %2383 = vmatpush1.msra.mxu0 0.0
    %2384 = vmatprep.subr.mxu0 0.0
    %2385 = vmatpush1.msra.mxu0 0.0
    %2386 = vmatprep.subr.mxu0 0.0
    %2387 = vmatpush1.msra.mxu0 0.0
    %2388 = vmatprep.subr.mxu0 0.0
    %2389 = vmatpush1.msra.mxu0 0.0
    %2390 = vmatprep.subr.mxu0 0.0
    %2391 = vmatpush1.msra.mxu0 0.0
    %2392 = vmatprep.subr.mxu0 0.0
    %2393 = vmatpush1.msra.mxu0 0.0
    %2394 = vmatprep.subr.mxu0 0.0
    %2395 = vmatpush1.msra.mxu0 0.0
    %2396 = vmatprep.subr.mxu0 0.0
    %2397 = vmatpush1.msra.mxu0 0.0
    %2398 = vmatprep.subr.mxu0 0.0
    %2399 = vmatpush1.msra.mxu0 0.0
    %2400 = vmatprep.subr.mxu0 0.0
    %2401 = vmatpush1.msra.mxu0 0.0
    %2402 = vmatprep.mubr.f32.mxu0 0.0
    %2403 = vmatmul.mubr.f32.gmra.mrb[0].mxu0 %v2090
    %v2404 = vpop.f32.mrb[0].mxu0
    %v2405 = vadd.f32 0.0, %v2404
    %v2406 = vpop.f32.mrb[0].mxu0
    %v2407 = vadd.f32 0.0, %v2406
    %2408 = vdwg.mxu0
    %v2413 = vrot.slane %v2334, 2
    %v2414 = vrot.slane %v2336, 2
    %v2415 = vrot.slane %v2405, 2
    %v2416 = vrot.slane %v2407, 2
    %v2421 = vadd.f32 %v411, %v2413
    %v2422 = vadd.f32 %v413, %v2414
    %v2423 = vadd.f32 %v488, %v2415
    %v2424 = vadd.f32 %v490, %v2416
    %v2425 = vxor.u32 %v2421, 2147483648
    %v2426 = vmul.f32 %v2425, 1.442695
    %v2427 = vpow.pop %v2426
    %v2428 = vadd.f32 %v2427, 1.0
    %v2429 = vrcp.pop %v2428
    %v2430 = vmul.f32 1.0, %v2429
    %v2431 = vxor.u32 %v2422, 2147483648
    %v2432 = vmul.f32 %v2431, 1.442695
    %v2433 = vpow.pop %v2432
    %v2434 = vadd.f32 %v2433, 1.0
    %v2435 = vrcp.pop %v2434
    %v2436 = vmul.f32 1.0, %v2435
    %v2437 = vtanh.pop %v2423
    %v2438 = vxor.u32 %v2424, 2147483648
    %v2439 = vmul.f32 %v2438, 1.442695
    %v2440 = vpow.pop %v2439
    %v2441 = vadd.f32 %v2440, 1.0
    %v2442 = vrcp.pop %v2441
    %v2443 = vmul.f32 1.0, %v2442
    %v2445 = vrot.slane %v2088, 2
    %v2447 = vmul.f32 %v2436, %v2445
    %v2448 = vmul.f32 %v2430, %v2437
    %v2449 = vadd.f32 %v2447, %v2448
    %v2450 = vtanh.pop %v2449
    %v2451 = vmul.f32 %v2443, %v2450
    %2452 = vmatprep.subr.mxu0 %v499
    %2453 = vmatpush1.msra.mxu0 %v498
    %2454 = vmatprep.subr.mxu0 %v503
    %2455 = vmatpush1.msra.mxu0 %v502
    %2456 = vmatprep.subr.mxu0 %v507
    %2457 = vmatpush1.msra.mxu0 %v506
    %2458 = vmatprep.subr.mxu0 %v511
    %2459 = vmatpush1.msra.mxu0 %v510
    %2460 = vmatprep.subr.mxu0 %v515
    %2461 = vmatpush1.msra.mxu0 %v514
    %2462 = vmatprep.subr.mxu0 %v519
    %2463 = vmatpush1.msra.mxu0 %v518
    %2464 = vmatprep.subr.mxu0 %v523
    %2465 = vmatpush1.msra.mxu0 %v522
    %2466 = vmatprep.subr.mxu0 %v527
    %2467 = vmatpush1.msra.mxu0 %v526
    %2468 = vmatprep.subr.mxu0 %v531
    %2469 = vmatpush1.msra.mxu0 %v530
    %2470 = vmatprep.subr.mxu0 %v535
    %2471 = vmatpush1.msra.mxu0 %v534
    %2472 = vmatprep.subr.mxu0 %v539
    %2473 = vmatpush1.msra.mxu0 %v538
    %2474 = vmatprep.subr.mxu0 %v543
    %2475 = vmatpush1.msra.mxu0 %v542
    %2476 = vmatprep.subr.mxu0 %v547
    %2477 = vmatpush1.msra.mxu0 %v546
    %2478 = vmatprep.subr.mxu0 %v551
    %2479 = vmatpush1.msra.mxu0 %v550
    %2480 = vmatprep.subr.mxu0 %v555
    %2481 = vmatpush1.msra.mxu0 %v554
    %2482 = vmatprep.subr.mxu0 %v559
    %2483 = vmatpush1.msra.mxu0 %v558
    %2484 = vmatprep.subr.mxu0 0.0
    %2485 = vmatpush1.msra.mxu0 0.0
    %2486 = vmatprep.subr.mxu0 0.0
    %2487 = vmatpush1.msra.mxu0 0.0
    %2488 = vmatprep.subr.mxu0 0.0
    %2489 = vmatpush1.msra.mxu0 0.0
    %2490 = vmatprep.subr.mxu0 0.0
    %2491 = vmatpush1.msra.mxu0 0.0
    %2492 = vmatprep.subr.mxu0 0.0
    %2493 = vmatpush1.msra.mxu0 0.0
    %2494 = vmatprep.subr.mxu0 0.0
    %2495 = vmatpush1.msra.mxu0 0.0
    %2496 = vmatprep.subr.mxu0 0.0
    %2497 = vmatpush1.msra.mxu0 0.0
    %2498 = vmatprep.subr.mxu0 0.0
    %2499 = vmatpush1.msra.mxu0 0.0
    %2500 = vmatprep.subr.mxu0 0.0
    %2501 = vmatpush1.msra.mxu0 0.0
    %2502 = vmatprep.subr.mxu0 0.0
    %2503 = vmatpush1.msra.mxu0 0.0
    %2504 = vmatprep.subr.mxu0 0.0
    %2505 = vmatpush1.msra.mxu0 0.0
    %2506 = vmatprep.subr.mxu0 0.0
    %2507 = vmatpush1.msra.mxu0 0.0
    %2508 = vmatprep.subr.mxu0 0.0
    %2509 = vmatpush1.msra.mxu0 0.0
    %2510 = vmatprep.subr.mxu0 0.0
    %2511 = vmatpush1.msra.mxu0 0.0
    %2512 = vmatprep.subr.mxu0 0.0
    %2513 = vmatpush1.msra.mxu0 0.0
    %2514 = vmatprep.subr.mxu0 0.0
    %2515 = vmatpush1.msra.mxu0 0.0
    %2516 = vmatprep.mubr.f32.mxu0 0.0
    %2517 = vmatmul.mubr.f32.gmra.mrb[0].mxu0 %v2266
    %v2518 = vpop.f32.mrb[0].mxu0
    %v2519 = vadd.f32 0.0, %v2518
    %v2520 = vpop.f32.mrb[0].mxu0
    %v2521 = vadd.f32 0.0, %v2520
    %2522 = vdwg.mxu0
    %2523 = vmatprep.subr.mxu0 %v501
    %2524 = vmatpush1.msra.mxu0 %v500
    %2525 = vmatprep.subr.mxu0 %v505
    %2526 = vmatpush1.msra.mxu0 %v504
    %2527 = vmatprep.subr.mxu0 %v509
    %2528 = vmatpush1.msra.mxu0 %v508
    %2529 = vmatprep.subr.mxu0 %v513
    %2530 = vmatpush1.msra.mxu0 %v512
    %2531 = vmatprep.subr.mxu0 %v517
    %2532 = vmatpush1.msra.mxu0 %v516
    %2533 = vmatprep.subr.mxu0 %v521
    %2534 = vmatpush1.msra.mxu0 %v520
    %2535 = vmatprep.subr.mxu0 %v525
    %2536 = vmatpush1.msra.mxu0 %v524
    %2537 = vmatprep.subr.mxu0 %v529
    %2538 = vmatpush1.msra.mxu0 %v528
    %2539 = vmatprep.subr.mxu0 %v533
    %2540 = vmatpush1.msra.mxu0 %v532
    %2541 = vmatprep.subr.mxu0 %v537
    %2542 = vmatpush1.msra.mxu0 %v536
    %2543 = vmatprep.subr.mxu0 %v541
    %2544 = vmatpush1.msra.mxu0 %v540
    %2545 = vmatprep.subr.mxu0 %v545
    %2546 = vmatpush1.msra.mxu0 %v544
    %2547 = vmatprep.subr.mxu0 %v549
    %2548 = vmatpush1.msra.mxu0 %v548
    %2549 = vmatprep.subr.mxu0 %v553
    %2550 = vmatpush1.msra.mxu0 %v552
    %2551 = vmatprep.subr.mxu0 %v557
    %2552 = vmatpush1.msra.mxu0 %v556
    %2553 = vmatprep.subr.mxu0 %v561
    %2554 = vmatpush1.msra.mxu0 %v560
    %2555 = vmatprep.subr.mxu0 0.0
    %2556 = vmatpush1.msra.mxu0 0.0
    %2557 = vmatprep.subr.mxu0 0.0
    %2558 = vmatpush1.msra.mxu0 0.0
    %2559 = vmatprep.subr.mxu0 0.0
    %2560 = vmatpush1.msra.mxu0 0.0
    %2561 = vmatprep.subr.mxu0 0.0
    %2562 = vmatpush1.msra.mxu0 0.0
    %2563 = vmatprep.subr.mxu0 0.0
    %2564 = vmatpush1.msra.mxu0 0.0
    %2565 = vmatprep.subr.mxu0 0.0
    %2566 = vmatpush1.msra.mxu0 0.0
    %2567 = vmatprep.subr.mxu0 0.0
    %2568 = vmatpush1.msra.mxu0 0.0
    %2569 = vmatprep.subr.mxu0 0.0
    %2570 = vmatpush1.msra.mxu0 0.0
    %2571 = vmatprep.subr.mxu0 0.0
    %2572 = vmatpush1.msra.mxu0 0.0
    %2573 = vmatprep.subr.mxu0 0.0
    %2574 = vmatpush1.msra.mxu0 0.0
    %2575 = vmatprep.subr.mxu0 0.0
    %2576 = vmatpush1.msra.mxu0 0.0
    %2577 = vmatprep.subr.mxu0 0.0
    %2578 = vmatpush1.msra.mxu0 0.0
    %2579 = vmatprep.subr.mxu0 0.0
    %2580 = vmatpush1.msra.mxu0 0.0
    %2581 = vmatprep.subr.mxu0 0.0
    %2582 = vmatpush1.msra.mxu0 0.0
    %2583 = vmatprep.subr.mxu0 0.0
    %2584 = vmatpush1.msra.mxu0 0.0
    %2585 = vmatprep.subr.mxu0 0.0
    %2586 = vmatpush1.msra.mxu0 0.0
    %2587 = vmatprep.mubr.f32.mxu0 0.0
    %2588 = vmatmul.mubr.f32.gmra.mrb[0].mxu0 %v2266
    %v2589 = vpop.f32.mrb[0].mxu0
    %v2590 = vadd.f32 0.0, %v2589
    %v2591 = vpop.f32.mrb[0].mxu0
    %v2592 = vadd.f32 0.0, %v2591
    %2593 = vdwg.mxu0
    %v2598 = vrot.slane %v2519, 6
    %v2599 = vrot.slane %v2521, 6
    %v2600 = vrot.slane %v2590, 6
    %v2601 = vrot.slane %v2592, 6
    %v2606 = vadd.f32 %v263, %v2598
    %v2607 = vadd.f32 %v265, %v2599
    %v2608 = vadd.f32 %v340, %v2600
    %v2609 = vadd.f32 %v342, %v2601
    %v2610 = vxor.u32 %v2606, 2147483648
    %v2611 = vmul.f32 %v2610, 1.442695
    %v2612 = vpow.pop %v2611
    %v2613 = vadd.f32 %v2612, 1.0
    %v2614 = vrcp.pop %v2613
    %v2615 = vmul.f32 1.0, %v2614
    %v2616 = vxor.u32 %v2607, 2147483648
    %v2617 = vmul.f32 %v2616, 1.442695
    %v2618 = vpow.pop %v2617
    %v2619 = vadd.f32 %v2618, 1.0
    %v2620 = vrcp.pop %v2619
    %v2621 = vmul.f32 1.0, %v2620
    %v2622 = vtanh.pop %v2608
    %v2623 = vxor.u32 %v2609, 2147483648
    %v2624 = vmul.f32 %v2623, 1.442695
    %v2625 = vpow.pop %v2624
    %v2626 = vadd.f32 %v2625, 1.0
    %v2627 = vrcp.pop %v2626
    %v2628 = vmul.f32 1.0, %v2627
    %v2630 = vrot.slane %v2264, 6
    %v2632 = vmul.f32 %v2621, %v2630
    %v2633 = vmul.f32 %v2615, %v2622
    %v2634 = vadd.f32 %v2632, %v2633
    %v2635 = vtanh.pop %v2634
    %v2636 = vmul.f32 %v2628, %v2635
    %v2638 = vrot.slane %v2451, 6
    %2640 = vmatprep.subr.mxu0 %v563
    %2641 = vmatpush1.msra.mxu0 %v562
    %2642 = vmatprep.subr.mxu0 %v567
    %2643 = vmatpush1.msra.mxu0 %v566
    %2644 = vmatprep.subr.mxu0 %v571
    %2645 = vmatpush1.msra.mxu0 %v570
    %2646 = vmatprep.subr.mxu0 %v575
    %2647 = vmatpush1.msra.mxu0 %v574
    %2648 = vmatprep.subr.mxu0 %v579
    %2649 = vmatpush1.msra.mxu0 %v578
    %2650 = vmatprep.subr.mxu0 %v583
    %2651 = vmatpush1.msra.mxu0 %v582
    %2652 = vmatprep.subr.mxu0 %v587
    %2653 = vmatpush1.msra.mxu0 %v586
    %2654 = vmatprep.subr.mxu0 %v591
    %2655 = vmatpush1.msra.mxu0 %v590
    %2656 = vmatprep.subr.mxu0 %v595
    %2657 = vmatpush1.msra.mxu0 %v594
    %2658 = vmatprep.subr.mxu0 %v599
    %2659 = vmatpush1.msra.mxu0 %v598
    %2660 = vmatprep.subr.mxu0 %v603
    %2661 = vmatpush1.msra.mxu0 %v602
    %2662 = vmatprep.subr.mxu0 %v607
    %2663 = vmatpush1.msra.mxu0 %v606
    %2664 = vmatprep.subr.mxu0 %v611
    %2665 = vmatpush1.msra.mxu0 %v610
    %2666 = vmatprep.subr.mxu0 %v615
    %2667 = vmatpush1.msra.mxu0 %v614
    %2668 = vmatprep.subr.mxu0 %v619
    %2669 = vmatpush1.msra.mxu0 %v618
    %2670 = vmatprep.subr.mxu0 %v623
    %2671 = vmatpush1.msra.mxu0 %v622
    %2672 = vmatprep.subr.mxu0 0.0
    %2673 = vmatpush1.msra.mxu0 0.0
    %2674 = vmatprep.subr.mxu0 0.0
    %2675 = vmatpush1.msra.mxu0 0.0
    %2676 = vmatprep.subr.mxu0 0.0
    %2677 = vmatpush1.msra.mxu0 0.0
    %2678 = vmatprep.subr.mxu0 0.0
    %2679 = vmatpush1.msra.mxu0 0.0
    %2680 = vmatprep.subr.mxu0 0.0
    %2681 = vmatpush1.msra.mxu0 0.0
    %2682 = vmatprep.subr.mxu0 0.0
    %2683 = vmatpush1.msra.mxu0 0.0
    %2684 = vmatprep.subr.mxu0 0.0
    %2685 = vmatpush1.msra.mxu0 0.0
    %2686 = vmatprep.subr.mxu0 0.0
    %2687 = vmatpush1.msra.mxu0 0.0
    %2688 = vmatprep.subr.mxu0 0.0
    %2689 = vmatpush1.msra.mxu0 0.0
    %2690 = vmatprep.subr.mxu0 0.0
    %2691 = vmatpush1.msra.mxu0 0.0
    %2692 = vmatprep.subr.mxu0 0.0
    %2693 = vmatpush1.msra.mxu0 0.0
    %2694 = vmatprep.subr.mxu0 0.0
    %2695 = vmatpush1.msra.mxu0 0.0
    %2696 = vmatprep.subr.mxu0 0.0
    %2697 = vmatpush1.msra.mxu0 0.0
    %2698 = vmatprep.subr.mxu0 0.0
    %2699 = vmatpush1.msra.mxu0 0.0
    %2700 = vmatprep.subr.mxu0 0.0
    %2701 = vmatpush1.msra.mxu0 0.0
    %2702 = vmatprep.subr.mxu0 0.0
    %2703 = vmatpush1.msra.mxu0 0.0
    %2704 = vmatprep.mubr.f32.mxu0 0.0
    %2705 = vmatmul.mubr.f32.gmra.mrb[0].mxu0 %v2638
    %v2706 = vpop.f32.mrb[0].mxu0
    %v2707 = vadd.f32 0.0, %v2706
    %v2708 = vpop.f32.mrb[0].mxu0
    %v2709 = vadd.f32 0.0, %v2708
    %2710 = vdwg.mxu0
    %2711 = vmatprep.subr.mxu0 %v565
    %2712 = vmatpush1.msra.mxu0 %v564
    %2713 = vmatprep.subr.mxu0 %v569
    %2714 = vmatpush1.msra.mxu0 %v568
    %2715 = vmatprep.subr.mxu0 %v573
    %2716 = vmatpush1.msra.mxu0 %v572
    %2717 = vmatprep.subr.mxu0 %v577
    %2718 = vmatpush1.msra.mxu0 %v576
    %2719 = vmatprep.subr.mxu0 %v581
    %2720 = vmatpush1.msra.mxu0 %v580
    %2721 = vmatprep.subr.mxu0 %v585
    %2722 = vmatpush1.msra.mxu0 %v584
    %2723 = vmatprep.subr.mxu0 %v589
    %2724 = vmatpush1.msra.mxu0 %v588
    %2725 = vmatprep.subr.mxu0 %v593
    %2726 = vmatpush1.msra.mxu0 %v592
    %2727 = vmatprep.subr.mxu0 %v597
    %2728 = vmatpush1.msra.mxu0 %v596
    %2729 = vmatprep.subr.mxu0 %v601
    %2730 = vmatpush1.msra.mxu0 %v600
    %2731 = vmatprep.subr.mxu0 %v605
    %2732 = vmatpush1.msra.mxu0 %v604
    %2733 = vmatprep.subr.mxu0 %v609
    %2734 = vmatpush1.msra.mxu0 %v608
    %2735 = vmatprep.subr.mxu0 %v613
    %2736 = vmatpush1.msra.mxu0 %v612
    %2737 = vmatprep.subr.mxu0 %v617
    %2738 = vmatpush1.msra.mxu0 %v616
    %2739 = vmatprep.subr.mxu0 %v621
    %2740 = vmatpush1.msra.mxu0 %v620
    %2741 = vmatprep.subr.mxu0 %v625
    %2742 = vmatpush1.msra.mxu0 %v624
    %2743 = vmatprep.subr.mxu0 0.0
    %2744 = vmatpush1.msra.mxu0 0.0
    %2745 = vmatprep.subr.mxu0 0.0
    %2746 = vmatpush1.msra.mxu0 0.0
    %2747 = vmatprep.subr.mxu0 0.0
    %2748 = vmatpush1.msra.mxu0 0.0
    %2749 = vmatprep.subr.mxu0 0.0
    %2750 = vmatpush1.msra.mxu0 0.0
    %2751 = vmatprep.subr.mxu0 0.0
    %2752 = vmatpush1.msra.mxu0 0.0
    %2753 = vmatprep.subr.mxu0 0.0
    %2754 = vmatpush1.msra.mxu0 0.0
    %2755 = vmatprep.subr.mxu0 0.0
    %2756 = vmatpush1.msra.mxu0 0.0
    %2757 = vmatprep.subr.mxu0 0.0
    %2758 = vmatpush1.msra.mxu0 0.0
    %2759 = vmatprep.subr.mxu0 0.0
    %2760 = vmatpush1.msra.mxu0 0.0
    %2761 = vmatprep.subr.mxu0 0.0
    %2762 = vmatpush1.msra.mxu0 0.0
    %2763 = vmatprep.subr.mxu0 0.0
    %2764 = vmatpush1.msra.mxu0 0.0
    %2765 = vmatprep.subr.mxu0 0.0
    %2766 = vmatpush1.msra.mxu0 0.0
    %2767 = vmatprep.subr.mxu0 0.0
    %2768 = vmatpush1.msra.mxu0 0.0
    %2769 = vmatprep.subr.mxu0 0.0
    %2770 = vmatpush1.msra.mxu0 0.0
    %2771 = vmatprep.subr.mxu0 0.0
    %2772 = vmatpush1.msra.mxu0 0.0
    %2773 = vmatprep.subr.mxu0 0.0
    %2774 = vmatpush1.msra.mxu0 0.0
    %2775 = vmatprep.mubr.f32.mxu0 0.0
    %2776 = vmatmul.mubr.f32.gmra.mrb[0].mxu0 %v2638
    %v2777 = vpop.f32.mrb[0].mxu0
    %v2778 = vadd.f32 0.0, %v2777
    %v2779 = vpop.f32.mrb[0].mxu0
    %v2780 = vadd.f32 0.0, %v2779
    %2781 = vdwg.mxu0
    %v2786 = vrot.slane %v2707, 4
    %v2787 = vrot.slane %v2709, 4
    %v2788 = vrot.slane %v2778, 4
    %v2789 = vrot.slane %v2780, 4
    %v2794 = vadd.f32 %v411, %v2786
    %v2795 = vadd.f32 %v413, %v2787
    %v2796 = vadd.f32 %v488, %v2788
    %v2797 = vadd.f32 %v490, %v2789
    %v2798 = vxor.u32 %v2794, 2147483648
    %v2799 = vmul.f32 %v2798, 1.442695
    %v2800 = vpow.pop %v2799
    %v2801 = vadd.f32 %v2800, 1.0
    %v2802 = vrcp.pop %v2801
    %v2803 = vmul.f32 1.0, %v2802
    %v2804 = vxor.u32 %v2795, 2147483648
    %v2805 = vmul.f32 %v2804, 1.442695
    %v2806 = vpow.pop %v2805
    %v2807 = vadd.f32 %v2806, 1.0
    %v2808 = vrcp.pop %v2807
    %v2809 = vmul.f32 1.0, %v2808
    %v2810 = vtanh.pop %v2796
    %v2811 = vxor.u32 %v2797, 2147483648
    %v2812 = vmul.f32 %v2811, 1.442695
    %v2813 = vpow.pop %v2812
    %v2814 = vadd.f32 %v2813, 1.0
    %v2815 = vrcp.pop %v2814
    %v2816 = vmul.f32 1.0, %v2815
    %v2818 = vrot.slane %v2449, 2
    %v2820 = vmul.f32 %v2809, %v2818
    %v2821 = vmul.f32 %v2803, %v2810
    %v2822 = vadd.f32 %v2820, %v2821
    %v2823 = vtanh.pop %v2822
    %v2824 = vmul.f32 %v2816, %v2823
    %v2826 = vrot.slane %v2636, 2
    %2828 = vmatprep.subr.mxu0 %v499
    %2829 = vmatpush1.msra.mxu0 %v498
    %2830 = vmatprep.subr.mxu0 %v503
    %2831 = vmatpush1.msra.mxu0 %v502
    %2832 = vmatprep.subr.mxu0 %v507
    %2833 = vmatpush1.msra.mxu0 %v506
    %2834 = vmatprep.subr.mxu0 %v511
    %2835 = vmatpush1.msra.mxu0 %v510
    %2836 = vmatprep.subr.mxu0 %v515
    %2837 = vmatpush1.msra.mxu0 %v514
    %2838 = vmatprep.subr.mxu0 %v519
    %2839 = vmatpush1.msra.mxu0 %v518
    %2840 = vmatprep.subr.mxu0 %v523
    %2841 = vmatpush1.msra.mxu0 %v522
    %2842 = vmatprep.subr.mxu0 %v527
    %2843 = vmatpush1.msra.mxu0 %v526
    %2844 = vmatprep.subr.mxu0 %v531
    %2845 = vmatpush1.msra.mxu0 %v530
    %2846 = vmatprep.subr.mxu0 %v535
    %2847 = vmatpush1.msra.mxu0 %v534
    %2848 = vmatprep.subr.mxu0 %v539
    %2849 = vmatpush1.msra.mxu0 %v538
    %2850 = vmatprep.subr.mxu0 %v543
    %2851 = vmatpush1.msra.mxu0 %v542
    %2852 = vmatprep.subr.mxu0 %v547
    %2853 = vmatpush1.msra.mxu0 %v546
    %2854 = vmatprep.subr.mxu0 %v551
    %2855 = vmatpush1.msra.mxu0 %v550
    %2856 = vmatprep.subr.mxu0 %v555
    %2857 = vmatpush1.msra.mxu0 %v554
    %2858 = vmatprep.subr.mxu0 %v559
    %2859 = vmatpush1.msra.mxu0 %v558
    %2860 = vmatprep.subr.mxu0 0.0
    %2861 = vmatpush1.msra.mxu0 0.0
    %2862 = vmatprep.subr.mxu0 0.0
    %2863 = vmatpush1.msra.mxu0 0.0
    %2864 = vmatprep.subr.mxu0 0.0
    %2865 = vmatpush1.msra.mxu0 0.0
    %2866 = vmatprep.subr.mxu0 0.0
    %2867 = vmatpush1.msra.mxu0 0.0
    %2868 = vmatprep.subr.mxu0 0.0
    %2869 = vmatpush1.msra.mxu0 0.0
    %2870 = vmatprep.subr.mxu0 0.0
    %2871 = vmatpush1.msra.mxu0 0.0
    %2872 = vmatprep.subr.mxu0 0.0
    %2873 = vmatpush1.msra.mxu0 0.0
    %2874 = vmatprep.subr.mxu0 0.0
    %2875 = vmatpush1.msra.mxu0 0.0
    %2876 = vmatprep.subr.mxu0 0.0
    %2877 = vmatpush1.msra.mxu0 0.0
    %2878 = vmatprep.subr.mxu0 0.0
    %2879 = vmatpush1.msra.mxu0 0.0
    %2880 = vmatprep.subr.mxu0 0.0
    %2881 = vmatpush1.msra.mxu0 0.0
    %2882 = vmatprep.subr.mxu0 0.0
    %2883 = vmatpush1.msra.mxu0 0.0
    %2884 = vmatprep.subr.mxu0 0.0
    %2885 = vmatpush1.msra.mxu0 0.0
    %2886 = vmatprep.subr.mxu0 0.0
    %2887 = vmatpush1.msra.mxu0 0.0
    %2888 = vmatprep.subr.mxu0 0.0
    %2889 = vmatpush1.msra.mxu0 0.0
    %2890 = vmatprep.subr.mxu0 0.0
    %2891 = vmatpush1.msra.mxu0 0.0
    %2892 = vmatprep.mubr.f32.mxu0 0.0
    %2893 = vmatmul.mubr.f32.gmra.mrb[0].mxu0 %v2826
    %v2894 = vpop.f32.mrb[0].mxu0
    %v2895 = vadd.f32 0.0, %v2894
    %v2896 = vpop.f32.mrb[0].mxu0
    %v2897 = vadd.f32 0.0, %v2896
    %2898 = vdwg.mxu0
    %2899 = vmatprep.subr.mxu0 %v501
    %2900 = vmatpush1.msra.mxu0 %v500
    %2901 = vmatprep.subr.mxu0 %v505
    %2902 = vmatpush1.msra.mxu0 %v504
    %2903 = vmatprep.subr.mxu0 %v509
    %2904 = vmatpush1.msra.mxu0 %v508
    %2905 = vmatprep.subr.mxu0 %v513
    %2906 = vmatpush1.msra.mxu0 %v512
    %2907 = vmatprep.subr.mxu0 %v517
    %2908 = vmatpush1.msra.mxu0 %v516
    %2909 = vmatprep.subr.mxu0 %v521
    %2910 = vmatpush1.msra.mxu0 %v520
    %2911 = vmatprep.subr.mxu0 %v525
    %2912 = vmatpush1.msra.mxu0 %v524
    %2913 = vmatprep.subr.mxu0 %v529
    %2914 = vmatpush1.msra.mxu0 %v528
    %2915 = vmatprep.subr.mxu0 %v533
    %2916 = vmatpush1.msra.mxu0 %v532
    %2917 = vmatprep.subr.mxu0 %v537
    %2918 = vmatpush1.msra.mxu0 %v536
    %2919 = vmatprep.subr.mxu0 %v541
    %2920 = vmatpush1.msra.mxu0 %v540
    %2921 = vmatprep.subr.mxu0 %v545
    %2922 = vmatpush1.msra.mxu0 %v544
    %2923 = vmatprep.subr.mxu0 %v549
    %2924 = vmatpush1.msra.mxu0 %v548
    %2925 = vmatprep.subr.mxu0 %v553
    %2926 = vmatpush1.msra.mxu0 %v552
    %2927 = vmatprep.subr.mxu0 %v557
    %2928 = vmatpush1.msra.mxu0 %v556
    %2929 = vmatprep.subr.mxu0 %v561
    %2930 = vmatpush1.msra.mxu0 %v560
    %2931 = vmatprep.subr.mxu0 0.0
    %2932 = vmatpush1.msra.mxu0 0.0
    %2933 = vmatprep.subr.mxu0 0.0
    %2934 = vmatpush1.msra.mxu0 0.0
    %2935 = vmatprep.subr.mxu0 0.0
    %2936 = vmatpush1.msra.mxu0 0.0
    %2937 = vmatprep.subr.mxu0 0.0
    %2938 = vmatpush1.msra.mxu0 0.0
    %2939 = vmatprep.subr.mxu0 0.0
    %2940 = vmatpush1.msra.mxu0 0.0
    %2941 = vmatprep.subr.mxu0 0.0
    %2942 = vmatpush1.msra.mxu0 0.0
    %2943 = vmatprep.subr.mxu0 0.0
    %2944 = vmatpush1.msra.mxu0 0.0
    %2945 = vmatprep.subr.mxu0 0.0
    %2946 = vmatpush1.msra.mxu0 0.0
    %2947 = vmatprep.subr.mxu0 0.0
    %2948 = vmatpush1.msra.mxu0 0.0
    %2949 = vmatprep.subr.mxu0 0.0
    %2950 = vmatpush1.msra.mxu0 0.0
    %2951 = vmatprep.subr.mxu0 0.0
    %2952 = vmatpush1.msra.mxu0 0.0
    %2953 = vmatprep.subr.mxu0 0.0
    %2954 = vmatpush1.msra.mxu0 0.0
    %2955 = vmatprep.subr.mxu0 0.0
    %2956 = vmatpush1.msra.mxu0 0.0
    %2957 = vmatprep.subr.mxu0 0.0
    %2958 = vmatpush1.msra.mxu0 0.0
    %2959 = vmatprep.subr.mxu0 0.0
    %2960 = vmatpush1.msra.mxu0 0.0
    %2961 = vmatprep.subr.mxu0 0.0
    %2962 = vmatpush1.msra.mxu0 0.0
    %2963 = vmatprep.mubr.f32.mxu0 0.0
    %2964 = vmatmul.mubr.f32.gmra.mrb[0].mxu0 %v2826
    %v2965 = vpop.f32.mrb[0].mxu0
    %v2966 = vadd.f32 0.0, %v2965
    %v2967 = vpop.f32.mrb[0].mxu0
    %v2968 = vadd.f32 0.0, %v2967
    %2969 = vdwg.mxu0
    %v2974 = vrot.slane %v2895, 4
    %v2975 = vrot.slane %v2897, 4
    %v2976 = vrot.slane %v2966, 4
    %v2977 = vrot.slane %v2968, 4
    %v2982 = vadd.f32 %v263, %v2974
    %v2983 = vadd.f32 %v265, %v2975
    %v2984 = vadd.f32 %v340, %v2976
    %v2985 = vadd.f32 %v342, %v2977
    %v2986 = vxor.u32 %v2982, 2147483648
    %v2987 = vmul.f32 %v2986, 1.442695
    %v2988 = vpow.pop %v2987
    %v2989 = vadd.f32 %v2988, 1.0
    %v2990 = vrcp.pop %v2989
    %v2991 = vmul.f32 1.0, %v2990
    %v2992 = vxor.u32 %v2983, 2147483648
    %v2993 = vmul.f32 %v2992, 1.442695
    %v2994 = vpow.pop %v2993
    %v2995 = vadd.f32 %v2994, 1.0
    %v2996 = vrcp.pop %v2995
    %v2997 = vmul.f32 1.0, %v2996
    %v2998 = vtanh.pop %v2984
    %v2999 = vxor.u32 %v2985, 2147483648
    %v3000 = vmul.f32 %v2999, 1.442695
    %v3001 = vpow.pop %v3000
    %v3002 = vadd.f32 %v3001, 1.0
    %v3003 = vrcp.pop %v3002
    %v3004 = vmul.f32 1.0, %v3003
    %v3006 = vrot.slane %v2634, 6
    %v3008 = vmul.f32 %v2997, %v3006
    %v3009 = vmul.f32 %v2991, %v2998
    %v3010 = vadd.f32 %v3008, %v3009
    %v3011 = vtanh.pop %v3010
    %v3012 = vmul.f32 %v3004, %v3011
    %v3014 = vrot.slane %v2824, 4
    %3016 = vmatprep.subr.mxu0 %v563
    %3017 = vmatpush1.msra.mxu0 %v562
    %3018 = vmatprep.subr.mxu0 %v567
    %3019 = vmatpush1.msra.mxu0 %v566
    %3020 = vmatprep.subr.mxu0 %v571
    %3021 = vmatpush1.msra.mxu0 %v570
    %3022 = vmatprep.subr.mxu0 %v575
    %3023 = vmatpush1.msra.mxu0 %v574
    %3024 = vmatprep.subr.mxu0 %v579
    %3025 = vmatpush1.msra.mxu0 %v578
    %3026 = vmatprep.subr.mxu0 %v583
    %3027 = vmatpush1.msra.mxu0 %v582
    %3028 = vmatprep.subr.mxu0 %v587
    %3029 = vmatpush1.msra.mxu0 %v586
    %3030 = vmatprep.subr.mxu0 %v591
    %3031 = vmatpush1.msra.mxu0 %v590
    %3032 = vmatprep.subr.mxu0 %v595
    %3033 = vmatpush1.msra.mxu0 %v594
    %3034 = vmatprep.subr.mxu0 %v599
    %3035 = vmatpush1.msra.mxu0 %v598
    %3036 = vmatprep.subr.mxu0 %v603
    %3037 = vmatpush1.msra.mxu0 %v602
    %3038 = vmatprep.subr.mxu0 %v607
    %3039 = vmatpush1.msra.mxu0 %v606
    %3040 = vmatprep.subr.mxu0 %v611
    %3041 = vmatpush1.msra.mxu0 %v610
    %3042 = vmatprep.subr.mxu0 %v615
    %3043 = vmatpush1.msra.mxu0 %v614
    %3044 = vmatprep.subr.mxu0 %v619
    %3045 = vmatpush1.msra.mxu0 %v618
    %3046 = vmatprep.subr.mxu0 %v623
    %3047 = vmatpush1.msra.mxu0 %v622
    %3048 = vmatprep.subr.mxu0 0.0
    %3049 = vmatpush1.msra.mxu0 0.0
    %3050 = vmatprep.subr.mxu0 0.0
    %3051 = vmatpush1.msra.mxu0 0.0
    %3052 = vmatprep.subr.mxu0 0.0
    %3053 = vmatpush1.msra.mxu0 0.0
    %3054 = vmatprep.subr.mxu0 0.0
    %3055 = vmatpush1.msra.mxu0 0.0
    %3056 = vmatprep.subr.mxu0 0.0
    %3057 = vmatpush1.msra.mxu0 0.0
    %3058 = vmatprep.subr.mxu0 0.0
    %3059 = vmatpush1.msra.mxu0 0.0
    %3060 = vmatprep.subr.mxu0 0.0
    %3061 = vmatpush1.msra.mxu0 0.0
    %3062 = vmatprep.subr.mxu0 0.0
    %3063 = vmatpush1.msra.mxu0 0.0
    %3064 = vmatprep.subr.mxu0 0.0
    %3065 = vmatpush1.msra.mxu0 0.0
    %3066 = vmatprep.subr.mxu0 0.0
    %3067 = vmatpush1.msra.mxu0 0.0
    %3068 = vmatprep.subr.mxu0 0.0
    %3069 = vmatpush1.msra.mxu0 0.0
    %3070 = vmatprep.subr.mxu0 0.0
    %3071 = vmatpush1.msra.mxu0 0.0
    %3072 = vmatprep.subr.mxu0 0.0
    %3073 = vmatpush1.msra.mxu0 0.0
    %3074 = vmatprep.subr.mxu0 0.0
    %3075 = vmatpush1.msra.mxu0 0.0
    %3076 = vmatprep.subr.mxu0 0.0
    %3077 = vmatpush1.msra.mxu0 0.0
    %3078 = vmatprep.subr.mxu0 0.0
    %3079 = vmatpush1.msra.mxu0 0.0
    %3080 = vmatprep.mubr.f32.mxu0 0.0
    %3081 = vmatmul.mubr.f32.gmra.mrb[0].mxu0 %v3014
    %v3082 = vpop.f32.mrb[0].mxu0
    %v3083 = vadd.f32 0.0, %v3082
    %v3084 = vpop.f32.mrb[0].mxu0
    %v3085 = vadd.f32 0.0, %v3084
    %3086 = vdwg.mxu0
    %3087 = vmatprep.subr.mxu0 %v565
    %3088 = vmatpush1.msra.mxu0 %v564
    %3089 = vmatprep.subr.mxu0 %v569
    %3090 = vmatpush1.msra.mxu0 %v568
    %3091 = vmatprep.subr.mxu0 %v573
    %3092 = vmatpush1.msra.mxu0 %v572
    %3093 = vmatprep.subr.mxu0 %v577
    %3094 = vmatpush1.msra.mxu0 %v576
    %3095 = vmatprep.subr.mxu0 %v581
    %3096 = vmatpush1.msra.mxu0 %v580
    %3097 = vmatprep.subr.mxu0 %v585
    %3098 = vmatpush1.msra.mxu0 %v584
    %3099 = vmatprep.subr.mxu0 %v589
    %3100 = vmatpush1.msra.mxu0 %v588
    %3101 = vmatprep.subr.mxu0 %v593
    %3102 = vmatpush1.msra.mxu0 %v592
    %3103 = vmatprep.subr.mxu0 %v597
    %3104 = vmatpush1.msra.mxu0 %v596
    %3105 = vmatprep.subr.mxu0 %v601
    %3106 = vmatpush1.msra.mxu0 %v600
    %3107 = vmatprep.subr.mxu0 %v605
    %3108 = vmatpush1.msra.mxu0 %v604
    %3109 = vmatprep.subr.mxu0 %v609
    %3110 = vmatpush1.msra.mxu0 %v608
    %3111 = vmatprep.subr.mxu0 %v613
    %3112 = vmatpush1.msra.mxu0 %v612
    %3113 = vmatprep.subr.mxu0 %v617
    %3114 = vmatpush1.msra.mxu0 %v616
    %3115 = vmatprep.subr.mxu0 %v621
    %3116 = vmatpush1.msra.mxu0 %v620
    %3117 = vmatprep.subr.mxu0 %v625
    %3118 = vmatpush1.msra.mxu0 %v624
    %3119 = vmatprep.subr.mxu0 0.0
    %3120 = vmatpush1.msra.mxu0 0.0
    %3121 = vmatprep.subr.mxu0 0.0
    %3122 = vmatpush1.msra.mxu0 0.0
    %3123 = vmatprep.subr.mxu0 0.0
    %3124 = vmatpush1.msra.mxu0 0.0
    %3125 = vmatprep.subr.mxu0 0.0
    %3126 = vmatpush1.msra.mxu0 0.0
    %3127 = vmatprep.subr.mxu0 0.0
    %3128 = vmatpush1.msra.mxu0 0.0
    %3129 = vmatprep.subr.mxu0 0.0
    %3130 = vmatpush1.msra.mxu0 0.0
    %3131 = vmatprep.subr.mxu0 0.0
    %3132 = vmatpush1.msra.mxu0 0.0
    %3133 = vmatprep.subr.mxu0 0.0
    %3134 = vmatpush1.msra.mxu0 0.0
    %3135 = vmatprep.subr.mxu0 0.0
    %3136 = vmatpush1.msra.mxu0 0.0
    %3137 = vmatprep.subr.mxu0 0.0
    %3138 = vmatpush1.msra.mxu0 0.0
    %3139 = vmatprep.subr.mxu0 0.0
    %3140 = vmatpush1.msra.mxu0 0.0
    %3141 = vmatprep.subr.mxu0 0.0
    %3142 = vmatpush1.msra.mxu0 0.0
    %3143 = vmatprep.subr.mxu0 0.0
    %3144 = vmatpush1.msra.mxu0 0.0
    %3145 = vmatprep.subr.mxu0 0.0
    %3146 = vmatpush1.msra.mxu0 0.0
    %3147 = vmatprep.subr.mxu0 0.0
    %3148 = vmatpush1.msra.mxu0 0.0
    %3149 = vmatprep.subr.mxu0 0.0
    %3150 = vmatpush1.msra.mxu0 0.0
    %3151 = vmatprep.mubr.f32.mxu0 0.0
    %3152 = vmatmul.mubr.f32.gmra.mrb[0].mxu0 %v3014
    %v3153 = vpop.f32.mrb[0].mxu0
    %v3154 = vadd.f32 0.0, %v3153
    %v3155 = vpop.f32.mrb[0].mxu0
    %v3156 = vadd.f32 0.0, %v3155
    %3157 = vdwg.mxu0
    %v3162 = vrot.slane %v3083, 6
    %v3163 = vrot.slane %v3085, 6
    %v3164 = vrot.slane %v3154, 6
    %v3165 = vrot.slane %v3156, 6
    %v3170 = vadd.f32 %v411, %v3162
    %v3171 = vadd.f32 %v413, %v3163
    %v3172 = vadd.f32 %v488, %v3164
    %v3173 = vadd.f32 %v490, %v3165
    %v3174 = vxor.u32 %v3170, 2147483648
    %v3175 = vmul.f32 %v3174, 1.442695
    %v3176 = vpow.pop %v3175
    %v3177 = vadd.f32 %v3176, 1.0
    %v3178 = vrcp.pop %v3177
    %v3179 = vmul.f32 1.0, %v3178
    %v3180 = vxor.u32 %v3171, 2147483648
    %v3181 = vmul.f32 %v3180, 1.442695
    %v3182 = vpow.pop %v3181
    %v3183 = vadd.f32 %v3182, 1.0
    %v3184 = vrcp.pop %v3183
    %v3185 = vmul.f32 1.0, %v3184
    %v3186 = vtanh.pop %v3172
    %v3187 = vxor.u32 %v3173, 2147483648
    %v3188 = vmul.f32 %v3187, 1.442695
    %v3189 = vpow.pop %v3188
    %v3190 = vadd.f32 %v3189, 1.0
    %v3191 = vrcp.pop %v3190
    %v3192 = vmul.f32 1.0, %v3191
    %v3194 = vrot.slane %v2822, 2
    %v3196 = vmul.f32 %v3185, %v3194
    %v3197 = vmul.f32 %v3179, %v3186
    %v3198 = vadd.f32 %v3196, %v3197
    %v3199 = vtanh.pop %v3198
    %v3200 = vmul.f32 %v3192, %v3199
    %v3202 = vrot.slane %v3012, 4
    %3204 = vmatprep.subr.mxu0 %v499
    %3205 = vmatpush1.msra.mxu0 %v498
    %3206 = vmatprep.subr.mxu0 %v503
    %3207 = vmatpush1.msra.mxu0 %v502
    %3208 = vmatprep.subr.mxu0 %v507
    %3209 = vmatpush1.msra.mxu0 %v506
    %3210 = vmatprep.subr.mxu0 %v511
    %3211 = vmatpush1.msra.mxu0 %v510
    %3212 = vmatprep.subr.mxu0 %v515
    %3213 = vmatpush1.msra.mxu0 %v514
    %3214 = vmatprep.subr.mxu0 %v519
    %3215 = vmatpush1.msra.mxu0 %v518
    %3216 = vmatprep.subr.mxu0 %v523
    %3217 = vmatpush1.msra.mxu0 %v522
    %3218 = vmatprep.subr.mxu0 %v527
    %3219 = vmatpush1.msra.mxu0 %v526
    %3220 = vmatprep.subr.mxu0 %v531
    %3221 = vmatpush1.msra.mxu0 %v530
    %3222 = vmatprep.subr.mxu0 %v535
    %3223 = vmatpush1.msra.mxu0 %v534
    %3224 = vmatprep.subr.mxu0 %v539
    %3225 = vmatpush1.msra.mxu0 %v538
    %3226 = vmatprep.subr.mxu0 %v543
    %3227 = vmatpush1.msra.mxu0 %v542
    %3228 = vmatprep.subr.mxu0 %v547
    %3229 = vmatpush1.msra.mxu0 %v546
    %3230 = vmatprep.subr.mxu0 %v551
    %3231 = vmatpush1.msra.mxu0 %v550
    %3232 = vmatprep.subr.mxu0 %v555
    %3233 = vmatpush1.msra.mxu0 %v554
    %3234 = vmatprep.subr.mxu0 %v559
    %3235 = vmatpush1.msra.mxu0 %v558
    %3236 = vmatprep.subr.mxu0 0.0
    %3237 = vmatpush1.msra.mxu0 0.0
    %3238 = vmatprep.subr.mxu0 0.0
    %3239 = vmatpush1.msra.mxu0 0.0
    %3240 = vmatprep.subr.mxu0 0.0
    %3241 = vmatpush1.msra.mxu0 0.0
    %3242 = vmatprep.subr.mxu0 0.0
    %3243 = vmatpush1.msra.mxu0 0.0
    %3244 = vmatprep.subr.mxu0 0.0
    %3245 = vmatpush1.msra.mxu0 0.0
    %3246 = vmatprep.subr.mxu0 0.0
    %3247 = vmatpush1.msra.mxu0 0.0
    %3248 = vmatprep.subr.mxu0 0.0
    %3249 = vmatpush1.msra.mxu0 0.0
    %3250 = vmatprep.subr.mxu0 0.0
    %3251 = vmatpush1.msra.mxu0 0.0
    %3252 = vmatprep.subr.mxu0 0.0
    %3253 = vmatpush1.msra.mxu0 0.0
    %3254 = vmatprep.subr.mxu0 0.0
    %3255 = vmatpush1.msra.mxu0 0.0
    %3256 = vmatprep.subr.mxu0 0.0
    %3257 = vmatpush1.msra.mxu0 0.0
    %3258 = vmatprep.subr.mxu0 0.0
    %3259 = vmatpush1.msra.mxu0 0.0
    %3260 = vmatprep.subr.mxu0 0.0
    %3261 = vmatpush1.msra.mxu0 0.0
    %3262 = vmatprep.subr.mxu0 0.0
    %3263 = vmatpush1.msra.mxu0 0.0
    %3264 = vmatprep.subr.mxu0 0.0
    %3265 = vmatpush1.msra.mxu0 0.0
    %3266 = vmatprep.subr.mxu0 0.0
    %3267 = vmatpush1.msra.mxu0 0.0
    %3268 = vmatprep.mubr.f32.mxu0 0.0
    %3269 = vmatmul.mubr.f32.gmra.mrb[0].mxu0 %v3202
    %v3270 = vpop.f32.mrb[0].mxu0
    %v3271 = vadd.f32 0.0, %v3270
    %v3272 = vpop.f32.mrb[0].mxu0
    %v3273 = vadd.f32 0.0, %v3272
    %3274 = vdwg.mxu0
    %3275 = vmatprep.subr.mxu0 %v501
    %3276 = vmatpush1.msra.mxu0 %v500
    %3277 = vmatprep.subr.mxu0 %v505
    %3278 = vmatpush1.msra.mxu0 %v504
    %3279 = vmatprep.subr.mxu0 %v509
    %3280 = vmatpush1.msra.mxu0 %v508
    %3281 = vmatprep.subr.mxu0 %v513
    %3282 = vmatpush1.msra.mxu0 %v512
    %3283 = vmatprep.subr.mxu0 %v517
    %3284 = vmatpush1.msra.mxu0 %v516
    %3285 = vmatprep.subr.mxu0 %v521
    %3286 = vmatpush1.msra.mxu0 %v520
    %3287 = vmatprep.subr.mxu0 %v525
    %3288 = vmatpush1.msra.mxu0 %v524
    %3289 = vmatprep.subr.mxu0 %v529
    %3290 = vmatpush1.msra.mxu0 %v528
    %3291 = vmatprep.subr.mxu0 %v533
    %3292 = vmatpush1.msra.mxu0 %v532
    %3293 = vmatprep.subr.mxu0 %v537
    %3294 = vmatpush1.msra.mxu0 %v536
    %3295 = vmatprep.subr.mxu0 %v541
    %3296 = vmatpush1.msra.mxu0 %v540
    %3297 = vmatprep.subr.mxu0 %v545
    %3298 = vmatpush1.msra.mxu0 %v544
    %3299 = vmatprep.subr.mxu0 %v549
    %3300 = vmatpush1.msra.mxu0 %v548
    %3301 = vmatprep.subr.mxu0 %v553
    %3302 = vmatpush1.msra.mxu0 %v552
    %3303 = vmatprep.subr.mxu0 %v557
    %3304 = vmatpush1.msra.mxu0 %v556
    %3305 = vmatprep.subr.mxu0 %v561
    %3306 = vmatpush1.msra.mxu0 %v560
    %3307 = vmatprep.subr.mxu0 0.0
    %3308 = vmatpush1.msra.mxu0 0.0
    %3309 = vmatprep.subr.mxu0 0.0
    %3310 = vmatpush1.msra.mxu0 0.0
    %3311 = vmatprep.subr.mxu0 0.0
    %3312 = vmatpush1.msra.mxu0 0.0
    %3313 = vmatprep.subr.mxu0 0.0
    %3314 = vmatpush1.msra.mxu0 0.0
    %3315 = vmatprep.subr.mxu0 0.0
    %3316 = vmatpush1.msra.mxu0 0.0
    %3317 = vmatprep.subr.mxu0 0.0
    %3318 = vmatpush1.msra.mxu0 0.0
    %3319 = vmatprep.subr.mxu0 0.0
    %3320 = vmatpush1.msra.mxu0 0.0
    %3321 = vmatprep.subr.mxu0 0.0
    %3322 = vmatpush1.msra.mxu0 0.0
    %3323 = vmatprep.subr.mxu0 0.0
    %3324 = vmatpush1.msra.mxu0 0.0
    %3325 = vmatprep.subr.mxu0 0.0
    %3326 = vmatpush1.msra.mxu0 0.0
    %3327 = vmatprep.subr.mxu0 0.0
    %3328 = vmatpush1.msra.mxu0 0.0
    %3329 = vmatprep.subr.mxu0 0.0
    %3330 = vmatpush1.msra.mxu0 0.0
    %3331 = vmatprep.subr.mxu0 0.0
    %3332 = vmatpush1.msra.mxu0 0.0
    %3333 = vmatprep.subr.mxu0 0.0
    %3334 = vmatpush1.msra.mxu0 0.0
    %3335 = vmatprep.subr.mxu0 0.0
    %3336 = vmatpush1.msra.mxu0 0.0
    %3337 = vmatprep.subr.mxu0 0.0
    %3338 = vmatpush1.msra.mxu0 0.0
    %3339 = vmatprep.mubr.f32.mxu0 0.0
    %3340 = vmatmul.mubr.f32.gmra.mrb[0].mxu0 %v3202
    %v3341 = vpop.f32.mrb[0].mxu0
    %v3342 = vadd.f32 0.0, %v3341
    %v3343 = vpop.f32.mrb[0].mxu0
    %v3344 = vadd.f32 0.0, %v3343
    %3345 = vdwg.mxu0
    %v3350 = vrot.slane %v3271, 2
    %v3351 = vrot.slane %v3273, 2
    %v3352 = vrot.slane %v3342, 2
    %v3353 = vrot.slane %v3344, 2
    %v3358 = vadd.f32 %v263, %v3350
    %v3359 = vadd.f32 %v265, %v3351
    %v3360 = vadd.f32 %v340, %v3352
    %v3361 = vadd.f32 %v342, %v3353
    %v3362 = vxor.u32 %v3358, 2147483648
    %v3363 = vmul.f32 %v3362, 1.442695
    %v3364 = vpow.pop %v3363
    %v3365 = vadd.f32 %v3364, 1.0
    %v3366 = vrcp.pop %v3365
    %v3367 = vmul.f32 1.0, %v3366
    %v3368 = vxor.u32 %v3359, 2147483648
    %v3369 = vmul.f32 %v3368, 1.442695
    %v3370 = vpow.pop %v3369
    %v3371 = vadd.f32 %v3370, 1.0
    %v3372 = vrcp.pop %v3371
    %v3373 = vmul.f32 1.0, %v3372
    %v3374 = vtanh.pop %v3360
    %v3375 = vxor.u32 %v3361, 2147483648
    %v3376 = vmul.f32 %v3375, 1.442695
    %v3377 = vpow.pop %v3376
    %v3378 = vadd.f32 %v3377, 1.0
    %v3379 = vrcp.pop %v3378
    %v3380 = vmul.f32 1.0, %v3379
    %v3382 = vrot.slane %v3010, 6
    %v3384 = vmul.f32 %v3373, %v3382
    %v3385 = vmul.f32 %v3367, %v3374
    %v3386 = vadd.f32 %v3384, %v3385
    %v3387 = vtanh.pop %v3386
    %v3388 = vmul.f32 %v3380, %v3387
    %v3390 = vrot.slane %v3200, 2
    %3392 = vmatprep.subr.mxu0 %v563
    %3393 = vmatpush1.msra.mxu0 %v562
    %3394 = vmatprep.subr.mxu0 %v567
    %3395 = vmatpush1.msra.mxu0 %v566
    %3396 = vmatprep.subr.mxu0 %v571
    %3397 = vmatpush1.msra.mxu0 %v570
    %3398 = vmatprep.subr.mxu0 %v575
    %3399 = vmatpush1.msra.mxu0 %v574
    %3400 = vmatprep.subr.mxu0 %v579
    %3401 = vmatpush1.msra.mxu0 %v578
    %3402 = vmatprep.subr.mxu0 %v583
    %3403 = vmatpush1.msra.mxu0 %v582
    %3404 = vmatprep.subr.mxu0 %v587
    %3405 = vmatpush1.msra.mxu0 %v586
    %3406 = vmatprep.subr.mxu0 %v591
    %3407 = vmatpush1.msra.mxu0 %v590
    %3408 = vmatprep.subr.mxu0 %v595
    %3409 = vmatpush1.msra.mxu0 %v594
    %3410 = vmatprep.subr.mxu0 %v599
    %3411 = vmatpush1.msra.mxu0 %v598
    %3412 = vmatprep.subr.mxu0 %v603
    %3413 = vmatpush1.msra.mxu0 %v602
    %3414 = vmatprep.subr.mxu0 %v607
    %3415 = vmatpush1.msra.mxu0 %v606
    %3416 = vmatprep.subr.mxu0 %v611
    %3417 = vmatpush1.msra.mxu0 %v610
    %3418 = vmatprep.subr.mxu0 %v615
    %3419 = vmatpush1.msra.mxu0 %v614
    %3420 = vmatprep.subr.mxu0 %v619
    %3421 = vmatpush1.msra.mxu0 %v618
    %3422 = vmatprep.subr.mxu0 %v623
    %3423 = vmatpush1.msra.mxu0 %v622
    %3424 = vmatprep.subr.mxu0 0.0
    %3425 = vmatpush1.msra.mxu0 0.0
    %3426 = vmatprep.subr.mxu0 0.0
    %3427 = vmatpush1.msra.mxu0 0.0
    %3428 = vmatprep.subr.mxu0 0.0
    %3429 = vmatpush1.msra.mxu0 0.0
    %3430 = vmatprep.subr.mxu0 0.0
    %3431 = vmatpush1.msra.mxu0 0.0
    %3432 = vmatprep.subr.mxu0 0.0
    %3433 = vmatpush1.msra.mxu0 0.0
    %3434 = vmatprep.subr.mxu0 0.0
    %3435 = vmatpush1.msra.mxu0 0.0
    %3436 = vmatprep.subr.mxu0 0.0
    %3437 = vmatpush1.msra.mxu0 0.0
    %3438 = vmatprep.subr.mxu0 0.0
    %3439 = vmatpush1.msra.mxu0 0.0
    %3440 = vmatprep.subr.mxu0 0.0
    %3441 = vmatpush1.msra.mxu0 0.0
    %3442 = vmatprep.subr.mxu0 0.0
    %3443 = vmatpush1.msra.mxu0 0.0
    %3444 = vmatprep.subr.mxu0 0.0
    %3445 = vmatpush1.msra.mxu0 0.0
    %3446 = vmatprep.subr.mxu0 0.0
    %3447 = vmatpush1.msra.mxu0 0.0
    %3448 = vmatprep.subr.mxu0 0.0
    %3449 = vmatpush1.msra.mxu0 0.0
    %3450 = vmatprep.subr.mxu0 0.0
    %3451 = vmatpush1.msra.mxu0 0.0
    %3452 = vmatprep.subr.mxu0 0.0
    %3453 = vmatpush1.msra.mxu0 0.0
    %3454 = vmatprep.subr.mxu0 0.0
    %3455 = vmatpush1.msra.mxu0 0.0
    %3456 = vmatprep.mubr.f32.mxu0 0.0
    %3457 = vmatmul.mubr.f32.gmra.mrb[0].mxu0 %v3390
    %v3458 = vpop.f32.mrb[0].mxu0
    %v3459 = vadd.f32 0.0, %v3458
    %v3460 = vpop.f32.mrb[0].mxu0
    %v3461 = vadd.f32 0.0, %v3460
    %3462 = vdwg.mxu0
    %3463 = vmatprep.subr.mxu0 %v565
    %3464 = vmatpush1.msra.mxu0 %v564
    %3465 = vmatprep.subr.mxu0 %v569
    %3466 = vmatpush1.msra.mxu0 %v568
    %3467 = vmatprep.subr.mxu0 %v573
    %3468 = vmatpush1.msra.mxu0 %v572
    %3469 = vmatprep.subr.mxu0 %v577
    %3470 = vmatpush1.msra.mxu0 %v576
    %3471 = vmatprep.subr.mxu0 %v581
    %3472 = vmatpush1.msra.mxu0 %v580
    %3473 = vmatprep.subr.mxu0 %v585
    %3474 = vmatpush1.msra.mxu0 %v584
    %3475 = vmatprep.subr.mxu0 %v589
    %3476 = vmatpush1.msra.mxu0 %v588
    %3477 = vmatprep.subr.mxu0 %v593
    %3478 = vmatpush1.msra.mxu0 %v592
    %3479 = vmatprep.subr.mxu0 %v597
    %3480 = vmatpush1.msra.mxu0 %v596
    %3481 = vmatprep.subr.mxu0 %v601
    %3482 = vmatpush1.msra.mxu0 %v600
    %3483 = vmatprep.subr.mxu0 %v605
    %3484 = vmatpush1.msra.mxu0 %v604
    %3485 = vmatprep.subr.mxu0 %v609
    %3486 = vmatpush1.msra.mxu0 %v608
    %3487 = vmatprep.subr.mxu0 %v613
    %3488 = vmatpush1.msra.mxu0 %v612
    %3489 = vmatprep.subr.mxu0 %v617
    %3490 = vmatpush1.msra.mxu0 %v616
    %3491 = vmatprep.subr.mxu0 %v621
    %3492 = vmatpush1.msra.mxu0 %v620
    %3493 = vmatprep.subr.mxu0 %v625
    %3494 = vmatpush1.msra.mxu0 %v624
    %3495 = vmatprep.subr.mxu0 0.0
    %3496 = vmatpush1.msra.mxu0 0.0
    %3497 = vmatprep.subr.mxu0 0.0
    %3498 = vmatpush1.msra.mxu0 0.0
    %3499 = vmatprep.subr.mxu0 0.0
    %3500 = vmatpush1.msra.mxu0 0.0
    %3501 = vmatprep.subr.mxu0 0.0
    %3502 = vmatpush1.msra.mxu0 0.0
    %3503 = vmatprep.subr.mxu0 0.0
    %3504 = vmatpush1.msra.mxu0 0.0
    %3505 = vmatprep.subr.mxu0 0.0
    %3506 = vmatpush1.msra.mxu0 0.0
    %3507 = vmatprep.subr.mxu0 0.0
    %3508 = vmatpush1.msra.mxu0 0.0
    %3509 = vmatprep.subr.mxu0 0.0
    %3510 = vmatpush1.msra.mxu0 0.0
    %3511 = vmatprep.subr.mxu0 0.0
    %3512 = vmatpush1.msra.mxu0 0.0
    %3513 = vmatprep.subr.mxu0 0.0
    %3514 = vmatpush1.msra.mxu0 0.0
    %3515 = vmatprep.subr.mxu0 0.0
    %3516 = vmatpush1.msra.mxu0 0.0
    %3517 = vmatprep.subr.mxu0 0.0
    %3518 = vmatpush1.msra.mxu0 0.0
    %3519 = vmatprep.subr.mxu0 0.0
    %3520 = vmatpush1.msra.mxu0 0.0
    %3521 = vmatprep.subr.mxu0 0.0
    %3522 = vmatpush1.msra.mxu0 0.0
    %3523 = vmatprep.subr.mxu0 0.0
    %3524 = vmatpush1.msra.mxu0 0.0
    %3525 = vmatprep.subr.mxu0 0.0
    %3526 = vmatpush1.msra.mxu0 0.0
    %3527 = vmatprep.mubr.f32.mxu0 0.0
    %3528 = vmatmul.mubr.f32.gmra.mrb[0].mxu0 %v3390
    %v3529 = vpop.f32.mrb[0].mxu0
    %v3530 = vadd.f32 0.0, %v3529
    %v3531 = vpop.f32.mrb[0].mxu0
    %v3532 = vadd.f32 0.0, %v3531
    %3533 = vdwg.mxu0
    %v3534 = vadd.f32 %v411, %v3459
    %v3535 = vadd.f32 %v413, %v3461
    %v3536 = vadd.f32 %v488, %v3530
    %v3537 = vadd.f32 %v490, %v3532
    %v3538 = vxor.u32 %v3534, 2147483648
    %v3539 = vmul.f32 %v3538, 1.442695
    %v3540 = vpow.pop %v3539
    %v3541 = vadd.f32 %v3540, 1.0
    %v3542 = vrcp.pop %v3541
    %v3543 = vmul.f32 1.0, %v3542
    %v3544 = vxor.u32 %v3535, 2147483648
    %v3545 = vmul.f32 %v3544, 1.442695
    %v3546 = vpow.pop %v3545
    %v3547 = vadd.f32 %v3546, 1.0
    %v3548 = vrcp.pop %v3547
    %v3549 = vmul.f32 1.0, %v3548
    %v3550 = vtanh.pop %v3536
    %v3551 = vxor.u32 %v3537, 2147483648
    %v3552 = vmul.f32 %v3551, 1.442695
    %v3553 = vpow.pop %v3552
    %v3554 = vadd.f32 %v3553, 1.0
    %v3555 = vrcp.pop %v3554
    %v3556 = vmul.f32 1.0, %v3555
    %v3558 = vrot.slane %v3198, 2
    %v3560 = vmul.f32 %v3549, %v3558
    %v3561 = vmul.f32 %v3543, %v3550
    %v3562 = vadd.f32 %v3560, %v3561
    %v3563 = vtanh.pop %v3562
    %v3564 = vmul.f32 %v3556, %v3563
    %vm3565 = vcmask 1041408
    %v3566 = vsel %vm3565, %v795, %v1162
    %vm3567 = vcmask 1043456
    %v3568 = vsel %vm3567, %v3566, %v1538
    %vm3569 = vcmask 1045504
    %v3570 = vsel %vm3569, %v3568, %v1914
    %v3571 = vsel %vm3565, %v2266, %v2636
    %v3572 = vsel %vm3567, %v3571, %v3012
    %v3573 = vsel %vm3569, %v3572, %v3388
    %v3574 = vsel %vm3565, %v3564, %v3200
    %v3575 = vsel %vm3567, %v3574, %v2824
    %v3576 = vsel %vm3569, %v3575, %v2451
    %v3577 = vsel %vm3565, %v2090, %v1726
    %v3578 = vsel %vm3567, %v3577, %v1350
    %v3579 = vsel %vm3569, %v3578, %v977
    %v3580 = vld [vmem:[#allocation11] sm:$0xff]
    %v3581 = vld [vmem:[#allocation11 + $0x8] sm:$0xff]
    %v3582 = vld [vmem:[#allocation11 + $0x10] sm:$0xff]
    %v3583 = vld [vmem:[#allocation11 + $0x18] sm:$0xff]
    %v3584 = vld [vmem:[#allocation11 + $0x20] sm:$0xff]
    %v3585 = vld [vmem:[#allocation11 + $0x28] sm:$0xff]
    %v3586 = vld [vmem:[#allocation11 + $0x30] sm:$0xff]
    %v3587 = vld [vmem:[#allocation11 + $0x38] sm:$0xff]
    %v3588 = vld [vmem:[#allocation11 + $0x40] sm:$0xff]
    %v3589 = vld [vmem:[#allocation11 + $0x48] sm:$0xff]
    %v3590 = vld [vmem:[#allocation11 + $0x50] sm:$0xff]
    %v3591 = vld [vmem:[#allocation11 + $0x58] sm:$0xff]
    %v3592 = vld [vmem:[#allocation11 + $0x60] sm:$0xff]
    %v3593 = vld [vmem:[#allocation11 + $0x68] sm:$0xff]
    %v3594 = vld [vmem:[#allocation11 + $0x70] sm:$0xff]
    %v3595 = vld [vmem:[#allocation11 + $0x78] sm:$0xff]
    %v3596 = vld [vmem:[#allocation13] sm:$0xff]
    %v3597 = vld [vmem:[#allocation13 + $0x8] sm:$0xff]
    %v3598 = vld [vmem:[#allocation13 + $0x10] sm:$0xff]
    %v3599 = vld [vmem:[#allocation13 + $0x18] sm:$0xff]
    %v3600 = vld [vmem:[#allocation13 + $0x20] sm:$0xff]
    %v3601 = vld [vmem:[#allocation13 + $0x28] sm:$0xff]
    %v3602 = vld [vmem:[#allocation13 + $0x30] sm:$0xff]
    %v3603 = vld [vmem:[#allocation13 + $0x38] sm:$0xff]
    %v3604 = vld [vmem:[#allocation13 + $0x40] sm:$0xff]
    %v3605 = vld [vmem:[#allocation13 + $0x48] sm:$0xff]
    %v3606 = vld [vmem:[#allocation13 + $0x50] sm:$0xff]
    %v3607 = vld [vmem:[#allocation13 + $0x58] sm:$0xff]
    %v3608 = vld [vmem:[#allocation13 + $0x60] sm:$0xff]
    %v3609 = vld [vmem:[#allocation13 + $0x68] sm:$0xff]
    %v3610 = vld [vmem:[#allocation13 + $0x70] sm:$0xff]
    %v3611 = vld [vmem:[#allocation13 + $0x78] sm:$0xff]
    %3612 = vmatprep.subr.mxu0 0.0
    %3613 = vmatpush1.msra.mxu0 %v3596
    %3614 = vmatprep.subr.mxu0 0.0
    %3615 = vmatpush1.msra.mxu0 %v3597
    %3616 = vmatprep.subr.mxu0 0.0
    %3617 = vmatpush1.msra.mxu0 %v3598
    %3618 = vmatprep.subr.mxu0 0.0
    %3619 = vmatpush1.msra.mxu0 %v3599
    %3620 = vmatprep.subr.mxu0 0.0
    %3621 = vmatpush1.msra.mxu0 %v3600
    %3622 = vmatprep.subr.mxu0 0.0
    %3623 = vmatpush1.msra.mxu0 %v3601
    %3624 = vmatprep.subr.mxu0 0.0
    %3625 = vmatpush1.msra.mxu0 %v3602
    %3626 = vmatprep.subr.mxu0 0.0
    %3627 = vmatpush1.msra.mxu0 %v3603
    %3628 = vmatprep.subr.mxu0 0.0
    %3629 = vmatpush1.msra.mxu0 %v3604
    %3630 = vmatprep.subr.mxu0 0.0
    %3631 = vmatpush1.msra.mxu0 %v3605
    %3632 = vmatprep.subr.mxu0 0.0
    %3633 = vmatpush1.msra.mxu0 %v3606
    %3634 = vmatprep.subr.mxu0 0.0
    %3635 = vmatpush1.msra.mxu0 %v3607
    %3636 = vmatprep.subr.mxu0 0.0
    %3637 = vmatpush1.msra.mxu0 %v3608
    %3638 = vmatprep.subr.mxu0 0.0
    %3639 = vmatpush1.msra.mxu0 %v3609
    %3640 = vmatprep.subr.mxu0 0.0
    %3641 = vmatpush1.msra.mxu0 %v3610
    %3642 = vmatprep.subr.mxu0 0.0
    %3643 = vmatpush1.msra.mxu0 %v3611
    %3644 = vmatprep.subr.mxu0 0.0
    %3645 = vmatpush1.msra.mxu0 0.0
    %3646 = vmatprep.subr.mxu0 0.0
    %3647 = vmatpush1.msra.mxu0 0.0
    %3648 = vmatprep.subr.mxu0 0.0
    %3649 = vmatpush1.msra.mxu0 0.0
    %3650 = vmatprep.subr.mxu0 0.0
    %3651 = vmatpush1.msra.mxu0 0.0
    %3652 = vmatprep.subr.mxu0 0.0
    %3653 = vmatpush1.msra.mxu0 0.0
    %3654 = vmatprep.subr.mxu0 0.0
    %3655 = vmatpush1.msra.mxu0 0.0
    %3656 = vmatprep.subr.mxu0 0.0
    %3657 = vmatpush1.msra.mxu0 0.0
    %3658 = vmatprep.subr.mxu0 0.0
    %3659 = vmatpush1.msra.mxu0 0.0
    %3660 = vmatprep.subr.mxu0 0.0
    %3661 = vmatpush1.msra.mxu0 0.0
    %3662 = vmatprep.subr.mxu0 0.0
    %3663 = vmatpush1.msra.mxu0 0.0
    %3664 = vmatprep.subr.mxu0 0.0
    %3665 = vmatpush1.msra.mxu0 0.0
    %3666 = vmatprep.subr.mxu0 0.0
    %3667 = vmatpush1.msra.mxu0 0.0
    %3668 = vmatprep.subr.mxu0 0.0
    %3669 = vmatpush1.msra.mxu0 0.0
    %3670 = vmatprep.subr.mxu0 0.0
    %3671 = vmatpush1.msra.mxu0 0.0
    %3672 = vmatprep.subr.mxu0 0.0
    %3673 = vmatpush1.msra.mxu0 0.0
    %3674 = vmatprep.subr.mxu0 0.0
    %3675 = vmatpush1.msra.mxu0 0.0
    %3676 = vmatprep.mubr.f32.mxu0 0.0
    %3677 = vmatmul.mubr.f32.gmra.mrb[0].mxu0 %v3576
    %v3678 = vpop.f32.mrb[0].mxu0
    %v3679 = vadd.f32 0.0, %v3678
    %v3680 = vpop.f32.mrb[0].mxu0
    %3681 = vmatprep.mubr.f32.mxu0 0.0
    %3682 = vmatmul.mubr.f32.gmra.mrb[0].mxu0 %v3579
    %v3683 = vpop.f32.mrb[0].mxu0
    %v3684 = vadd.f32 0.0, %v3683
    %v3685 = vpop.f32.mrb[0].mxu0
    %3686 = vdwg.mxu0
    %3687 = vmatprep.subr.mxu0 0.0
    %3688 = vmatpush1.msra.mxu0 %v3580
    %3689 = vmatprep.subr.mxu0 0.0
    %3690 = vmatpush1.msra.mxu0 %v3581
    %3691 = vmatprep.subr.mxu0 0.0
    %3692 = vmatpush1.msra.mxu0 %v3582
    %3693 = vmatprep.subr.mxu0 0.0
    %3694 = vmatpush1.msra.mxu0 %v3583
    %3695 = vmatprep.subr.mxu0 0.0
    %3696 = vmatpush1.msra.mxu0 %v3584
    %3697 = vmatprep.subr.mxu0 0.0
    %3698 = vmatpush1.msra.mxu0 %v3585
    %3699 = vmatprep.subr.mxu0 0.0
    %3700 = vmatpush1.msra.mxu0 %v3586
    %3701 = vmatprep.subr.mxu0 0.0
    %3702 = vmatpush1.msra.mxu0 %v3587
    %3703 = vmatprep.subr.mxu0 0.0
    %3704 = vmatpush1.msra.mxu0 %v3588
    %3705 = vmatprep.subr.mxu0 0.0
    %3706 = vmatpush1.msra.mxu0 %v3589
    %3707 = vmatprep.subr.mxu0 0.0
    %3708 = vmatpush1.msra.mxu0 %v3590
    %3709 = vmatprep.subr.mxu0 0.0
    %3710 = vmatpush1.msra.mxu0 %v3591
    %3711 = vmatprep.subr.mxu0 0.0
    %3712 = vmatpush1.msra.mxu0 %v3592
    %3713 = vmatprep.subr.mxu0 0.0
    %3714 = vmatpush1.msra.mxu0 %v3593
    %3715 = vmatprep.subr.mxu0 0.0
    %3716 = vmatpush1.msra.mxu0 %v3594
    %3717 = vmatprep.subr.mxu0 0.0
    %3718 = vmatpush1.msra.mxu0 %v3595
    %3719 = vmatprep.subr.mxu0 0.0
    %3720 = vmatpush1.msra.mxu0 0.0
    %3721 = vmatprep.subr.mxu0 0.0
    %3722 = vmatpush1.msra.mxu0 0.0
    %3723 = vmatprep.subr.mxu0 0.0
    %3724 = vmatpush1.msra.mxu0 0.0
    %3725 = vmatprep.subr.mxu0 0.0
    %3726 = vmatpush1.msra.mxu0 0.0
    %3727 = vmatprep.subr.mxu0 0.0
    %3728 = vmatpush1.msra.mxu0 0.0
    %3729 = vmatprep.subr.mxu0 0.0
    %3730 = vmatpush1.msra.mxu0 0.0
    %3731 = vmatprep.subr.mxu0 0.0
    %3732 = vmatpush1.msra.mxu0 0.0
    %3733 = vmatprep.subr.mxu0 0.0
    %3734 = vmatpush1.msra.mxu0 0.0
    %3735 = vmatprep.subr.mxu0 0.0
    %3736 = vmatpush1.msra.mxu0 0.0
    %3737 = vmatprep.subr.mxu0 0.0
    %3738 = vmatpush1.msra.mxu0 0.0
    %3739 = vmatprep.subr.mxu0 0.0
    %3740 = vmatpush1.msra.mxu0 0.0
    %3741 = vmatprep.subr.mxu0 0.0
    %3742 = vmatpush1.msra.mxu0 0.0
    %3743 = vmatprep.subr.mxu0 0.0
    %3744 = vmatpush1.msra.mxu0 0.0
    %3745 = vmatprep.subr.mxu0 0.0
    %3746 = vmatpush1.msra.mxu0 0.0
    %3747 = vmatprep.subr.mxu0 0.0
    %3748 = vmatpush1.msra.mxu0 0.0
    %3749 = vmatprep.subr.mxu0 0.0
    %3750 = vmatpush1.msra.mxu0 0.0
    %3751 = vmatprep.mubr.f32.mxu0 0.0
    %3752 = vmatmul.mubr.f32.gmra.mrb[0].mxu0 %v3570
    %v3753 = vpop.f32.mrb[0].mxu0
    %v3754 = vadd.f32 %v3679, %v3753
    %v3755 = vpop.f32.mrb[0].mxu0
    %3756 = vmatprep.mubr.f32.mxu0 0.0
    %3757 = vmatmul.mubr.f32.gmra.mrb[0].mxu0 %v3573
    %v3758 = vpop.f32.mrb[0].mxu0
    %v3759 = vadd.f32 %v3684, %v3758
    %v3760 = vpop.f32.mrb[0].mxu0
    %3761 = vdwg.mxu0
    %v3762 = vld [vmem:[%s7] sm:$0x1]
    %v3764 = vlaneseq
    %v3765 = vshrl.u32 %v3764, 7
    %v3766 = vsub.s32 0, %v3765
    %v3767 = vrot.slane %v3762, %v3766
    %v3769 = vadd.f32 %v3754, %v3767
    %v3770 = vadd.f32 %v3759, %v3767
    %3771 = vst [vmem:[#allocation14] sm:$0xff] %v3769
    %3772 = vst [vmem:[#allocation14 + $0x8] sm:$0xff] %v3770
    // Predicated region
    $region62: #{tpu_custom_call.1} parent=1 // pred_check
      _
    $region63: #{tpu_custom_call.1} parent=1 // pred_check_branch
      %3774 = sbr.rel (0) target = $region65
    $region64: #{tpu_custom_call.1} parent=1 // pred_region
      %s3776 = ssub.s32 256, 256
      %3777 = vsyncadd [#allocation4], %s3776
      %s3778 = sshll.u32 [#allocation14], 4
      %s3779 = int_to_ptr.vmem [resolvable:$true] %s3778
      %3784 = dma.vmem_to_hbm [thread:$0]  %s3779, 256, %s8, [#allocation4], 128, 128, 8
    $region65: #{tpu_custom_call.1} parent=1 // pred_fallthru
      _
    // Predicated region
    $region66: #{tpu_custom_call.1} parent=1 // pred_check
      _
    $region67: #{tpu_custom_call.1} parent=1 // pred_check_branch
      %3786 = sbr.rel (0) target = $region69
    $region68: #{tpu_custom_call.1} parent=1 // pred_region
      %3787 = dma.done [#allocation4], 256
    $region69: #{tpu_custom_call.1} parent=1 // pred_fallthru
      _
    %3788 = vsyncpa [#allocation3], 1
    %3789 = vsyncpa [#allocation6], 1
    %3790 = vsyncpa [#allocation9], 1
    %3791 = vsyncpa [#allocation12], 1
    %3792 = vsyncpa [#allocation4], 1

</llo_original>
